<compile_context>
chip_gen: v5e
topology: v5e:2x2
jax: 0.10.0
libtpu: 0.0.40
codegen_flags: <defaults>
</compile_context>

<pallas_src>
import functools

import jax
import jax.numpy as jnp
from jax.experimental import pallas as pl
from jax.experimental.pallas import tpu as pltpu


# ----------------------------------------------------------------------------
# Helpers: lane-aligned gate padding
# ----------------------------------------------------------------------------
def _round_up(x, m):
    return ((x + m - 1) // m) * m


def _pad_gate_cols(w, h, hp):
    """(..., 4*h) -> (..., 4*hp): each gate's h real columns land at the start
    of its own lane-aligned hp-wide block; padding columns are zero."""
    if h == hp:
        return w
    pad = [(0, 0)] * (w.ndim - 1) + [(0, hp - h)]
    parts = [jnp.pad(w[..., k * h:(k + 1) * h], pad) for k in range(4)]
    return jnp.concatenate(parts, axis=-1)


# ----------------------------------------------------------------------------
# Pallas kernels: pure LSTM recurrence on precomputed input gates
# ----------------------------------------------------------------------------
def _gate_math(gates, c_prev, hp):
    """PyTorch-semantics LSTM cell update. Gate order i, f, g, o; each gate is a
    lane-aligned hp-wide block.  Padded lanes (zero gates) stay exactly zero."""
    i = jax.nn.sigmoid(gates[:, 0 * hp:1 * hp])
    f = jax.nn.sigmoid(gates[:, 1 * hp:2 * hp])
    g = jnp.tanh(gates[:, 2 * hp:3 * hp])
    o = jax.nn.sigmoid(gates[:, 3 * hp:4 * hp])
    c = f * c_prev + i * g
    h = o * jnp.tanh(c)
    return h, c


def lstm_last_kernel(xg_ref, h0_ref, whh_ref, hlast_ref):
    """Encoder recurrence: xg_ref holds precomputed input gates (T, Bp, 4Hp)
    (input projection + genre term + bias).  Emits only the final hidden."""
    T = xg_ref.shape[0]
    hp = h0_ref.shape[-1]
    whh = whh_ref[...]                      # hoisted: loaded once, reused T times

    def step(t, carry):
        h, c = carry
        gates = xg_ref[t] + jnp.dot(h, whh, preferred_element_type=jnp.float32)
        return _gate_math(gates, c, hp)

    h0 = h0_ref[...]
    c0 = jnp.zeros_like(h0)
    h_last, _ = jax.lax.fori_loop(0, T, step, (h0, c0), unroll=(T <= 32))
    hlast_ref[...] = h_last


def lstm_seq_kernel(xg_ref, h0_ref, whh_ref, hseq_ref):
    """Decoder recurrence: same as above but writes every hidden state
    (T, Bp, Hp).  Vocab projection happens outside (one big GEMM)."""
    T = xg_ref.shape[0]
    hp = h0_ref.shape[-1]
    whh = whh_ref[...]

    def step(t, carry):
        h, c = carry
        gates = xg_ref[t] + jnp.dot(h, whh, preferred_element_type=jnp.float32)
        h, c = _gate_math(gates, c, hp)
        hseq_ref[t] = h
        return (h, c)

    h0 = h0_ref[...]
    c0 = jnp.zeros_like(h0)
    jax.lax.fori_loop(0, T, step, (h0, c0), unroll=(T <= 32))


# ----------------------------------------------------------------------------
# pallas_call wrappers (grid=(1,): everything VMEM-resident, loop inside kernel)
# ----------------------------------------------------------------------------
def lstm_recurrence_last(xg, h0, w_hh):
    """xg: (T, Bp, 4Hp), h0: (Bp, Hp), w_hh: (Hp, 4Hp) -> (Bp, Hp)."""
    T, Bp, G = xg.shape
    Hp = h0.shape[-1]
    return pl.pallas_call(
        lstm_last_kernel,
        out_shape=jax.ShapeDtypeStruct((Bp, Hp), jnp.float32),
        grid_spec=pltpu.PrefetchScalarGridSpec(
            num_scalar_prefetch=0,
            grid=(1,),
            in_specs=[
                pl.BlockSpec((T, Bp, G), lambda i: (0, 0, 0)),
                pl.BlockSpec((Bp, Hp), lambda i: (0, 0)),
                pl.BlockSpec((Hp, G), lambda i: (0, 0)),
            ],
            out_specs=pl.BlockSpec((Bp, Hp), lambda i: (0, 0)),
        ),
        compiler_params=pltpu.CompilerParams(
            dimension_semantics=("arbitrary",)),
    )(xg, h0, w_hh)


def lstm_recurrence_seq(xg, h0, w_hh):
    """xg: (T, Bp, 4Hp), h0: (Bp, Hp), w_hh: (Hp, 4Hp) -> (T, Bp, Hp)."""
    T, Bp, G = xg.shape
    Hp = h0.shape[-1]
    return pl.pallas_call(
        lstm_seq_kernel,
        out_shape=jax.ShapeDtypeStruct((T, Bp, Hp), jnp.float32),
        grid_spec=pltpu.PrefetchScalarGridSpec(
            num_scalar_prefetch=0,
            grid=(1,),
            in_specs=[
                pl.BlockSpec((T, Bp, G), lambda i: (0, 0, 0)),
                pl.BlockSpec((Bp, Hp), lambda i: (0, 0)),
                pl.BlockSpec((Hp, G), lambda i: (0, 0)),
            ],
            out_specs=pl.BlockSpec((T, Bp, Hp), lambda i: (0, 0, 0)),
        ),
        compiler_params=pltpu.CompilerParams(
            dimension_semantics=("arbitrary",)),
    )(xg, h0, w_hh)


# ----------------------------------------------------------------------------
# Model: deterministic parameter init + forward pass
# ----------------------------------------------------------------------------
def init_params(key, vocab_size, embed_size, hidden_size, latent_size,
                num_genres):
    keys = jax.random.split(key, 16)

    def rnd(k, shape, scale=0.05):
        return (scale * jax.random.normal(k, shape)).astype(jnp.float32)

    E, H, L = embed_size, hidden_size, latent_size
    params = {
        "embedding": rnd(keys[0], (vocab_size, E), 1.0),
        "genre_embedding": rnd(keys[1], (num_genres, E), 1.0),
        # encoder LSTM (input = 2E), stored as (in, 4H) / (H, 4H), gates i,f,g,o
        "enc_w_ih": rnd(keys[2], (2 * E, 4 * H)),
        "enc_w_hh": rnd(keys[3], (H, 4 * H)),
        "enc_b": rnd(keys[4], (1, 4 * H)),          # b_ih + b_hh folded together
        "fc_mu_w": rnd(keys[5], (H, L)),
        "fc_mu_b": rnd(keys[6], (L,)),
        "fc_logvar_w": rnd(keys[7], (H, L)),
        "fc_logvar_b": rnd(keys[8], (L,)),
        "lat2hid_w": rnd(keys[9], (L + E, H)),
        "lat2hid_b": rnd(keys[10], (H,)),
        # decoder LSTM (input = E)
        "dec_w_ih": rnd(keys[11], (E, 4 * H)),
        "dec_w_hh": rnd(keys[12], (H, 4 * H)),
        "dec_b": rnd(keys[13], (1, 4 * H)),
        "out_w": rnd(keys[14], (H, vocab_size)),
        "out_b": rnd(keys[15], (1, vocab_size)),
    }
    return params


@jax.jit
def music_vae_forward(params, x_tokens, genre, eps_key):
    B, T = x_tokens.shape
    E = params["embedding"].shape[1]
    H = params["enc_w_hh"].shape[0]
    Hp = _round_up(H, 128)    # lane-aligned per-gate width
    Bp = _round_up(B, 8)      # sublane-aligned batch

    emb = jnp.take(params["embedding"], x_tokens, axis=0)           # (B, T, E)
    genre_emb = jnp.take(params["genre_embedding"], genre, axis=0)  # (B, E)

    # --- encoder: hoist input projection out of the recurrence ---------------
    # PyTorch feeds concat([emb, genre]) @ W_ih; split W_ih so the time-constant
    # genre term folds into a per-row gate bias (zero numerical change).
    w_tok = _pad_gate_cols(params["enc_w_ih"][:E], H, Hp)           # (E, 4Hp)
    w_gen = _pad_gate_cols(params["enc_w_ih"][E:], H, Hp)           # (E, 4Hp)
    enc_b = _pad_gate_cols(params["enc_b"], H, Hp)                  # (1, 4Hp)
    enc_whh = _pad_gate_cols(params["enc_w_hh"], H, Hp)             # (H, 4Hp)
    enc_whh = jnp.pad(enc_whh, ((0, Hp - H), (0, 0)))               # (Hp, 4Hp)

    genre_gates = genre_emb @ w_gen + enc_b                         # (B, 4Hp)
    xg_enc = jnp.einsum("bte,eg->tbg", emb, w_tok) + genre_gates[None]
    xg_enc = jnp.pad(xg_enc, ((0, 0), (0, Bp - B), (0, 0)))         # (T, Bp, 4Hp)

    h0_enc = jnp.zeros((Bp, Hp), jnp.float32)
    h_last = lstm_recurrence_last(xg_enc, h0_enc, enc_whh)[:B, :H]  # (B, H)

    mu = h_last @ params["fc_mu_w"] + params["fc_mu_b"]             # (B, L)
    logvar = h_last @ params["fc_logvar_w"] + params["fc_logvar_b"]

    # --- reparameterize -------------------------------------------------------
    std = jnp.exp(0.5 * logvar)
    eps = jax.random.normal(eps_key, mu.shape, dtype=mu.dtype)
    z = mu + eps * std

    # --- decoder --------------------------------------------------------------
    z_cat = jnp.concatenate([z, genre_emb], axis=1)                 # (B, L+E)
    hidden0 = z_cat @ params["lat2hid_w"] + params["lat2hid_b"]     # (B, H)

    dec_wih = _pad_gate_cols(params["dec_w_ih"], H, Hp)             # (E, 4Hp)
    dec_b = _pad_gate_cols(params["dec_b"], H, Hp)                  # (1, 4Hp)
    dec_whh = jnp.pad(_pad_gate_cols(params["dec_w_hh"], H, Hp),
                      ((0, Hp - H), (0, 0)))                        # (Hp, 4Hp)

    xg_dec = jnp.einsum("bte,eg->tbg", emb, dec_wih) + dec_b[None]  # (T, B, 4Hp)
    xg_dec = jnp.pad(xg_dec, ((0, 0), (0, Bp - B), (0, 0)))         # (T, Bp, 4Hp)
    h0_dec = jnp.pad(hidden0, ((0, Bp - B), (0, Hp - H)))           # (Bp, Hp)

    hseq = lstm_recurrence_seq(xg_dec, h0_dec, dec_whh)             # (T, Bp, Hp)

    # Vocab head: one batched GEMM outside the recurrent kernel (review item).
    hseq_bt = jnp.transpose(hseq[:, :B, :H], (1, 0, 2))             # (B, T, H)
    logits = jnp.einsum("bth,hv->btv", hseq_bt, params["out_w"]) + params["out_b"]
    return logits, mu, logvar


# ----------------------------------------------------------------------------
if __name__ == "__main__":
    # Small, module-consistent shapes.
    VOCAB = 64
    EMBED = 32
    HIDDEN = 32
    LATENT = 16
    NUM_GENRES = 3
    BATCH = 2
    SEQ = 8

    root = jax.random.PRNGKey(0)
    k_param, k_x, k_genre, k_eps = jax.random.split(root, 4)

    params = init_params(k_param, VOCAB, EMBED, HIDDEN, LATENT, NUM_GENRES)
    x = jax.random.randint(k_x, (BATCH, SEQ), 0, VOCAB, dtype=jnp.int32)
    genre = jax.random.randint(k_genre, (BATCH,), 0, NUM_GENRES, dtype=jnp.int32)

    logits, mu, logvar = music_vae_forward(params, x, genre, k_eps)
    jax.block_until_ready((logits, mu, logvar))

    assert logits.shape == (BATCH, SEQ, VOCAB)
    assert mu.shape == (BATCH, LATENT)
    assert logvar.shape == (BATCH, LATENT)
    assert jnp.all(jnp.isfinite(logits))
    assert jnp.all(jnp.isfinite(mu)) and jnp.all(jnp.isfinite(logvar))
    print("KERNEL_OK")
</pallas_src>

<mosaic_0001>
module attributes {stable_mosaic.version = 11 : i64} {
  func.func @lstm_last_kernel(%arg0: i32, %arg1: memref<8x8x512xf32, #tpu.memory_space<vmem>>, %arg2: memref<8x128xf32, #tpu.memory_space<vmem>>, %arg3: memref<128x512xf32, #tpu.memory_space<vmem>>, %arg4: memref<8x128xf32, #tpu.memory_space<vmem>>) attributes {dimension_semantics = [#tpu.dimension_semantics<arbitrary>], iteration_bounds = array<i64: 1>, scalar_prefetch = 0 : i64, scratch_operands = 0 : i64, tpu.core_type = #tpu.core_type<tc>, window_params = [{pipeline_mode = #tpu.pipeline_mode<synchronous>, transform_indices = @transform_0, window_bounds = array<i64: 8, 8, 512>}, {pipeline_mode = #tpu.pipeline_mode<synchronous>, transform_indices = @transform_1, window_bounds = array<i64: 8, 128>}, {pipeline_mode = #tpu.pipeline_mode<synchronous>, transform_indices = @transform_2, window_bounds = array<i64: 128, 512>}, {pipeline_mode = #tpu.pipeline_mode<synchronous>, transform_indices = @transform_3, window_bounds = array<i64: 8, 128>}]} {
    %c0 = arith.constant 0 : index
    %c0_0 = arith.constant 0 : index
    %0 = vector.load %arg3[%c0, %c0_0] : memref<128x512xf32, #tpu.memory_space<vmem>>, vector<128x512xf32>
    %c0_1 = arith.constant 0 : index
    %c0_2 = arith.constant 0 : index
    %1 = vector.load %arg2[%c0_1, %c0_2] : memref<8x128xf32, #tpu.memory_space<vmem>>, vector<8x128xf32>
    %cst = arith.constant 0.000000e+00 : f32
    %2 = vector.broadcast %cst : f32 to vector<8x128xf32>
    %c0_i32 = arith.constant 0 : i32
    %3 = arith.index_cast %c0_i32 : i32 to index
    %c0_3 = arith.constant 0 : index
    %c0_4 = arith.constant 0 : index
    %4 = vector.load %arg1[%3, %c0_3, %c0_4] : memref<8x8x512xf32, #tpu.memory_space<vmem>>, vector<1x8x512xf32>
    %5 = vector.shape_cast %4 : vector<1x8x512xf32> to vector<8x512xf32>
    %cst_5 = arith.constant dense<0.000000e+00> : vector<8x512xf32>
    %6 = tpu.matmul %1, %0, %cst_5 {dimension_numbers = #tpu.dot_dimension_numbers<[1], [0], [0], [1], [0, 0, 1, 1], [], []>} : vector<8x128xf32>, vector<128x512xf32>, vector<8x512xf32> -> vector<8x512xf32>
    %7 = arith.addf %5, %6 : vector<8x512xf32>
    %8 = vector.extract_strided_slice %7 {offsets = [0, 0], sizes = [8, 128], strides = [1, 1]} : vector<8x512xf32> to vector<8x128xf32>
    %9 = arith.negf %8 : vector<8x128xf32>
    %10 = math.exp %9 : vector<8x128xf32>
    %cst_6 = arith.constant 1.000000e+00 : f32
    %11 = vector.broadcast %cst_6 : f32 to vector<8x128xf32>
    %12 = arith.addf %11, %10 : vector<8x128xf32>
    %13 = arith.divf %11, %12 : vector<8x128xf32>
    %14 = vector.extract_strided_slice %7 {offsets = [0, 128], sizes = [8, 128], strides = [1, 1]} : vector<8x512xf32> to vector<8x128xf32>
    %15 = arith.negf %14 : vector<8x128xf32>
    %16 = math.exp %15 : vector<8x128xf32>
    %cst_7 = arith.constant 1.000000e+00 : f32
    %17 = vector.broadcast %cst_7 : f32 to vector<8x128xf32>
    %18 = arith.addf %17, %16 : vector<8x128xf32>
    %19 = arith.divf %17, %18 : vector<8x128xf32>
    %20 = vector.extract_strided_slice %7 {offsets = [0, 256], sizes = [8, 128], strides = [1, 1]} : vector<8x512xf32> to vector<8x128xf32>
    %21 = math.tanh %20 : vector<8x128xf32>
    %22 = vector.extract_strided_slice %7 {offsets = [0, 384], sizes = [8, 128], strides = [1, 1]} : vector<8x512xf32> to vector<8x128xf32>
    %23 = arith.negf %22 : vector<8x128xf32>
    %24 = math.exp %23 : vector<8x128xf32>
    %cst_8 = arith.constant 1.000000e+00 : f32
    %25 = vector.broadcast %cst_8 : f32 to vector<8x128xf32>
    %26 = arith.addf %25, %24 : vector<8x128xf32>
    %27 = arith.divf %25, %26 : vector<8x128xf32>
    %28 = arith.mulf %19, %2 : vector<8x128xf32>
    %29 = arith.mulf %13, %21 : vector<8x128xf32>
    %30 = arith.addf %28, %29 : vector<8x128xf32>
    %31 = math.tanh %30 : vector<8x128xf32>
    %32 = arith.mulf %27, %31 : vector<8x128xf32>
    %c1_i32 = arith.constant 1 : i32
    %33 = arith.index_cast %c1_i32 : i32 to index
    %c0_9 = arith.constant 0 : index
    %c0_10 = arith.constant 0 : index
    %34 = vector.load %arg1[%33, %c0_9, %c0_10] : memref<8x8x512xf32, #tpu.memory_space<vmem>>, vector<1x8x512xf32>
    %35 = vector.shape_cast %34 : vector<1x8x512xf32> to vector<8x512xf32>
    %cst_11 = arith.constant dense<0.000000e+00> : vector<8x512xf32>
    %36 = tpu.matmul %32, %0, %cst_11 {dimension_numbers = #tpu.dot_dimension_numbers<[1], [0], [0], [1], [0, 0, 1, 1], [], []>} : vector<8x128xf32>, vector<128x512xf32>, vector<8x512xf32> -> vector<8x512xf32>
    %37 = arith.addf %35, %36 : vector<8x512xf32>
    %38 = vector.extract_strided_slice %37 {offsets = [0, 0], sizes = [8, 128], strides = [1, 1]} : vector<8x512xf32> to vector<8x128xf32>
    %39 = arith.negf %38 : vector<8x128xf32>
    %40 = math.exp %39 : vector<8x128xf32>
    %cst_12 = arith.constant 1.000000e+00 : f32
    %41 = vector.broadcast %cst_12 : f32 to vector<8x128xf32>
    %42 = arith.addf %41, %40 : vector<8x128xf32>
    %43 = arith.divf %41, %42 : vector<8x128xf32>
    %44 = vector.extract_strided_slice %37 {offsets = [0, 128], sizes = [8, 128], strides = [1, 1]} : vector<8x512xf32> to vector<8x128xf32>
    %45 = arith.negf %44 : vector<8x128xf32>
    %46 = math.exp %45 : vector<8x128xf32>
    %cst_13 = arith.constant 1.000000e+00 : f32
    %47 = vector.broadcast %cst_13 : f32 to vector<8x128xf32>
    %48 = arith.addf %47, %46 : vector<8x128xf32>
    %49 = arith.divf %47, %48 : vector<8x128xf32>
    %50 = vector.extract_strided_slice %37 {offsets = [0, 256], sizes = [8, 128], strides = [1, 1]} : vector<8x512xf32> to vector<8x128xf32>
    %51 = math.tanh %50 : vector<8x128xf32>
    %52 = vector.extract_strided_slice %37 {offsets = [0, 384], sizes = [8, 128], strides = [1, 1]} : vector<8x512xf32> to vector<8x128xf32>
    %53 = arith.negf %52 : vector<8x128xf32>
    %54 = math.exp %53 : vector<8x128xf32>
    %cst_14 = arith.constant 1.000000e+00 : f32
    %55 = vector.broadcast %cst_14 : f32 to vector<8x128xf32>
    %56 = arith.addf %55, %54 : vector<8x128xf32>
    %57 = arith.divf %55, %56 : vector<8x128xf32>
    %58 = arith.mulf %49, %30 : vector<8x128xf32>
    %59 = arith.mulf %43, %51 : vector<8x128xf32>
    %60 = arith.addf %58, %59 : vector<8x128xf32>
    %61 = math.tanh %60 : vector<8x128xf32>
    %62 = arith.mulf %57, %61 : vector<8x128xf32>
    %c2_i32 = arith.constant 2 : i32
    %63 = arith.index_cast %c2_i32 : i32 to index
    %c0_15 = arith.constant 0 : index
    %c0_16 = arith.constant 0 : index
    %64 = vector.load %arg1[%63, %c0_15, %c0_16] : memref<8x8x512xf32, #tpu.memory_space<vmem>>, vector<1x8x512xf32>
    %65 = vector.shape_cast %64 : vector<1x8x512xf32> to vector<8x512xf32>
    %cst_17 = arith.constant dense<0.000000e+00> : vector<8x512xf32>
    %66 = tpu.matmul %62, %0, %cst_17 {dimension_numbers = #tpu.dot_dimension_numbers<[1], [0], [0], [1], [0, 0, 1, 1], [], []>} : vector<8x128xf32>, vector<128x512xf32>, vector<8x512xf32> -> vector<8x512xf32>
    %67 = arith.addf %65, %66 : vector<8x512xf32>
    %68 = vector.extract_strided_slice %67 {offsets = [0, 0], sizes = [8, 128], strides = [1, 1]} : vector<8x512xf32> to vector<8x128xf32>
    %69 = arith.negf %68 : vector<8x128xf32>
    %70 = math.exp %69 : vector<8x128xf32>
    %cst_18 = arith.constant 1.000000e+00 : f32
    %71 = vector.broadcast %cst_18 : f32 to vector<8x128xf32>
    %72 = arith.addf %71, %70 : vector<8x128xf32>
    %73 = arith.divf %71, %72 : vector<8x128xf32>
    %74 = vector.extract_strided_slice %67 {offsets = [0, 128], sizes = [8, 128], strides = [1, 1]} : vector<8x512xf32> to vector<8x128xf32>
    %75 = arith.negf %74 : vector<8x128xf32>
    %76 = math.exp %75 : vector<8x128xf32>
    %cst_19 = arith.constant 1.000000e+00 : f32
    %77 = vector.broadcast %cst_19 : f32 to vector<8x128xf32>
    %78 = arith.addf %77, %76 : vector<8x128xf32>
    %79 = arith.divf %77, %78 : vector<8x128xf32>
    %80 = vector.extract_strided_slice %67 {offsets = [0, 256], sizes = [8, 128], strides = [1, 1]} : vector<8x512xf32> to vector<8x128xf32>
    %81 = math.tanh %80 : vector<8x128xf32>
    %82 = vector.extract_strided_slice %67 {offsets = [0, 384], sizes = [8, 128], strides = [1, 1]} : vector<8x512xf32> to vector<8x128xf32>
    %83 = arith.negf %82 : vector<8x128xf32>
    %84 = math.exp %83 : vector<8x128xf32>
    %cst_20 = arith.constant 1.000000e+00 : f32
    %85 = vector.broadcast %cst_20 : f32 to vector<8x128xf32>
    %86 = arith.addf %85, %84 : vector<8x128xf32>
    %87 = arith.divf %85, %86 : vector<8x128xf32>
    %88 = arith.mulf %79, %60 : vector<8x128xf32>
    %89 = arith.mulf %73, %81 : vector<8x128xf32>
    %90 = arith.addf %88, %89 : vector<8x128xf32>
    %91 = math.tanh %90 : vector<8x128xf32>
    %92 = arith.mulf %87, %91 : vector<8x128xf32>
    %c3_i32 = arith.constant 3 : i32
    %93 = arith.index_cast %c3_i32 : i32 to index
    %c0_21 = arith.constant 0 : index
    %c0_22 = arith.constant 0 : index
    %94 = vector.load %arg1[%93, %c0_21, %c0_22] : memref<8x8x512xf32, #tpu.memory_space<vmem>>, vector<1x8x512xf32>
    %95 = vector.shape_cast %94 : vector<1x8x512xf32> to vector<8x512xf32>
    %cst_23 = arith.constant dense<0.000000e+00> : vector<8x512xf32>
    %96 = tpu.matmul %92, %0, %cst_23 {dimension_numbers = #tpu.dot_dimension_numbers<[1], [0], [0], [1], [0, 0, 1, 1], [], []>} : vector<8x128xf32>, vector<128x512xf32>, vector<8x512xf32> -> vector<8x512xf32>
    %97 = arith.addf %95, %96 : vector<8x512xf32>
    %98 = vector.extract_strided_slice %97 {offsets = [0, 0], sizes = [8, 128], strides = [1, 1]} : vector<8x512xf32> to vector<8x128xf32>
    %99 = arith.negf %98 : vector<8x128xf32>
    %100 = math.exp %99 : vector<8x128xf32>
    %cst_24 = arith.constant 1.000000e+00 : f32
    %101 = vector.broadcast %cst_24 : f32 to vector<8x128xf32>
    %102 = arith.addf %101, %100 : vector<8x128xf32>
    %103 = arith.divf %101, %102 : vector<8x128xf32>
    %104 = vector.extract_strided_slice %97 {offsets = [0, 128], sizes = [8, 128], strides = [1, 1]} : vector<8x512xf32> to vector<8x128xf32>
    %105 = arith.negf %104 : vector<8x128xf32>
    %106 = math.exp %105 : vector<8x128xf32>
    %cst_25 = arith.constant 1.000000e+00 : f32
    %107 = vector.broadcast %cst_25 : f32 to vector<8x128xf32>
    %108 = arith.addf %107, %106 : vector<8x128xf32>
    %109 = arith.divf %107, %108 : vector<8x128xf32>
    %110 = vector.extract_strided_slice %97 {offsets = [0, 256], sizes = [8, 128], strides = [1, 1]} : vector<8x512xf32> to vector<8x128xf32>
    %111 = math.tanh %110 : vector<8x128xf32>
    %112 = vector.extract_strided_slice %97 {offsets = [0, 384], sizes = [8, 128], strides = [1, 1]} : vector<8x512xf32> to vector<8x128xf32>
    %113 = arith.negf %112 : vector<8x128xf32>
    %114 = math.exp %113 : vector<8x128xf32>
    %cst_26 = arith.constant 1.000000e+00 : f32
    %115 = vector.broadcast %cst_26 : f32 to vector<8x128xf32>
    %116 = arith.addf %115, %114 : vector<8x128xf32>
    %117 = arith.divf %115, %116 : vector<8x128xf32>
    %118 = arith.mulf %109, %90 : vector<8x128xf32>
    %119 = arith.mulf %103, %111 : vector<8x128xf32>
    %120 = arith.addf %118, %119 : vector<8x128xf32>
    %121 = math.tanh %120 : vector<8x128xf32>
    %122 = arith.mulf %117, %121 : vector<8x128xf32>
    %c4_i32 = arith.constant 4 : i32
    %123 = arith.index_cast %c4_i32 : i32 to index
    %c0_27 = arith.constant 0 : index
    %c0_28 = arith.constant 0 : index
    %124 = vector.load %arg1[%123, %c0_27, %c0_28] : memref<8x8x512xf32, #tpu.memory_space<vmem>>, vector<1x8x512xf32>
    %125 = vector.shape_cast %124 : vector<1x8x512xf32> to vector<8x512xf32>
    %cst_29 = arith.constant dense<0.000000e+00> : vector<8x512xf32>
    %126 = tpu.matmul %122, %0, %cst_29 {dimension_numbers = #tpu.dot_dimension_numbers<[1], [0], [0], [1], [0, 0, 1, 1], [], []>} : vector<8x128xf32>, vector<128x512xf32>, vector<8x512xf32> -> vector<8x512xf32>
    %127 = arith.addf %125, %126 : vector<8x512xf32>
    %128 = vector.extract_strided_slice %127 {offsets = [0, 0], sizes = [8, 128], strides = [1, 1]} : vector<8x512xf32> to vector<8x128xf32>
    %129 = arith.negf %128 : vector<8x128xf32>
    %130 = math.exp %129 : vector<8x128xf32>
    %cst_30 = arith.constant 1.000000e+00 : f32
    %131 = vector.broadcast %cst_30 : f32 to vector<8x128xf32>
    %132 = arith.addf %131, %130 : vector<8x128xf32>
    %133 = arith.divf %131, %132 : vector<8x128xf32>
    %134 = vector.extract_strided_slice %127 {offsets = [0, 128], sizes = [8, 128], strides = [1, 1]} : vector<8x512xf32> to vector<8x128xf32>
    %135 = arith.negf %134 : vector<8x128xf32>
    %136 = math.exp %135 : vector<8x128xf32>
    %cst_31 = arith.constant 1.000000e+00 : f32
    %137 = vector.broadcast %cst_31 : f32 to vector<8x128xf32>
    %138 = arith.addf %137, %136 : vector<8x128xf32>
    %139 = arith.divf %137, %138 : vector<8x128xf32>
    %140 = vector.extract_strided_slice %127 {offsets = [0, 256], sizes = [8, 128], strides = [1, 1]} : vector<8x512xf32> to vector<8x128xf32>
    %141 = math.tanh %140 : vector<8x128xf32>
    %142 = vector.extract_strided_slice %127 {offsets = [0, 384], sizes = [8, 128], strides = [1, 1]} : vector<8x512xf32> to vector<8x128xf32>
    %143 = arith.negf %142 : vector<8x128xf32>
    %144 = math.exp %143 : vector<8x128xf32>
    %cst_32 = arith.constant 1.000000e+00 : f32
    %145 = vector.broadcast %cst_32 : f32 to vector<8x128xf32>
    %146 = arith.addf %145, %144 : vector<8x128xf32>
    %147 = arith.divf %145, %146 : vector<8x128xf32>
    %148 = arith.mulf %139, %120 : vector<8x128xf32>
    %149 = arith.mulf %133, %141 : vector<8x128xf32>
    %150 = arith.addf %148, %149 : vector<8x128xf32>
    %151 = math.tanh %150 : vector<8x128xf32>
    %152 = arith.mulf %147, %151 : vector<8x128xf32>
    %c5_i32 = arith.constant 5 : i32
    %153 = arith.index_cast %c5_i32 : i32 to index
    %c0_33 = arith.constant 0 : index
    %c0_34 = arith.constant 0 : index
    %154 = vector.load %arg1[%153, %c0_33, %c0_34] : memref<8x8x512xf32, #tpu.memory_space<vmem>>, vector<1x8x512xf32>
    %155 = vector.shape_cast %154 : vector<1x8x512xf32> to vector<8x512xf32>
    %cst_35 = arith.constant dense<0.000000e+00> : vector<8x512xf32>
    %156 = tpu.matmul %152, %0, %cst_35 {dimension_numbers = #tpu.dot_dimension_numbers<[1], [0], [0], [1], [0, 0, 1, 1], [], []>} : vector<8x128xf32>, vector<128x512xf32>, vector<8x512xf32> -> vector<8x512xf32>
    %157 = arith.addf %155, %156 : vector<8x512xf32>
    %158 = vector.extract_strided_slice %157 {offsets = [0, 0], sizes = [8, 128], strides = [1, 1]} : vector<8x512xf32> to vector<8x128xf32>
    %159 = arith.negf %158 : vector<8x128xf32>
    %160 = math.exp %159 : vector<8x128xf32>
    %cst_36 = arith.constant 1.000000e+00 : f32
    %161 = vector.broadcast %cst_36 : f32 to vector<8x128xf32>
    %162 = arith.addf %161, %160 : vector<8x128xf32>
    %163 = arith.divf %161, %162 : vector<8x128xf32>
    %164 = vector.extract_strided_slice %157 {offsets = [0, 128], sizes = [8, 128], strides = [1, 1]} : vector<8x512xf32> to vector<8x128xf32>
    %165 = arith.negf %164 : vector<8x128xf32>
    %166 = math.exp %165 : vector<8x128xf32>
    %cst_37 = arith.constant 1.000000e+00 : f32
    %167 = vector.broadcast %cst_37 : f32 to vector<8x128xf32>
    %168 = arith.addf %167, %166 : vector<8x128xf32>
    %169 = arith.divf %167, %168 : vector<8x128xf32>
    %170 = vector.extract_strided_slice %157 {offsets = [0, 256], sizes = [8, 128], strides = [1, 1]} : vector<8x512xf32> to vector<8x128xf32>
    %171 = math.tanh %170 : vector<8x128xf32>
    %172 = vector.extract_strided_slice %157 {offsets = [0, 384], sizes = [8, 128], strides = [1, 1]} : vector<8x512xf32> to vector<8x128xf32>
    %173 = arith.negf %172 : vector<8x128xf32>
    %174 = math.exp %173 : vector<8x128xf32>
    %cst_38 = arith.constant 1.000000e+00 : f32
    %175 = vector.broadcast %cst_38 : f32 to vector<8x128xf32>
    %176 = arith.addf %175, %174 : vector<8x128xf32>
    %177 = arith.divf %175, %176 : vector<8x128xf32>
    %178 = arith.mulf %169, %150 : vector<8x128xf32>
    %179 = arith.mulf %163, %171 : vector<8x128xf32>
    %180 = arith.addf %178, %179 : vector<8x128xf32>
    %181 = math.tanh %180 : vector<8x128xf32>
    %182 = arith.mulf %177, %181 : vector<8x128xf32>
    %c6_i32 = arith.constant 6 : i32
    %183 = arith.index_cast %c6_i32 : i32 to index
    %c0_39 = arith.constant 0 : index
    %c0_40 = arith.constant 0 : index
    %184 = vector.load %arg1[%183, %c0_39, %c0_40] : memref<8x8x512xf32, #tpu.memory_space<vmem>>, vector<1x8x512xf32>
    %185 = vector.shape_cast %184 : vector<1x8x512xf32> to vector<8x512xf32>
    %cst_41 = arith.constant dense<0.000000e+00> : vector<8x512xf32>
    %186 = tpu.matmul %182, %0, %cst_41 {dimension_numbers = #tpu.dot_dimension_numbers<[1], [0], [0], [1], [0, 0, 1, 1], [], []>} : vector<8x128xf32>, vector<128x512xf32>, vector<8x512xf32> -> vector<8x512xf32>
    %187 = arith.addf %185, %186 : vector<8x512xf32>
    %188 = vector.extract_strided_slice %187 {offsets = [0, 0], sizes = [8, 128], strides = [1, 1]} : vector<8x512xf32> to vector<8x128xf32>
    %189 = arith.negf %188 : vector<8x128xf32>
    %190 = math.exp %189 : vector<8x128xf32>
    %cst_42 = arith.constant 1.000000e+00 : f32
    %191 = vector.broadcast %cst_42 : f32 to vector<8x128xf32>
    %192 = arith.addf %191, %190 : vector<8x128xf32>
    %193 = arith.divf %191, %192 : vector<8x128xf32>
    %194 = vector.extract_strided_slice %187 {offsets = [0, 128], sizes = [8, 128], strides = [1, 1]} : vector<8x512xf32> to vector<8x128xf32>
    %195 = arith.negf %194 : vector<8x128xf32>
    %196 = math.exp %195 : vector<8x128xf32>
    %cst_43 = arith.constant 1.000000e+00 : f32
    %197 = vector.broadcast %cst_43 : f32 to vector<8x128xf32>
    %198 = arith.addf %197, %196 : vector<8x128xf32>
    %199 = arith.divf %197, %198 : vector<8x128xf32>
    %200 = vector.extract_strided_slice %187 {offsets = [0, 256], sizes = [8, 128], strides = [1, 1]} : vector<8x512xf32> to vector<8x128xf32>
    %201 = math.tanh %200 : vector<8x128xf32>
    %202 = vector.extract_strided_slice %187 {offsets = [0, 384], sizes = [8, 128], strides = [1, 1]} : vector<8x512xf32> to vector<8x128xf32>
    %203 = arith.negf %202 : vector<8x128xf32>
    %204 = math.exp %203 : vector<8x128xf32>
    %cst_44 = arith.constant 1.000000e+00 : f32
    %205 = vector.broadcast %cst_44 : f32 to vector<8x128xf32>
    %206 = arith.addf %205, %204 : vector<8x128xf32>
    %207 = arith.divf %205, %206 : vector<8x128xf32>
    %208 = arith.mulf %199, %180 : vector<8x128xf32>
    %209 = arith.mulf %193, %201 : vector<8x128xf32>
    %210 = arith.addf %208, %209 : vector<8x128xf32>
    %211 = math.tanh %210 : vector<8x128xf32>
    %212 = arith.mulf %207, %211 : vector<8x128xf32>
    %c7_i32 = arith.constant 7 : i32
    %213 = arith.index_cast %c7_i32 : i32 to index
    %c0_45 = arith.constant 0 : index
    %c0_46 = arith.constant 0 : index
    %214 = vector.load %arg1[%213, %c0_45, %c0_46] : memref<8x8x512xf32, #tpu.memory_space<vmem>>, vector<1x8x512xf32>
    %215 = vector.shape_cast %214 : vector<1x8x512xf32> to vector<8x512xf32>
    %cst_47 = arith.constant dense<0.000000e+00> : vector<8x512xf32>
    %216 = tpu.matmul %212, %0, %cst_47 {dimension_numbers = #tpu.dot_dimension_numbers<[1], [0], [0], [1], [0, 0, 1, 1], [], []>} : vector<8x128xf32>, vector<128x512xf32>, vector<8x512xf32> -> vector<8x512xf32>
    %217 = arith.addf %215, %216 : vector<8x512xf32>
    %218 = vector.extract_strided_slice %217 {offsets = [0, 0], sizes = [8, 128], strides = [1, 1]} : vector<8x512xf32> to vector<8x128xf32>
    %219 = arith.negf %218 : vector<8x128xf32>
    %220 = math.exp %219 : vector<8x128xf32>
    %cst_48 = arith.constant 1.000000e+00 : f32
    %221 = vector.broadcast %cst_48 : f32 to vector<8x128xf32>
    %222 = arith.addf %221, %220 : vector<8x128xf32>
    %223 = arith.divf %221, %222 : vector<8x128xf32>
    %224 = vector.extract_strided_slice %217 {offsets = [0, 128], sizes = [8, 128], strides = [1, 1]} : vector<8x512xf32> to vector<8x128xf32>
    %225 = arith.negf %224 : vector<8x128xf32>
    %226 = math.exp %225 : vector<8x128xf32>
    %cst_49 = arith.constant 1.000000e+00 : f32
    %227 = vector.broadcast %cst_49 : f32 to vector<8x128xf32>
    %228 = arith.addf %227, %226 : vector<8x128xf32>
    %229 = arith.divf %227, %228 : vector<8x128xf32>
    %230 = vector.extract_strided_slice %217 {offsets = [0, 256], sizes = [8, 128], strides = [1, 1]} : vector<8x512xf32> to vector<8x128xf32>
    %231 = math.tanh %230 : vector<8x128xf32>
    %232 = vector.extract_strided_slice %217 {offsets = [0, 384], sizes = [8, 128], strides = [1, 1]} : vector<8x512xf32> to vector<8x128xf32>
    %233 = arith.negf %232 : vector<8x128xf32>
    %234 = math.exp %233 : vector<8x128xf32>
    %cst_50 = arith.constant 1.000000e+00 : f32
    %235 = vector.broadcast %cst_50 : f32 to vector<8x128xf32>
    %236 = arith.addf %235, %234 : vector<8x128xf32>
    %237 = arith.divf %235, %236 : vector<8x128xf32>
    %238 = arith.mulf %229, %210 : vector<8x128xf32>
    %239 = arith.mulf %223, %231 : vector<8x128xf32>
    %240 = arith.addf %238, %239 : vector<8x128xf32>
    %241 = math.tanh %240 : vector<8x128xf32>
    %242 = arith.mulf %237, %241 : vector<8x128xf32>
    %c8_i32 = arith.constant 8 : i32
    %c0_51 = arith.constant 0 : index
    %c0_52 = arith.constant 0 : index
    %243 = vector.load %arg4[%c0_51, %c0_52] : memref<8x128xf32, #tpu.memory_space<vmem>>, vector<8x128xf32>
    tpu.vector_store %arg4[%c0_51, %c0_52], %242 {strides = array<i32>} : memref<8x128xf32, #tpu.memory_space<vmem>>, vector<8x128xf32>,
    return
  }
  func.func @transform_0(%arg0: i32) -> (i32, i32, i32) {
    %c0_i32 = arith.constant 0 : i32
    %c0_i32_0 = arith.constant 0 : i32
    %c0_i32_1 = arith.constant 0 : i32
    %c0_i32_2 = arith.constant 0 : i32
    return %c0_i32, %c0_i32_0, %c0_i32_1 : i32, i32, i32
  }
  func.func @transform_1(%arg0: i32) -> (i32, i32) {
    %c0_i32 = arith.constant 0 : i32
    %c0_i32_0 = arith.constant 0 : i32
    %c0_i32_1 = arith.constant 0 : i32
    return %c0_i32, %c0_i32_0 : i32, i32
  }
  func.func @transform_2(%arg0: i32) -> (i32, i32) {
    %c0_i32 = arith.constant 0 : i32
    %c0_i32_0 = arith.constant 0 : i32
    %c0_i32_1 = arith.constant 0 : i32
    return %c0_i32, %c0_i32_0 : i32, i32
  }
  func.func @transform_3(%arg0: i32) -> (i32, i32) {
    %c0_i32 = arith.constant 0 : i32
    %c0_i32_0 = arith.constant 0 : i32
    %c0_i32_1 = arith.constant 0 : i32
    return %c0_i32, %c0_i32_0 : i32, i32
  }
}

module attributes {stable_mosaic.version = 11 : i64} {
  func.func @lstm_seq_kernel(%arg0: i32, %arg1: memref<8x8x512xf32, #tpu.memory_space<vmem>>, %arg2: memref<8x128xf32, #tpu.memory_space<vmem>>, %arg3: memref<128x512xf32, #tpu.memory_space<vmem>>, %arg4: memref<8x8x128xf32, #tpu.memory_space<vmem>>) attributes {dimension_semantics = [#tpu.dimension_semantics<arbitrary>], iteration_bounds = array<i64: 1>, scalar_prefetch = 0 : i64, scratch_operands = 0 : i64, tpu.core_type = #tpu.core_type<tc>, window_params = [{pipeline_mode = #tpu.pipeline_mode<synchronous>, transform_indices = @transform_0, window_bounds = array<i64: 8, 8, 512>}, {pipeline_mode = #tpu.pipeline_mode<synchronous>, transform_indices = @transform_1, window_bounds = array<i64: 8, 128>}, {pipeline_mode = #tpu.pipeline_mode<synchronous>, transform_indices = @transform_2, window_bounds = array<i64: 128, 512>}, {pipeline_mode = #tpu.pipeline_mode<synchronous>, transform_indices = @transform_3, window_bounds = array<i64: 8, 8, 128>}]} {
    %c0 = arith.constant 0 : index
    %c0_0 = arith.constant 0 : index
    %0 = vector.load %arg3[%c0, %c0_0] : memref<128x512xf32, #tpu.memory_space<vmem>>, vector<128x512xf32>
    %c0_1 = arith.constant 0 : index
    %c0_2 = arith.constant 0 : index
    %1 = vector.load %arg2[%c0_1, %c0_2] : memref<8x128xf32, #tpu.memory_space<vmem>>, vector<8x128xf32>
    %cst = arith.constant 0.000000e+00 : f32
    %2 = vector.broadcast %cst : f32 to vector<8x128xf32>
    %c0_i32 = arith.constant 0 : i32
    %3 = arith.index_cast %c0_i32 : i32 to index
    %c0_3 = arith.constant 0 : index
    %c0_4 = arith.constant 0 : index
    %4 = vector.load %arg1[%3, %c0_3, %c0_4] : memref<8x8x512xf32, #tpu.memory_space<vmem>>, vector<1x8x512xf32>
    %5 = vector.shape_cast %4 : vector<1x8x512xf32> to vector<8x512xf32>
    %cst_5 = arith.constant dense<0.000000e+00> : vector<8x512xf32>
    %6 = tpu.matmul %1, %0, %cst_5 {dimension_numbers = #tpu.dot_dimension_numbers<[1], [0], [0], [1], [0, 0, 1, 1], [], []>} : vector<8x128xf32>, vector<128x512xf32>, vector<8x512xf32> -> vector<8x512xf32>
    %7 = arith.addf %5, %6 : vector<8x512xf32>
    %8 = vector.extract_strided_slice %7 {offsets = [0, 0], sizes = [8, 128], strides = [1, 1]} : vector<8x512xf32> to vector<8x128xf32>
    %9 = arith.negf %8 : vector<8x128xf32>
    %10 = math.exp %9 : vector<8x128xf32>
    %cst_6 = arith.constant 1.000000e+00 : f32
    %11 = vector.broadcast %cst_6 : f32 to vector<8x128xf32>
    %12 = arith.addf %11, %10 : vector<8x128xf32>
    %13 = arith.divf %11, %12 : vector<8x128xf32>
    %14 = vector.extract_strided_slice %7 {offsets = [0, 128], sizes = [8, 128], strides = [1, 1]} : vector<8x512xf32> to vector<8x128xf32>
    %15 = arith.negf %14 : vector<8x128xf32>
    %16 = math.exp %15 : vector<8x128xf32>
    %cst_7 = arith.constant 1.000000e+00 : f32
    %17 = vector.broadcast %cst_7 : f32 to vector<8x128xf32>
    %18 = arith.addf %17, %16 : vector<8x128xf32>
    %19 = arith.divf %17, %18 : vector<8x128xf32>
    %20 = vector.extract_strided_slice %7 {offsets = [0, 256], sizes = [8, 128], strides = [1, 1]} : vector<8x512xf32> to vector<8x128xf32>
    %21 = math.tanh %20 : vector<8x128xf32>
    %22 = vector.extract_strided_slice %7 {offsets = [0, 384], sizes = [8, 128], strides = [1, 1]} : vector<8x512xf32> to vector<8x128xf32>
    %23 = arith.negf %22 : vector<8x128xf32>
    %24 = math.exp %23 : vector<8x128xf32>
    %cst_8 = arith.constant 1.000000e+00 : f32
    %25 = vector.broadcast %cst_8 : f32 to vector<8x128xf32>
    %26 = arith.addf %25, %24 : vector<8x128xf32>
    %27 = arith.divf %25, %26 : vector<8x128xf32>
    %28 = arith.mulf %19, %2 : vector<8x128xf32>
    %29 = arith.mulf %13, %21 : vector<8x128xf32>
    %30 = arith.addf %28, %29 : vector<8x128xf32>
    %31 = math.tanh %30 : vector<8x128xf32>
    %32 = arith.mulf %27, %31 : vector<8x128xf32>
    %33 = arith.index_cast %c0_i32 : i32 to index
    %c0_9 = arith.constant 0 : index
    %c0_10 = arith.constant 0 : index
    %34 = vector.load %arg4[%33, %c0_9, %c0_10] : memref<8x8x128xf32, #tpu.memory_space<vmem>>, vector<1x8x128xf32>
    %35 = vector.shape_cast %34 : vector<1x8x128xf32> to vector<8x128xf32>
    %36 = vector.shape_cast %32 : vector<8x128xf32> to vector<1x8x128xf32>
    tpu.vector_store %arg4[%33, %c0_9, %c0_10], %36 {strides = array<i32>} : memref<8x8x128xf32, #tpu.memory_space<vmem>>, vector<1x8x128xf32>,
    %c1_i32 = arith.constant 1 : i32
    %37 = arith.index_cast %c1_i32 : i32 to index
    %c0_11 = arith.constant 0 : index
    %c0_12 = arith.constant 0 : index
    %38 = vector.load %arg1[%37, %c0_11, %c0_12] : memref<8x8x512xf32, #tpu.memory_space<vmem>>, vector<1x8x512xf32>
    %39 = vector.shape_cast %38 : vector<1x8x512xf32> to vector<8x512xf32>
    %cst_13 = arith.constant dense<0.000000e+00> : vector<8x512xf32>
    %40 = tpu.matmul %32, %0, %cst_13 {dimension_numbers = #tpu.dot_dimension_numbers<[1], [0], [0], [1], [0, 0, 1, 1], [], []>} : vector<8x128xf32>, vector<128x512xf32>, vector<8x512xf32> -> vector<8x512xf32>
    %41 = arith.addf %39, %40 : vector<8x512xf32>
    %42 = vector.extract_strided_slice %41 {offsets = [0, 0], sizes = [8, 128], strides = [1, 1]} : vector<8x512xf32> to vector<8x128xf32>
    %43 = arith.negf %42 : vector<8x128xf32>
    %44 = math.exp %43 : vector<8x128xf32>
    %cst_14 = arith.constant 1.000000e+00 : f32
    %45 = vector.broadcast %cst_14 : f32 to vector<8x128xf32>
    %46 = arith.addf %45, %44 : vector<8x128xf32>
    %47 = arith.divf %45, %46 : vector<8x128xf32>
    %48 = vector.extract_strided_slice %41 {offsets = [0, 128], sizes = [8, 128], strides = [1, 1]} : vector<8x512xf32> to vector<8x128xf32>
    %49 = arith.negf %48 : vector<8x128xf32>
    %50 = math.exp %49 : vector<8x128xf32>
    %cst_15 = arith.constant 1.000000e+00 : f32
    %51 = vector.broadcast %cst_15 : f32 to vector<8x128xf32>
    %52 = arith.addf %51, %50 : vector<8x128xf32>
    %53 = arith.divf %51, %52 : vector<8x128xf32>
    %54 = vector.extract_strided_slice %41 {offsets = [0, 256], sizes = [8, 128], strides = [1, 1]} : vector<8x512xf32> to vector<8x128xf32>
    %55 = math.tanh %54 : vector<8x128xf32>
    %56 = vector.extract_strided_slice %41 {offsets = [0, 384], sizes = [8, 128], strides = [1, 1]} : vector<8x512xf32> to vector<8x128xf32>
    %57 = arith.negf %56 : vector<8x128xf32>
    %58 = math.exp %57 : vector<8x128xf32>
    %cst_16 = arith.constant 1.000000e+00 : f32
    %59 = vector.broadcast %cst_16 : f32 to vector<8x128xf32>
    %60 = arith.addf %59, %58 : vector<8x128xf32>
    %61 = arith.divf %59, %60 : vector<8x128xf32>
    %62 = arith.mulf %53, %30 : vector<8x128xf32>
    %63 = arith.mulf %47, %55 : vector<8x128xf32>
    %64 = arith.addf %62, %63 : vector<8x128xf32>
    %65 = math.tanh %64 : vector<8x128xf32>
    %66 = arith.mulf %61, %65 : vector<8x128xf32>
    %67 = arith.index_cast %c1_i32 : i32 to index
    %c0_17 = arith.constant 0 : index
    %c0_18 = arith.constant 0 : index
    %68 = vector.load %arg4[%67, %c0_17, %c0_18] : memref<8x8x128xf32, #tpu.memory_space<vmem>>, vector<1x8x128xf32>
    %69 = vector.shape_cast %68 : vector<1x8x128xf32> to vector<8x128xf32>
    %70 = vector.shape_cast %66 : vector<8x128xf32> to vector<1x8x128xf32>
    tpu.vector_store %arg4[%67, %c0_17, %c0_18], %70 {strides = array<i32>} : memref<8x8x128xf32, #tpu.memory_space<vmem>>, vector<1x8x128xf32>,
    %c2_i32 = arith.constant 2 : i32
    %71 = arith.index_cast %c2_i32 : i32 to index
    %c0_19 = arith.constant 0 : index
    %c0_20 = arith.constant 0 : index
    %72 = vector.load %arg1[%71, %c0_19, %c0_20] : memref<8x8x512xf32, #tpu.memory_space<vmem>>, vector<1x8x512xf32>
    %73 = vector.shape_cast %72 : vector<1x8x512xf32> to vector<8x512xf32>
    %cst_21 = arith.constant dense<0.000000e+00> : vector<8x512xf32>
    %74 = tpu.matmul %66, %0, %cst_21 {dimension_numbers = #tpu.dot_dimension_numbers<[1], [0], [0], [1], [0, 0, 1, 1], [], []>} : vector<8x128xf32>, vector<128x512xf32>, vector<8x512xf32> -> vector<8x512xf32>
    %75 = arith.addf %73, %74 : vector<8x512xf32>
    %76 = vector.extract_strided_slice %75 {offsets = [0, 0], sizes = [8, 128], strides = [1, 1]} : vector<8x512xf32> to vector<8x128xf32>
    %77 = arith.negf %76 : vector<8x128xf32>
    %78 = math.exp %77 : vector<8x128xf32>
    %cst_22 = arith.constant 1.000000e+00 : f32
    %79 = vector.broadcast %cst_22 : f32 to vector<8x128xf32>
    %80 = arith.addf %79, %78 : vector<8x128xf32>
    %81 = arith.divf %79, %80 : vector<8x128xf32>
    %82 = vector.extract_strided_slice %75 {offsets = [0, 128], sizes = [8, 128], strides = [1, 1]} : vector<8x512xf32> to vector<8x128xf32>
    %83 = arith.negf %82 : vector<8x128xf32>
    %84 = math.exp %83 : vector<8x128xf32>
    %cst_23 = arith.constant 1.000000e+00 : f32
    %85 = vector.broadcast %cst_23 : f32 to vector<8x128xf32>
    %86 = arith.addf %85, %84 : vector<8x128xf32>
    %87 = arith.divf %85, %86 : vector<8x128xf32>
    %88 = vector.extract_strided_slice %75 {offsets = [0, 256], sizes = [8, 128], strides = [1, 1]} : vector<8x512xf32> to vector<8x128xf32>
    %89 = math.tanh %88 : vector<8x128xf32>
    %90 = vector.extract_strided_slice %75 {offsets = [0, 384], sizes = [8, 128], strides = [1, 1]} : vector<8x512xf32> to vector<8x128xf32>
    %91 = arith.negf %90 : vector<8x128xf32>
    %92 = math.exp %91 : vector<8x128xf32>
    %cst_24 = arith.constant 1.000000e+00 : f32
    %93 = vector.broadcast %cst_24 : f32 to vector<8x128xf32>
    %94 = arith.addf %93, %92 : vector<8x128xf32>
    %95 = arith.divf %93, %94 : vector<8x128xf32>
    %96 = arith.mulf %87, %64 : vector<8x128xf32>
    %97 = arith.mulf %81, %89 : vector<8x128xf32>
    %98 = arith.addf %96, %97 : vector<8x128xf32>
    %99 = math.tanh %98 : vector<8x128xf32>
    %100 = arith.mulf %95, %99 : vector<8x128xf32>
    %101 = arith.index_cast %c2_i32 : i32 to index
    %c0_25 = arith.constant 0 : index
    %c0_26 = arith.constant 0 : index
    %102 = vector.load %arg4[%101, %c0_25, %c0_26] : memref<8x8x128xf32, #tpu.memory_space<vmem>>, vector<1x8x128xf32>
    %103 = vector.shape_cast %102 : vector<1x8x128xf32> to vector<8x128xf32>
    %104 = vector.shape_cast %100 : vector<8x128xf32> to vector<1x8x128xf32>
    tpu.vector_store %arg4[%101, %c0_25, %c0_26], %104 {strides = array<i32>} : memref<8x8x128xf32, #tpu.memory_space<vmem>>, vector<1x8x128xf32>,
    %c3_i32 = arith.constant 3 : i32
    %105 = arith.index_cast %c3_i32 : i32 to index
    %c0_27 = arith.constant 0 : index
    %c0_28 = arith.constant 0 : index
    %106 = vector.load %arg1[%105, %c0_27, %c0_28] : memref<8x8x512xf32, #tpu.memory_space<vmem>>, vector<1x8x512xf32>
    %107 = vector.shape_cast %106 : vector<1x8x512xf32> to vector<8x512xf32>
    %cst_29 = arith.constant dense<0.000000e+00> : vector<8x512xf32>
    %108 = tpu.matmul %100, %0, %cst_29 {dimension_numbers = #tpu.dot_dimension_numbers<[1], [0], [0], [1], [0, 0, 1, 1], [], []>} : vector<8x128xf32>, vector<128x512xf32>, vector<8x512xf32> -> vector<8x512xf32>
    %109 = arith.addf %107, %108 : vector<8x512xf32>
    %110 = vector.extract_strided_slice %109 {offsets = [0, 0], sizes = [8, 128], strides = [1, 1]} : vector<8x512xf32> to vector<8x128xf32>
    %111 = arith.negf %110 : vector<8x128xf32>
    %112 = math.exp %111 : vector<8x128xf32>
    %cst_30 = arith.constant 1.000000e+00 : f32
    %113 = vector.broadcast %cst_30 : f32 to vector<8x128xf32>
    %114 = arith.addf %113, %112 : vector<8x128xf32>
    %115 = arith.divf %113, %114 : vector<8x128xf32>
    %116 = vector.extract_strided_slice %109 {offsets = [0, 128], sizes = [8, 128], strides = [1, 1]} : vector<8x512xf32> to vector<8x128xf32>
    %117 = arith.negf %116 : vector<8x128xf32>
    %118 = math.exp %117 : vector<8x128xf32>
    %cst_31 = arith.constant 1.000000e+00 : f32
    %119 = vector.broadcast %cst_31 : f32 to vector<8x128xf32>
    %120 = arith.addf %119, %118 : vector<8x128xf32>
    %121 = arith.divf %119, %120 : vector<8x128xf32>
    %122 = vector.extract_strided_slice %109 {offsets = [0, 256], sizes = [8, 128], strides = [1, 1]} : vector<8x512xf32> to vector<8x128xf32>
    %123 = math.tanh %122 : vector<8x128xf32>
    %124 = vector.extract_strided_slice %109 {offsets = [0, 384], sizes = [8, 128], strides = [1, 1]} : vector<8x512xf32> to vector<8x128xf32>
    %125 = arith.negf %124 : vector<8x128xf32>
    %126 = math.exp %125 : vector<8x128xf32>
    %cst_32 = arith.constant 1.000000e+00 : f32
    %127 = vector.broadcast %cst_32 : f32 to vector<8x128xf32>
    %128 = arith.addf %127, %126 : vector<8x128xf32>
    %129 = arith.divf %127, %128 : vector<8x128xf32>
    %130 = arith.mulf %121, %98 : vector<8x128xf32>
    %131 = arith.mulf %115, %123 : vector<8x128xf32>
    %132 = arith.addf %130, %131 : vector<8x128xf32>
    %133 = math.tanh %132 : vector<8x128xf32>
    %134 = arith.mulf %129, %133 : vector<8x128xf32>
    %135 = arith.index_cast %c3_i32 : i32 to index
    %c0_33 = arith.constant 0 : index
    %c0_34 = arith.constant 0 : index
    %136 = vector.load %arg4[%135, %c0_33, %c0_34] : memref<8x8x128xf32, #tpu.memory_space<vmem>>, vector<1x8x128xf32>
    %137 = vector.shape_cast %136 : vector<1x8x128xf32> to vector<8x128xf32>
    %138 = vector.shape_cast %134 : vector<8x128xf32> to vector<1x8x128xf32>
    tpu.vector_store %arg4[%135, %c0_33, %c0_34], %138 {strides = array<i32>} : memref<8x8x128xf32, #tpu.memory_space<vmem>>, vector<1x8x128xf32>,
    %c4_i32 = arith.constant 4 : i32
    %139 = arith.index_cast %c4_i32 : i32 to index
    %c0_35 = arith.constant 0 : index
    %c0_36 = arith.constant 0 : index
    %140 = vector.load %arg1[%139, %c0_35, %c0_36] : memref<8x8x512xf32, #tpu.memory_space<vmem>>, vector<1x8x512xf32>
    %141 = vector.shape_cast %140 : vector<1x8x512xf32> to vector<8x512xf32>
    %cst_37 = arith.constant dense<0.000000e+00> : vector<8x512xf32>
    %142 = tpu.matmul %134, %0, %cst_37 {dimension_numbers = #tpu.dot_dimension_numbers<[1], [0], [0], [1], [0, 0, 1, 1], [], []>} : vector<8x128xf32>, vector<128x512xf32>, vector<8x512xf32> -> vector<8x512xf32>
    %143 = arith.addf %141, %142 : vector<8x512xf32>
    %144 = vector.extract_strided_slice %143 {offsets = [0, 0], sizes = [8, 128], strides = [1, 1]} : vector<8x512xf32> to vector<8x128xf32>
    %145 = arith.negf %144 : vector<8x128xf32>
    %146 = math.exp %145 : vector<8x128xf32>
    %cst_38 = arith.constant 1.000000e+00 : f32
    %147 = vector.broadcast %cst_38 : f32 to vector<8x128xf32>
    %148 = arith.addf %147, %146 : vector<8x128xf32>
    %149 = arith.divf %147, %148 : vector<8x128xf32>
    %150 = vector.extract_strided_slice %143 {offsets = [0, 128], sizes = [8, 128], strides = [1, 1]} : vector<8x512xf32> to vector<8x128xf32>
    %151 = arith.negf %150 : vector<8x128xf32>
    %152 = math.exp %151 : vector<8x128xf32>
    %cst_39 = arith.constant 1.000000e+00 : f32
    %153 = vector.broadcast %cst_39 : f32 to vector<8x128xf32>
    %154 = arith.addf %153, %152 : vector<8x128xf32>
    %155 = arith.divf %153, %154 : vector<8x128xf32>
    %156 = vector.extract_strided_slice %143 {offsets = [0, 256], sizes = [8, 128], strides = [1, 1]} : vector<8x512xf32> to vector<8x128xf32>
    %157 = math.tanh %156 : vector<8x128xf32>
    %158 = vector.extract_strided_slice %143 {offsets = [0, 384], sizes = [8, 128], strides = [1, 1]} : vector<8x512xf32> to vector<8x128xf32>
    %159 = arith.negf %158 : vector<8x128xf32>
    %160 = math.exp %159 : vector<8x128xf32>
    %cst_40 = arith.constant 1.000000e+00 : f32
    %161 = vector.broadcast %cst_40 : f32 to vector<8x128xf32>
    %162 = arith.addf %161, %160 : vector<8x128xf32>
    %163 = arith.divf %161, %162 : vector<8x128xf32>
    %164 = arith.mulf %155, %132 : vector<8x128xf32>
    %165 = arith.mulf %149, %157 : vector<8x128xf32>
    %166 = arith.addf %164, %165 : vector<8x128xf32>
    %167 = math.tanh %166 : vector<8x128xf32>
    %168 = arith.mulf %163, %167 : vector<8x128xf32>
    %169 = arith.index_cast %c4_i32 : i32 to index
    %c0_41 = arith.constant 0 : index
    %c0_42 = arith.constant 0 : index
    %170 = vector.load %arg4[%169, %c0_41, %c0_42] : memref<8x8x128xf32, #tpu.memory_space<vmem>>, vector<1x8x128xf32>
    %171 = vector.shape_cast %170 : vector<1x8x128xf32> to vector<8x128xf32>
    %172 = vector.shape_cast %168 : vector<8x128xf32> to vector<1x8x128xf32>
    tpu.vector_store %arg4[%169, %c0_41, %c0_42], %172 {strides = array<i32>} : memref<8x8x128xf32, #tpu.memory_space<vmem>>, vector<1x8x128xf32>,
    %c5_i32 = arith.constant 5 : i32
    %173 = arith.index_cast %c5_i32 : i32 to index
    %c0_43 = arith.constant 0 : index
    %c0_44 = arith.constant 0 : index
    %174 = vector.load %arg1[%173, %c0_43, %c0_44] : memref<8x8x512xf32, #tpu.memory_space<vmem>>, vector<1x8x512xf32>
    %175 = vector.shape_cast %174 : vector<1x8x512xf32> to vector<8x512xf32>
    %cst_45 = arith.constant dense<0.000000e+00> : vector<8x512xf32>
    %176 = tpu.matmul %168, %0, %cst_45 {dimension_numbers = #tpu.dot_dimension_numbers<[1], [0], [0], [1], [0, 0, 1, 1], [], []>} : vector<8x128xf32>, vector<128x512xf32>, vector<8x512xf32> -> vector<8x512xf32>
    %177 = arith.addf %175, %176 : vector<8x512xf32>
    %178 = vector.extract_strided_slice %177 {offsets = [0, 0], sizes = [8, 128], strides = [1, 1]} : vector<8x512xf32> to vector<8x128xf32>
    %179 = arith.negf %178 : vector<8x128xf32>
    %180 = math.exp %179 : vector<8x128xf32>
    %cst_46 = arith.constant 1.000000e+00 : f32
    %181 = vector.broadcast %cst_46 : f32 to vector<8x128xf32>
    %182 = arith.addf %181, %180 : vector<8x128xf32>
    %183 = arith.divf %181, %182 : vector<8x128xf32>
    %184 = vector.extract_strided_slice %177 {offsets = [0, 128], sizes = [8, 128], strides = [1, 1]} : vector<8x512xf32> to vector<8x128xf32>
    %185 = arith.negf %184 : vector<8x128xf32>
    %186 = math.exp %185 : vector<8x128xf32>
    %cst_47 = arith.constant 1.000000e+00 : f32
    %187 = vector.broadcast %cst_47 : f32 to vector<8x128xf32>
    %188 = arith.addf %187, %186 : vector<8x128xf32>
    %189 = arith.divf %187, %188 : vector<8x128xf32>
    %190 = vector.extract_strided_slice %177 {offsets = [0, 256], sizes = [8, 128], strides = [1, 1]} : vector<8x512xf32> to vector<8x128xf32>
    %191 = math.tanh %190 : vector<8x128xf32>
    %192 = vector.extract_strided_slice %177 {offsets = [0, 384], sizes = [8, 128], strides = [1, 1]} : vector<8x512xf32> to vector<8x128xf32>
    %193 = arith.negf %192 : vector<8x128xf32>
    %194 = math.exp %193 : vector<8x128xf32>
    %cst_48 = arith.constant 1.000000e+00 : f32
    %195 = vector.broadcast %cst_48 : f32 to vector<8x128xf32>
    %196 = arith.addf %195, %194 : vector<8x128xf32>
    %197 = arith.divf %195, %196 : vector<8x128xf32>
    %198 = arith.mulf %189, %166 : vector<8x128xf32>
    %199 = arith.mulf %183, %191 : vector<8x128xf32>
    %200 = arith.addf %198, %199 : vector<8x128xf32>
    %201 = math.tanh %200 : vector<8x128xf32>
    %202 = arith.mulf %197, %201 : vector<8x128xf32>
    %203 = arith.index_cast %c5_i32 : i32 to index
    %c0_49 = arith.constant 0 : index
    %c0_50 = arith.constant 0 : index
    %204 = vector.load %arg4[%203, %c0_49, %c0_50] : memref<8x8x128xf32, #tpu.memory_space<vmem>>, vector<1x8x128xf32>
    %205 = vector.shape_cast %204 : vector<1x8x128xf32> to vector<8x128xf32>
    %206 = vector.shape_cast %202 : vector<8x128xf32> to vector<1x8x128xf32>
    tpu.vector_store %arg4[%203, %c0_49, %c0_50], %206 {strides = array<i32>} : memref<8x8x128xf32, #tpu.memory_space<vmem>>, vector<1x8x128xf32>,
    %c6_i32 = arith.constant 6 : i32
    %207 = arith.index_cast %c6_i32 : i32 to index
    %c0_51 = arith.constant 0 : index
    %c0_52 = arith.constant 0 : index
    %208 = vector.load %arg1[%207, %c0_51, %c0_52] : memref<8x8x512xf32, #tpu.memory_space<vmem>>, vector<1x8x512xf32>
    %209 = vector.shape_cast %208 : vector<1x8x512xf32> to vector<8x512xf32>
    %cst_53 = arith.constant dense<0.000000e+00> : vector<8x512xf32>
    %210 = tpu.matmul %202, %0, %cst_53 {dimension_numbers = #tpu.dot_dimension_numbers<[1], [0], [0], [1], [0, 0, 1, 1], [], []>} : vector<8x128xf32>, vector<128x512xf32>, vector<8x512xf32> -> vector<8x512xf32>
    %211 = arith.addf %209, %210 : vector<8x512xf32>
    %212 = vector.extract_strided_slice %211 {offsets = [0, 0], sizes = [8, 128], strides = [1, 1]} : vector<8x512xf32> to vector<8x128xf32>
    %213 = arith.negf %212 : vector<8x128xf32>
    %214 = math.exp %213 : vector<8x128xf32>
    %cst_54 = arith.constant 1.000000e+00 : f32
    %215 = vector.broadcast %cst_54 : f32 to vector<8x128xf32>
    %216 = arith.addf %215, %214 : vector<8x128xf32>
    %217 = arith.divf %215, %216 : vector<8x128xf32>
    %218 = vector.extract_strided_slice %211 {offsets = [0, 128], sizes = [8, 128], strides = [1, 1]} : vector<8x512xf32> to vector<8x128xf32>
    %219 = arith.negf %218 : vector<8x128xf32>
    %220 = math.exp %219 : vector<8x128xf32>
    %cst_55 = arith.constant 1.000000e+00 : f32
    %221 = vector.broadcast %cst_55 : f32 to vector<8x128xf32>
    %222 = arith.addf %221, %220 : vector<8x128xf32>
    %223 = arith.divf %221, %222 : vector<8x128xf32>
    %224 = vector.extract_strided_slice %211 {offsets = [0, 256], sizes = [8, 128], strides = [1, 1]} : vector<8x512xf32> to vector<8x128xf32>
    %225 = math.tanh %224 : vector<8x128xf32>
    %226 = vector.extract_strided_slice %211 {offsets = [0, 384], sizes = [8, 128], strides = [1, 1]} : vector<8x512xf32> to vector<8x128xf32>
    %227 = arith.negf %226 : vector<8x128xf32>
    %228 = math.exp %227 : vector<8x128xf32>
    %cst_56 = arith.constant 1.000000e+00 : f32
    %229 = vector.broadcast %cst_56 : f32 to vector<8x128xf32>
    %230 = arith.addf %229, %228 : vector<8x128xf32>
    %231 = arith.divf %229, %230 : vector<8x128xf32>
    %232 = arith.mulf %223, %200 : vector<8x128xf32>
    %233 = arith.mulf %217, %225 : vector<8x128xf32>
    %234 = arith.addf %232, %233 : vector<8x128xf32>
    %235 = math.tanh %234 : vector<8x128xf32>
    %236 = arith.mulf %231, %235 : vector<8x128xf32>
    %237 = arith.index_cast %c6_i32 : i32 to index
    %c0_57 = arith.constant 0 : index
    %c0_58 = arith.constant 0 : index
    %238 = vector.load %arg4[%237, %c0_57, %c0_58] : memref<8x8x128xf32, #tpu.memory_space<vmem>>, vector<1x8x128xf32>
    %239 = vector.shape_cast %238 : vector<1x8x128xf32> to vector<8x128xf32>
    %240 = vector.shape_cast %236 : vector<8x128xf32> to vector<1x8x128xf32>
    tpu.vector_store %arg4[%237, %c0_57, %c0_58], %240 {strides = array<i32>} : memref<8x8x128xf32, #tpu.memory_space<vmem>>, vector<1x8x128xf32>,
    %c7_i32 = arith.constant 7 : i32
    %241 = arith.index_cast %c7_i32 : i32 to index
    %c0_59 = arith.constant 0 : index
    %c0_60 = arith.constant 0 : index
    %242 = vector.load %arg1[%241, %c0_59, %c0_60] : memref<8x8x512xf32, #tpu.memory_space<vmem>>, vector<1x8x512xf32>
    %243 = vector.shape_cast %242 : vector<1x8x512xf32> to vector<8x512xf32>
    %cst_61 = arith.constant dense<0.000000e+00> : vector<8x512xf32>
    %244 = tpu.matmul %236, %0, %cst_61 {dimension_numbers = #tpu.dot_dimension_numbers<[1], [0], [0], [1], [0, 0, 1, 1], [], []>} : vector<8x128xf32>, vector<128x512xf32>, vector<8x512xf32> -> vector<8x512xf32>
    %245 = arith.addf %243, %244 : vector<8x512xf32>
    %246 = vector.extract_strided_slice %245 {offsets = [0, 0], sizes = [8, 128], strides = [1, 1]} : vector<8x512xf32> to vector<8x128xf32>
    %247 = arith.negf %246 : vector<8x128xf32>
    %248 = math.exp %247 : vector<8x128xf32>
    %cst_62 = arith.constant 1.000000e+00 : f32
    %249 = vector.broadcast %cst_62 : f32 to vector<8x128xf32>
    %250 = arith.addf %249, %248 : vector<8x128xf32>
    %251 = arith.divf %249, %250 : vector<8x128xf32>
    %252 = vector.extract_strided_slice %245 {offsets = [0, 128], sizes = [8, 128], strides = [1, 1]} : vector<8x512xf32> to vector<8x128xf32>
    %253 = arith.negf %252 : vector<8x128xf32>
    %254 = math.exp %253 : vector<8x128xf32>
    %cst_63 = arith.constant 1.000000e+00 : f32
    %255 = vector.broadcast %cst_63 : f32 to vector<8x128xf32>
    %256 = arith.addf %255, %254 : vector<8x128xf32>
    %257 = arith.divf %255, %256 : vector<8x128xf32>
    %258 = vector.extract_strided_slice %245 {offsets = [0, 256], sizes = [8, 128], strides = [1, 1]} : vector<8x512xf32> to vector<8x128xf32>
    %259 = math.tanh %258 : vector<8x128xf32>
    %260 = vector.extract_strided_slice %245 {offsets = [0, 384], sizes = [8, 128], strides = [1, 1]} : vector<8x512xf32> to vector<8x128xf32>
    %261 = arith.negf %260 : vector<8x128xf32>
    %262 = math.exp %261 : vector<8x128xf32>
    %cst_64 = arith.constant 1.000000e+00 : f32
    %263 = vector.broadcast %cst_64 : f32 to vector<8x128xf32>
    %264 = arith.addf %263, %262 : vector<8x128xf32>
    %265 = arith.divf %263, %264 : vector<8x128xf32>
    %266 = arith.mulf %257, %234 : vector<8x128xf32>
    %267 = arith.mulf %251, %259 : vector<8x128xf32>
    %268 = arith.addf %266, %267 : vector<8x128xf32>
    %269 = math.tanh %268 : vector<8x128xf32>
    %270 = arith.mulf %265, %269 : vector<8x128xf32>
    %271 = arith.index_cast %c7_i32 : i32 to index
    %c0_65 = arith.constant 0 : index
    %c0_66 = arith.constant 0 : index
    %272 = vector.load %arg4[%271, %c0_65, %c0_66] : memref<8x8x128xf32, #tpu.memory_space<vmem>>, vector<1x8x128xf32>
    %273 = vector.shape_cast %272 : vector<1x8x128xf32> to vector<8x128xf32>
    %274 = vector.shape_cast %270 : vector<8x128xf32> to vector<1x8x128xf32>
    tpu.vector_store %arg4[%271, %c0_65, %c0_66], %274 {strides = array<i32>} : memref<8x8x128xf32, #tpu.memory_space<vmem>>, vector<1x8x128xf32>,
    %c8_i32 = arith.constant 8 : i32
    return
  }
  func.func @transform_0(%arg0: i32) -> (i32, i32, i32) {
    %c0_i32 = arith.constant 0 : i32
    %c0_i32_0 = arith.constant 0 : i32
    %c0_i32_1 = arith.constant 0 : i32
    %c0_i32_2 = arith.constant 0 : i32
    return %c0_i32, %c0_i32_0, %c0_i32_1 : i32, i32, i32
  }
  func.func @transform_1(%arg0: i32) -> (i32, i32) {
    %c0_i32 = arith.constant 0 : i32
    %c0_i32_0 = arith.constant 0 : i32
    %c0_i32_1 = arith.constant 0 : i32
    return %c0_i32, %c0_i32_0 : i32, i32
  }
  func.func @transform_2(%arg0: i32) -> (i32, i32) {
    %c0_i32 = arith.constant 0 : i32
    %c0_i32_0 = arith.constant 0 : i32
    %c0_i32_1 = arith.constant 0 : i32
    return %c0_i32, %c0_i32_0 : i32, i32
  }
  func.func @transform_3(%arg0: i32) -> (i32, i32, i32) {
    %c0_i32 = arith.constant 0 : i32
    %c0_i32_0 = arith.constant 0 : i32
    %c0_i32_1 = arith.constant 0 : i32
    %c0_i32_2 = arith.constant 0 : i32
    return %c0_i32, %c0_i32_0, %c0_i32_1 : i32, i32, i32
  }
}

</mosaic_0001>

<llo_original>
// kernel: music_vae_forward.2
$region0: #{music_vae_forward.2}
  #allocation0 [shape = 'u32[]', space=smem, size = 0x4, offset = 0x4, fixed_abs, tag = 'smem constant byte address 0x4 - core index']
  #allocation1 [shape = 'u32[72,128]{1,0:T(1,128)}', space=vmem, size = 0x9000, scoped, tag = 'internal scratch']
  %s0 = inlined_call_operand.vmem [shape: f32[8,8,512], index: 0, kind: input, shape index: {}]
  %s1 = inlined_call_operand.vmem [shape: f32[8,128], index: 1, kind: input, shape index: {}]
  %s2 = inlined_call_operand.vmem [shape: f32[128,512], index: 2, kind: input, shape index: {}]
  %s3 = inlined_call_operand.vmem [shape: f32[8,128], index: 3, kind: output, shape index: {}]
  %s4 = sld [smem:[#allocation0]]
  $region22: #{music_vae_forward.2} parent=0
    _
  %s6 = ssub.s32 1, %s4
  %s7 = scalar_select 0, %s6, %s4
  // Predicated region
  $region2: #{music_vae_forward.2} parent=0 // pred_check
    _
  $region3: #{music_vae_forward.2} parent=0 // pred_check_branch
    %9 = sbr.rel (0) target = $region5
  $region4: #{music_vae_forward.2} parent=0 // pred_region
    _
  $region5: #{music_vae_forward.2} parent=0 // pred_fallthru
    _
  // Predicated region
  $region6: #{music_vae_forward.2} parent=0 // pred_check
    _
  $region7: #{music_vae_forward.2} parent=0 // pred_check_branch
    %11 = sbr.rel (0) target = $region9
  $region8: #{music_vae_forward.2} parent=0 // pred_region
    _
  $region9: #{music_vae_forward.2} parent=0 // pred_fallthru
    _
  // Predicated region
  $region10: #{music_vae_forward.2} parent=0 // pred_check
    _
  $region11: #{music_vae_forward.2} parent=0 // pred_check_branch
    %13 = sbr.rel (0) target = $region13
  $region12: #{music_vae_forward.2} parent=0 // pred_region
    _
  $region13: #{music_vae_forward.2} parent=0 // pred_fallthru
    _
  %v14 = vld [vmem:[%s2] sm:$0xff]
  %v15 = vld [vmem:[%s2 + $0x8] sm:$0xff]
  %v16 = vld [vmem:[%s2 + $0x10] sm:$0xff]
  %v17 = vld [vmem:[%s2 + $0x18] sm:$0xff]
  %v18 = vld [vmem:[%s2 + $0x20] sm:$0xff]
  %v19 = vld [vmem:[%s2 + $0x28] sm:$0xff]
  %v20 = vld [vmem:[%s2 + $0x30] sm:$0xff]
  %v21 = vld [vmem:[%s2 + $0x38] sm:$0xff]
  %v22 = vld [vmem:[%s2 + $0x40] sm:$0xff]
  %v23 = vld [vmem:[%s2 + $0x48] sm:$0xff]
  %v24 = vld [vmem:[%s2 + $0x50] sm:$0xff]
  %v25 = vld [vmem:[%s2 + $0x58] sm:$0xff]
  %v26 = vld [vmem:[%s2 + $0x60] sm:$0xff]
  %v27 = vld [vmem:[%s2 + $0x68] sm:$0xff]
  %v28 = vld [vmem:[%s2 + $0x70] sm:$0xff]
  %v29 = vld [vmem:[%s2 + $0x78] sm:$0xff]
  %v30 = vld [vmem:[%s2 + $0x80] sm:$0xff]
  %v31 = vld [vmem:[%s2 + $0x88] sm:$0xff]
  %v32 = vld [vmem:[%s2 + $0x90] sm:$0xff]
  %v33 = vld [vmem:[%s2 + $0x98] sm:$0xff]
  %v34 = vld [vmem:[%s2 + $0xa0] sm:$0xff]
  %v35 = vld [vmem:[%s2 + $0xa8] sm:$0xff]
  %v36 = vld [vmem:[%s2 + $0xb0] sm:$0xff]
  %v37 = vld [vmem:[%s2 + $0xb8] sm:$0xff]
  %v38 = vld [vmem:[%s2 + $0xc0] sm:$0xff]
  %v39 = vld [vmem:[%s2 + $0xc8] sm:$0xff]
  %v40 = vld [vmem:[%s2 + $0xd0] sm:$0xff]
  %v41 = vld [vmem:[%s2 + $0xd8] sm:$0xff]
  %v42 = vld [vmem:[%s2 + $0xe0] sm:$0xff]
  %v43 = vld [vmem:[%s2 + $0xe8] sm:$0xff]
  %v44 = vld [vmem:[%s2 + $0xf0] sm:$0xff]
  %v45 = vld [vmem:[%s2 + $0xf8] sm:$0xff]
  %v46 = vld [vmem:[%s2 + $0x100] sm:$0xff]
  %v47 = vld [vmem:[%s2 + $0x108] sm:$0xff]
  %v48 = vld [vmem:[%s2 + $0x110] sm:$0xff]
  %v49 = vld [vmem:[%s2 + $0x118] sm:$0xff]
  %v50 = vld [vmem:[%s2 + $0x120] sm:$0xff]
  %v51 = vld [vmem:[%s2 + $0x128] sm:$0xff]
  %v52 = vld [vmem:[%s2 + $0x130] sm:$0xff]
  %v53 = vld [vmem:[%s2 + $0x138] sm:$0xff]
  %v54 = vld [vmem:[%s2 + $0x140] sm:$0xff]
  %v55 = vld [vmem:[%s2 + $0x148] sm:$0xff]
  %v56 = vld [vmem:[%s2 + $0x150] sm:$0xff]
  %v57 = vld [vmem:[%s2 + $0x158] sm:$0xff]
  %v58 = vld [vmem:[%s2 + $0x160] sm:$0xff]
  %v59 = vld [vmem:[%s2 + $0x168] sm:$0xff]
  %v60 = vld [vmem:[%s2 + $0x170] sm:$0xff]
  %v61 = vld [vmem:[%s2 + $0x178] sm:$0xff]
  %v62 = vld [vmem:[%s2 + $0x180] sm:$0xff]
  %v63 = vld [vmem:[%s2 + $0x188] sm:$0xff]
  %v64 = vld [vmem:[%s2 + $0x190] sm:$0xff]
  %v65 = vld [vmem:[%s2 + $0x198] sm:$0xff]
  %v66 = vld [vmem:[%s2 + $0x1a0] sm:$0xff]
  %v67 = vld [vmem:[%s2 + $0x1a8] sm:$0xff]
  %v68 = vld [vmem:[%s2 + $0x1b0] sm:$0xff]
  %v69 = vld [vmem:[%s2 + $0x1b8] sm:$0xff]
  %v70 = vld [vmem:[%s2 + $0x1c0] sm:$0xff]
  %v71 = vld [vmem:[%s2 + $0x1c8] sm:$0xff]
  %v72 = vld [vmem:[%s2 + $0x1d0] sm:$0xff]
  %v73 = vld [vmem:[%s2 + $0x1d8] sm:$0xff]
  %v74 = vld [vmem:[%s2 + $0x1e0] sm:$0xff]
  %v75 = vld [vmem:[%s2 + $0x1e8] sm:$0xff]
  %v76 = vld [vmem:[%s2 + $0x1f0] sm:$0xff]
  %v77 = vld [vmem:[%s2 + $0x1f8] sm:$0xff]
  %v78 = vld [vmem:[%s1] sm:$0xff]
  %v79 = vld [vmem:[%s0] sm:$0xff]
  %v80 = vld [vmem:[%s0 + $0x8] sm:$0xff]
  %v81 = vld [vmem:[%s0 + $0x10] sm:$0xff]
  %v82 = vld [vmem:[%s0 + $0x18] sm:$0xff]
  %83 = vmatpush.msra.mxu0 %v74
  %84 = vmatpush.msra.mxu0 %v70
  %85 = vmatpush.msra.mxu0 %v66
  %86 = vmatpush.msra.mxu0 %v62
  %87 = vmatpush.msra.mxu0 %v58
  %88 = vmatpush.msra.mxu0 %v54
  %89 = vmatpush.msra.mxu0 %v50
  %90 = vmatpush.msra.mxu0 %v46
  %91 = vmatpush.msra.mxu0 %v42
  %92 = vmatpush.msra.mxu0 %v38
  %93 = vmatpush.msra.mxu0 %v34
  %94 = vmatpush.msra.mxu0 %v30
  %95 = vmatpush.msra.mxu0 %v26
  %96 = vmatpush.msra.mxu0 %v22
  %97 = vmatpush.msra.mxu0 %v18
  %98 = vmatpush.msra.mxu0 %v14
  %99 = vmatmul.f32.gmra.mxu0 %v78
  %v100 = vpop.f32.mrf.mxu0
  %v101 = vadd.f32 0.0, %v100
  %102 = vdwg.mxu0
  %103 = vmatpush.msra.mxu0 %v75
  %104 = vmatpush.msra.mxu0 %v71
  %105 = vmatpush.msra.mxu0 %v67
  %106 = vmatpush.msra.mxu0 %v63
  %107 = vmatpush.msra.mxu0 %v59
  %108 = vmatpush.msra.mxu0 %v55
  %109 = vmatpush.msra.mxu0 %v51
  %110 = vmatpush.msra.mxu0 %v47
  %111 = vmatpush.msra.mxu0 %v43
  %112 = vmatpush.msra.mxu0 %v39
  %113 = vmatpush.msra.mxu0 %v35
  %114 = vmatpush.msra.mxu0 %v31
  %115 = vmatpush.msra.mxu0 %v27
  %116 = vmatpush.msra.mxu0 %v23
  %117 = vmatpush.msra.mxu0 %v19
  %118 = vmatpush.msra.mxu0 %v15
  %119 = vmatmul.f32.gmra.mxu0 %v78
  %v120 = vpop.f32.mrf.mxu0
  %v121 = vadd.f32 0.0, %v120
  %122 = vdwg.mxu0
  %123 = vmatpush.msra.mxu0 %v76
  %124 = vmatpush.msra.mxu0 %v72
  %125 = vmatpush.msra.mxu0 %v68
  %126 = vmatpush.msra.mxu0 %v64
  %127 = vmatpush.msra.mxu0 %v60
  %128 = vmatpush.msra.mxu0 %v56
  %129 = vmatpush.msra.mxu0 %v52
  %130 = vmatpush.msra.mxu0 %v48
  %131 = vmatpush.msra.mxu0 %v44
  %132 = vmatpush.msra.mxu0 %v40
  %133 = vmatpush.msra.mxu0 %v36
  %134 = vmatpush.msra.mxu0 %v32
  %135 = vmatpush.msra.mxu0 %v28
  %136 = vmatpush.msra.mxu0 %v24
  %137 = vmatpush.msra.mxu0 %v20
  %138 = vmatpush.msra.mxu0 %v16
  %139 = vmatmul.f32.gmra.mxu0 %v78
  %v140 = vpop.f32.mrf.mxu0
  %v141 = vadd.f32 0.0, %v140
  %142 = vdwg.mxu0
  %143 = vmatpush.msra.mxu0 %v77
  %144 = vmatpush.msra.mxu0 %v73
  %145 = vmatpush.msra.mxu0 %v69
  %146 = vmatpush.msra.mxu0 %v65
  %147 = vmatpush.msra.mxu0 %v61
  %148 = vmatpush.msra.mxu0 %v57
  %149 = vmatpush.msra.mxu0 %v53
  %150 = vmatpush.msra.mxu0 %v49
  %151 = vmatpush.msra.mxu0 %v45
  %152 = vmatpush.msra.mxu0 %v41
  %153 = vmatpush.msra.mxu0 %v37
  %154 = vmatpush.msra.mxu0 %v33
  %155 = vmatpush.msra.mxu0 %v29
  %156 = vmatpush.msra.mxu0 %v25
  %157 = vmatpush.msra.mxu0 %v21
  %158 = vmatpush.msra.mxu0 %v17
  %159 = vmatmul.f32.gmra.mxu0 %v78
  %v160 = vpop.f32.mrf.mxu0
  %v161 = vadd.f32 0.0, %v160
  %162 = vdwg.mxu0
  %v163 = vadd.f32 %v79, %v101
  %v164 = vadd.f32 %v80, %v121
  %v165 = vadd.f32 %v81, %v141
  %v166 = vadd.f32 %v82, %v161
  %v167 = vxor.u32 %v163, 2147483648
  %v168 = vmul.f32 %v167, 1.442695
  %v169 = vpow.pop %v168
  %v170 = vadd.f32 %v169, 1.0
  %v171 = vrcp.pop %v170
  %v172 = vmul.f32 %v170, %v171
  %v173 = vsub.f32 1.0, %v172
  %v174 = vmul.f32 %v171, %v173
  %v175 = vadd.f32 %v171, %v174
  %vm176 = vweird.f32 %v170
  %vm177 = vweird.f32 %v171
  %vm178 = vmor %vm176, %vm177
  %v179 = vsel %vm178, %v171, %v175
  %v180 = vand.u32 2147483647, %v170
  %vm181 = vcmp.eq.f32.partialorder %v180, 8.507059e+37
  %v182 = vand.u32 %v170, 2147483648
  %v183 = vor.u32 1.1754944e-38, %v182
  %v184 = vsel %vm181, %v183, %v179
  %v185 = vmul.f32 1.0, %v184
  %v186 = vxor.u32 %v164, 2147483648
  %v187 = vmul.f32 %v186, 1.442695
  %v188 = vpow.pop %v187
  %v189 = vadd.f32 %v188, 1.0
  %v190 = vrcp.pop %v189
  %v191 = vmul.f32 %v189, %v190
  %v192 = vsub.f32 1.0, %v191
  %v193 = vmul.f32 %v190, %v192
  %v194 = vadd.f32 %v190, %v193
  %vm195 = vweird.f32 %v189
  %vm196 = vweird.f32 %v190
  %vm197 = vmor %vm195, %vm196
  %v198 = vsel %vm197, %v190, %v194
  %v199 = vand.u32 2147483647, %v189
  %vm200 = vcmp.eq.f32.partialorder %v199, 8.507059e+37
  %v201 = vand.u32 %v189, 2147483648
  %v202 = vor.u32 1.1754944e-38, %v201
  %v203 = vsel %vm200, %v202, %v198
  %v204 = vmul.f32 1.0, %v203
  %v205 = vtanh.pop %v165
  %v206 = vxor.u32 %v166, 2147483648
  %v207 = vmul.f32 %v206, 1.442695
  %v208 = vpow.pop %v207
  %v209 = vadd.f32 %v208, 1.0
  %v210 = vrcp.pop %v209
  %v211 = vmul.f32 %v209, %v210
  %v212 = vsub.f32 1.0, %v211
  %v213 = vmul.f32 %v210, %v212
  %v214 = vadd.f32 %v210, %v213
  %vm215 = vweird.f32 %v209
  %vm216 = vweird.f32 %v210
  %vm217 = vmor %vm215, %vm216
  %v218 = vsel %vm217, %v210, %v214
  %v219 = vand.u32 2147483647, %v209
  %vm220 = vcmp.eq.f32.partialorder %v219, 8.507059e+37
  %v221 = vand.u32 %v209, 2147483648
  %v222 = vor.u32 1.1754944e-38, %v221
  %v223 = vsel %vm220, %v222, %v218
  %v224 = vmul.f32 1.0, %v223
  %v225 = vmul.f32 %v204, 0.0
  %v226 = vmul.f32 %v185, %v205
  %v227 = vadd.f32 %v225, %v226
  %v228 = vtanh.pop %v227
  %v229 = vmul.f32 %v224, %v228
  %s230 = scalar_lea.vmem %s0, 32
  %v231 = vld [vmem:[%s230] sm:$0xff]
  %v232 = vld [vmem:[%s230 + $0x8] sm:$0xff]
  %v233 = vld [vmem:[%s230 + $0x10] sm:$0xff]
  %v234 = vld [vmem:[%s230 + $0x18] sm:$0xff]
  %235 = vmatpush.msra.mxu0 %v74
  %236 = vmatpush.msra.mxu0 %v70
  %237 = vmatpush.msra.mxu0 %v66
  %238 = vmatpush.msra.mxu0 %v62
  %239 = vmatpush.msra.mxu0 %v58
  %240 = vmatpush.msra.mxu0 %v54
  %241 = vmatpush.msra.mxu0 %v50
  %242 = vmatpush.msra.mxu0 %v46
  %243 = vmatpush.msra.mxu0 %v42
  %244 = vmatpush.msra.mxu0 %v38
  %245 = vmatpush.msra.mxu0 %v34
  %246 = vmatpush.msra.mxu0 %v30
  %247 = vmatpush.msra.mxu0 %v26
  %248 = vmatpush.msra.mxu0 %v22
  %249 = vmatpush.msra.mxu0 %v18
  %250 = vmatpush.msra.mxu0 %v14
  %251 = vmatmul.f32.gmra.mxu0 %v229
  %v252 = vpop.f32.mrf.mxu0
  %v253 = vadd.f32 0.0, %v252
  %254 = vdwg.mxu0
  %255 = vmatpush.msra.mxu0 %v75
  %256 = vmatpush.msra.mxu0 %v71
  %257 = vmatpush.msra.mxu0 %v67
  %258 = vmatpush.msra.mxu0 %v63
  %259 = vmatpush.msra.mxu0 %v59
  %260 = vmatpush.msra.mxu0 %v55
  %261 = vmatpush.msra.mxu0 %v51
  %262 = vmatpush.msra.mxu0 %v47
  %263 = vmatpush.msra.mxu0 %v43
  %264 = vmatpush.msra.mxu0 %v39
  %265 = vmatpush.msra.mxu0 %v35
  %266 = vmatpush.msra.mxu0 %v31
  %267 = vmatpush.msra.mxu0 %v27
  %268 = vmatpush.msra.mxu0 %v23
  %269 = vmatpush.msra.mxu0 %v19
  %270 = vmatpush.msra.mxu0 %v15
  %271 = vmatmul.f32.gmra.mxu0 %v229
  %v272 = vpop.f32.mrf.mxu0
  %v273 = vadd.f32 0.0, %v272
  %274 = vdwg.mxu0
  %275 = vmatpush.msra.mxu0 %v76
  %276 = vmatpush.msra.mxu0 %v72
  %277 = vmatpush.msra.mxu0 %v68
  %278 = vmatpush.msra.mxu0 %v64
  %279 = vmatpush.msra.mxu0 %v60
  %280 = vmatpush.msra.mxu0 %v56
  %281 = vmatpush.msra.mxu0 %v52
  %282 = vmatpush.msra.mxu0 %v48
  %283 = vmatpush.msra.mxu0 %v44
  %284 = vmatpush.msra.mxu0 %v40
  %285 = vmatpush.msra.mxu0 %v36
  %286 = vmatpush.msra.mxu0 %v32
  %287 = vmatpush.msra.mxu0 %v28
  %288 = vmatpush.msra.mxu0 %v24
  %289 = vmatpush.msra.mxu0 %v20
  %290 = vmatpush.msra.mxu0 %v16
  %291 = vmatmul.f32.gmra.mxu0 %v229
  %v292 = vpop.f32.mrf.mxu0
  %v293 = vadd.f32 0.0, %v292
  %294 = vdwg.mxu0
  %295 = vmatpush.msra.mxu0 %v77
  %296 = vmatpush.msra.mxu0 %v73
  %297 = vmatpush.msra.mxu0 %v69
  %298 = vmatpush.msra.mxu0 %v65
  %299 = vmatpush.msra.mxu0 %v61
  %300 = vmatpush.msra.mxu0 %v57
  %301 = vmatpush.msra.mxu0 %v53
  %302 = vmatpush.msra.mxu0 %v49
  %303 = vmatpush.msra.mxu0 %v45
  %304 = vmatpush.msra.mxu0 %v41
  %305 = vmatpush.msra.mxu0 %v37
  %306 = vmatpush.msra.mxu0 %v33
  %307 = vmatpush.msra.mxu0 %v29
  %308 = vmatpush.msra.mxu0 %v25
  %309 = vmatpush.msra.mxu0 %v21
  %310 = vmatpush.msra.mxu0 %v17
  %311 = vmatmul.f32.gmra.mxu0 %v229
  %v312 = vpop.f32.mrf.mxu0
  %v313 = vadd.f32 0.0, %v312
  %314 = vdwg.mxu0
  %v315 = vadd.f32 %v231, %v253
  %v316 = vadd.f32 %v232, %v273
  %v317 = vadd.f32 %v233, %v293
  %v318 = vadd.f32 %v234, %v313
  %v319 = vxor.u32 %v315, 2147483648
  %v320 = vmul.f32 %v319, 1.442695
  %v321 = vpow.pop %v320
  %v322 = vadd.f32 %v321, 1.0
  %v323 = vrcp.pop %v322
  %v324 = vmul.f32 %v322, %v323
  %v325 = vsub.f32 1.0, %v324
  %v326 = vmul.f32 %v323, %v325
  %v327 = vadd.f32 %v323, %v326
  %vm328 = vweird.f32 %v322
  %vm329 = vweird.f32 %v323
  %vm330 = vmor %vm328, %vm329
  %v331 = vsel %vm330, %v323, %v327
  %v332 = vand.u32 2147483647, %v322
  %vm333 = vcmp.eq.f32.partialorder %v332, 8.507059e+37
  %v334 = vand.u32 %v322, 2147483648
  %v335 = vor.u32 1.1754944e-38, %v334
  %v336 = vsel %vm333, %v335, %v331
  %v337 = vmul.f32 1.0, %v336
  %v338 = vxor.u32 %v316, 2147483648
  %v339 = vmul.f32 %v338, 1.442695
  %v340 = vpow.pop %v339
  %v341 = vadd.f32 %v340, 1.0
  %v342 = vrcp.pop %v341
  %v343 = vmul.f32 %v341, %v342
  %v344 = vsub.f32 1.0, %v343
  %v345 = vmul.f32 %v342, %v344
  %v346 = vadd.f32 %v342, %v345
  %vm347 = vweird.f32 %v341
  %vm348 = vweird.f32 %v342
  %vm349 = vmor %vm347, %vm348
  %v350 = vsel %vm349, %v342, %v346
  %v351 = vand.u32 2147483647, %v341
  %vm352 = vcmp.eq.f32.partialorder %v351, 8.507059e+37
  %v353 = vand.u32 %v341, 2147483648
  %v354 = vor.u32 1.1754944e-38, %v353
  %v355 = vsel %vm352, %v354, %v350
  %v356 = vmul.f32 1.0, %v355
  %v357 = vtanh.pop %v317
  %v358 = vxor.u32 %v318, 2147483648
  %v359 = vmul.f32 %v358, 1.442695
  %v360 = vpow.pop %v359
  %v361 = vadd.f32 %v360, 1.0
  %v362 = vrcp.pop %v361
  %v363 = vmul.f32 %v361, %v362
  %v364 = vsub.f32 1.0, %v363
  %v365 = vmul.f32 %v362, %v364
  %v366 = vadd.f32 %v362, %v365
  %vm367 = vweird.f32 %v361
  %vm368 = vweird.f32 %v362
  %vm369 = vmor %vm367, %vm368
  %v370 = vsel %vm369, %v362, %v366
  %v371 = vand.u32 2147483647, %v361
  %vm372 = vcmp.eq.f32.partialorder %v371, 8.507059e+37
  %v373 = vand.u32 %v361, 2147483648
  %v374 = vor.u32 1.1754944e-38, %v373
  %v375 = vsel %vm372, %v374, %v370
  %v376 = vmul.f32 1.0, %v375
  %v377 = vmul.f32 %v356, %v227
  %v378 = vmul.f32 %v337, %v357
  %v379 = vadd.f32 %v377, %v378
  %v380 = vtanh.pop %v379
  %v381 = vmul.f32 %v376, %v380
  %s382 = scalar_lea.vmem %s0, 64
  %v383 = vld [vmem:[%s382] sm:$0xff]
  %v384 = vld [vmem:[%s382 + $0x8] sm:$0xff]
  %v385 = vld [vmem:[%s382 + $0x10] sm:$0xff]
  %v386 = vld [vmem:[%s382 + $0x18] sm:$0xff]
  %387 = vmatpush.msra.mxu0 %v74
  %388 = vmatpush.msra.mxu0 %v70
  %389 = vmatpush.msra.mxu0 %v66
  %390 = vmatpush.msra.mxu0 %v62
  %391 = vmatpush.msra.mxu0 %v58
  %392 = vmatpush.msra.mxu0 %v54
  %393 = vmatpush.msra.mxu0 %v50
  %394 = vmatpush.msra.mxu0 %v46
  %395 = vmatpush.msra.mxu0 %v42
  %396 = vmatpush.msra.mxu0 %v38
  %397 = vmatpush.msra.mxu0 %v34
  %398 = vmatpush.msra.mxu0 %v30
  %399 = vmatpush.msra.mxu0 %v26
  %400 = vmatpush.msra.mxu0 %v22
  %401 = vmatpush.msra.mxu0 %v18
  %402 = vmatpush.msra.mxu0 %v14
  %403 = vmatmul.f32.gmra.mxu0 %v381
  %v404 = vpop.f32.mrf.mxu0
  %v405 = vadd.f32 0.0, %v404
  %406 = vdwg.mxu0
  %407 = vmatpush.msra.mxu0 %v75
  %408 = vmatpush.msra.mxu0 %v71
  %409 = vmatpush.msra.mxu0 %v67
  %410 = vmatpush.msra.mxu0 %v63
  %411 = vmatpush.msra.mxu0 %v59
  %412 = vmatpush.msra.mxu0 %v55
  %413 = vmatpush.msra.mxu0 %v51
  %414 = vmatpush.msra.mxu0 %v47
  %415 = vmatpush.msra.mxu0 %v43
  %416 = vmatpush.msra.mxu0 %v39
  %417 = vmatpush.msra.mxu0 %v35
  %418 = vmatpush.msra.mxu0 %v31
  %419 = vmatpush.msra.mxu0 %v27
  %420 = vmatpush.msra.mxu0 %v23
  %421 = vmatpush.msra.mxu0 %v19
  %422 = vmatpush.msra.mxu0 %v15
  %423 = vmatmul.f32.gmra.mxu0 %v381
  %v424 = vpop.f32.mrf.mxu0
  %v425 = vadd.f32 0.0, %v424
  %426 = vdwg.mxu0
  %427 = vmatpush.msra.mxu0 %v76
  %428 = vmatpush.msra.mxu0 %v72
  %429 = vmatpush.msra.mxu0 %v68
  %430 = vmatpush.msra.mxu0 %v64
  %431 = vmatpush.msra.mxu0 %v60
  %432 = vmatpush.msra.mxu0 %v56
  %433 = vmatpush.msra.mxu0 %v52
  %434 = vmatpush.msra.mxu0 %v48
  %435 = vmatpush.msra.mxu0 %v44
  %436 = vmatpush.msra.mxu0 %v40
  %437 = vmatpush.msra.mxu0 %v36
  %438 = vmatpush.msra.mxu0 %v32
  %439 = vmatpush.msra.mxu0 %v28
  %440 = vmatpush.msra.mxu0 %v24
  %441 = vmatpush.msra.mxu0 %v20
  %442 = vmatpush.msra.mxu0 %v16
  %443 = vmatmul.f32.gmra.mxu0 %v381
  %v444 = vpop.f32.mrf.mxu0
  %v445 = vadd.f32 0.0, %v444
  %446 = vdwg.mxu0
  %447 = vmatpush.msra.mxu0 %v77
  %448 = vmatpush.msra.mxu0 %v73
  %449 = vmatpush.msra.mxu0 %v69
  %450 = vmatpush.msra.mxu0 %v65
  %451 = vmatpush.msra.mxu0 %v61
  %452 = vmatpush.msra.mxu0 %v57
  %453 = vmatpush.msra.mxu0 %v53
  %454 = vmatpush.msra.mxu0 %v49
  %455 = vmatpush.msra.mxu0 %v45
  %456 = vmatpush.msra.mxu0 %v41
  %457 = vmatpush.msra.mxu0 %v37
  %458 = vmatpush.msra.mxu0 %v33
  %459 = vmatpush.msra.mxu0 %v29
  %460 = vmatpush.msra.mxu0 %v25
  %461 = vmatpush.msra.mxu0 %v21
  %462 = vmatpush.msra.mxu0 %v17
  %463 = vmatmul.f32.gmra.mxu0 %v381
  %v464 = vpop.f32.mrf.mxu0
  %v465 = vadd.f32 0.0, %v464
  %466 = vdwg.mxu0
  %v467 = vadd.f32 %v383, %v405
  %v468 = vadd.f32 %v384, %v425
  %v469 = vadd.f32 %v385, %v445
  %v470 = vadd.f32 %v386, %v465
  %v471 = vxor.u32 %v467, 2147483648
  %v472 = vmul.f32 %v471, 1.442695
  %v473 = vpow.pop %v472
  %v474 = vadd.f32 %v473, 1.0
  %v475 = vrcp.pop %v474
  %v476 = vmul.f32 %v474, %v475
  %v477 = vsub.f32 1.0, %v476
  %v478 = vmul.f32 %v475, %v477
  %v479 = vadd.f32 %v475, %v478
  %vm480 = vweird.f32 %v474
  %vm481 = vweird.f32 %v475
  %vm482 = vmor %vm480, %vm481
  %v483 = vsel %vm482, %v475, %v479
  %v484 = vand.u32 2147483647, %v474
  %vm485 = vcmp.eq.f32.partialorder %v484, 8.507059e+37
  %v486 = vand.u32 %v474, 2147483648
  %v487 = vor.u32 1.1754944e-38, %v486
  %v488 = vsel %vm485, %v487, %v483
  %v489 = vmul.f32 1.0, %v488
  %v490 = vxor.u32 %v468, 2147483648
  %v491 = vmul.f32 %v490, 1.442695
  %v492 = vpow.pop %v491
  %v493 = vadd.f32 %v492, 1.0
  %v494 = vrcp.pop %v493
  %v495 = vmul.f32 %v493, %v494
  %v496 = vsub.f32 1.0, %v495
  %v497 = vmul.f32 %v494, %v496
  %v498 = vadd.f32 %v494, %v497
  %vm499 = vweird.f32 %v493
  %vm500 = vweird.f32 %v494
  %vm501 = vmor %vm499, %vm500
  %v502 = vsel %vm501, %v494, %v498
  %v503 = vand.u32 2147483647, %v493
  %vm504 = vcmp.eq.f32.partialorder %v503, 8.507059e+37
  %v505 = vand.u32 %v493, 2147483648
  %v506 = vor.u32 1.1754944e-38, %v505
  %v507 = vsel %vm504, %v506, %v502
  %v508 = vmul.f32 1.0, %v507
  %v509 = vtanh.pop %v469
  %v510 = vxor.u32 %v470, 2147483648
  %v511 = vmul.f32 %v510, 1.442695
  %v512 = vpow.pop %v511
  %v513 = vadd.f32 %v512, 1.0
  %v514 = vrcp.pop %v513
  %v515 = vmul.f32 %v513, %v514
  %v516 = vsub.f32 1.0, %v515
  %v517 = vmul.f32 %v514, %v516
  %v518 = vadd.f32 %v514, %v517
  %vm519 = vweird.f32 %v513
  %vm520 = vweird.f32 %v514
  %vm521 = vmor %vm519, %vm520
  %v522 = vsel %vm521, %v514, %v518
  %v523 = vand.u32 2147483647, %v513
  %vm524 = vcmp.eq.f32.partialorder %v523, 8.507059e+37
  %v525 = vand.u32 %v513, 2147483648
  %v526 = vor.u32 1.1754944e-38, %v525
  %v527 = vsel %vm524, %v526, %v522
  %v528 = vmul.f32 1.0, %v527
  %v529 = vmul.f32 %v508, %v379
  %v530 = vmul.f32 %v489, %v509
  %v531 = vadd.f32 %v529, %v530
  %v532 = vtanh.pop %v531
  %v533 = vmul.f32 %v528, %v532
  %s534 = scalar_lea.vmem %s0, 96
  %v535 = vld [vmem:[%s534] sm:$0xff]
  %v536 = vld [vmem:[%s534 + $0x8] sm:$0xff]
  %v537 = vld [vmem:[%s534 + $0x10] sm:$0xff]
  %v538 = vld [vmem:[%s534 + $0x18] sm:$0xff]
  %539 = vmatpush.msra.mxu0 %v74
  %540 = vmatpush.msra.mxu0 %v70
  %541 = vmatpush.msra.mxu0 %v66
  %542 = vmatpush.msra.mxu0 %v62
  %543 = vmatpush.msra.mxu0 %v58
  %544 = vmatpush.msra.mxu0 %v54
  %545 = vmatpush.msra.mxu0 %v50
  %546 = vmatpush.msra.mxu0 %v46
  %547 = vmatpush.msra.mxu0 %v42
  %548 = vmatpush.msra.mxu0 %v38
  %549 = vmatpush.msra.mxu0 %v34
  %550 = vmatpush.msra.mxu0 %v30
  %551 = vmatpush.msra.mxu0 %v26
  %552 = vmatpush.msra.mxu0 %v22
  %553 = vmatpush.msra.mxu0 %v18
  %554 = vmatpush.msra.mxu0 %v14
  %555 = vmatmul.f32.gmra.mxu0 %v533
  %v556 = vpop.f32.mrf.mxu0
  %v557 = vadd.f32 0.0, %v556
  %558 = vdwg.mxu0
  %559 = vmatpush.msra.mxu0 %v75
  %560 = vmatpush.msra.mxu0 %v71
  %561 = vmatpush.msra.mxu0 %v67
  %562 = vmatpush.msra.mxu0 %v63
  %563 = vmatpush.msra.mxu0 %v59
  %564 = vmatpush.msra.mxu0 %v55
  %565 = vmatpush.msra.mxu0 %v51
  %566 = vmatpush.msra.mxu0 %v47
  %567 = vmatpush.msra.mxu0 %v43
  %568 = vmatpush.msra.mxu0 %v39
  %569 = vmatpush.msra.mxu0 %v35
  %570 = vmatpush.msra.mxu0 %v31
  %571 = vmatpush.msra.mxu0 %v27
  %572 = vmatpush.msra.mxu0 %v23
  %573 = vmatpush.msra.mxu0 %v19
  %574 = vmatpush.msra.mxu0 %v15
  %575 = vmatmul.f32.gmra.mxu0 %v533
  %v576 = vpop.f32.mrf.mxu0
  %v577 = vadd.f32 0.0, %v576
  %578 = vdwg.mxu0
  %579 = vmatpush.msra.mxu0 %v76
  %580 = vmatpush.msra.mxu0 %v72
  %581 = vmatpush.msra.mxu0 %v68
  %582 = vmatpush.msra.mxu0 %v64
  %583 = vmatpush.msra.mxu0 %v60
  %584 = vmatpush.msra.mxu0 %v56
  %585 = vmatpush.msra.mxu0 %v52
  %586 = vmatpush.msra.mxu0 %v48
  %587 = vmatpush.msra.mxu0 %v44
  %588 = vmatpush.msra.mxu0 %v40
  %589 = vmatpush.msra.mxu0 %v36
  %590 = vmatpush.msra.mxu0 %v32
  %591 = vmatpush.msra.mxu0 %v28
  %592 = vmatpush.msra.mxu0 %v24
  %593 = vmatpush.msra.mxu0 %v20
  %594 = vmatpush.msra.mxu0 %v16
  %595 = vmatmul.f32.gmra.mxu0 %v533
  %v596 = vpop.f32.mrf.mxu0
  %v597 = vadd.f32 0.0, %v596
  %598 = vdwg.mxu0
  %599 = vmatpush.msra.mxu0 %v77
  %600 = vmatpush.msra.mxu0 %v73
  %601 = vmatpush.msra.mxu0 %v69
  %602 = vmatpush.msra.mxu0 %v65
  %603 = vmatpush.msra.mxu0 %v61
  %604 = vmatpush.msra.mxu0 %v57
  %605 = vmatpush.msra.mxu0 %v53
  %606 = vmatpush.msra.mxu0 %v49
  %607 = vmatpush.msra.mxu0 %v45
  %608 = vmatpush.msra.mxu0 %v41
  %609 = vmatpush.msra.mxu0 %v37
  %610 = vmatpush.msra.mxu0 %v33
  %611 = vmatpush.msra.mxu0 %v29
  %612 = vmatpush.msra.mxu0 %v25
  %613 = vmatpush.msra.mxu0 %v21
  %614 = vmatpush.msra.mxu0 %v17
  %615 = vmatmul.f32.gmra.mxu0 %v533
  %v616 = vpop.f32.mrf.mxu0
  %v617 = vadd.f32 0.0, %v616
  %618 = vdwg.mxu0
  %v619 = vadd.f32 %v535, %v557
  %v620 = vadd.f32 %v536, %v577
  %v621 = vadd.f32 %v537, %v597
  %v622 = vadd.f32 %v538, %v617
  %v623 = vxor.u32 %v619, 2147483648
  %v624 = vmul.f32 %v623, 1.442695
  %v625 = vpow.pop %v624
  %v626 = vadd.f32 %v625, 1.0
  %v627 = vrcp.pop %v626
  %v628 = vmul.f32 %v626, %v627
  %v629 = vsub.f32 1.0, %v628
  %v630 = vmul.f32 %v627, %v629
  %v631 = vadd.f32 %v627, %v630
  %vm632 = vweird.f32 %v626
  %vm633 = vweird.f32 %v627
  %vm634 = vmor %vm632, %vm633
  %v635 = vsel %vm634, %v627, %v631
  %v636 = vand.u32 2147483647, %v626
  %vm637 = vcmp.eq.f32.partialorder %v636, 8.507059e+37
  %v638 = vand.u32 %v626, 2147483648
  %v639 = vor.u32 1.1754944e-38, %v638
  %v640 = vsel %vm637, %v639, %v635
  %v641 = vmul.f32 1.0, %v640
  %v642 = vxor.u32 %v620, 2147483648
  %v643 = vmul.f32 %v642, 1.442695
  %v644 = vpow.pop %v643
  %v645 = vadd.f32 %v644, 1.0
  %v646 = vrcp.pop %v645
  %v647 = vmul.f32 %v645, %v646
  %v648 = vsub.f32 1.0, %v647
  %v649 = vmul.f32 %v646, %v648
  %v650 = vadd.f32 %v646, %v649
  %vm651 = vweird.f32 %v645
  %vm652 = vweird.f32 %v646
  %vm653 = vmor %vm651, %vm652
  %v654 = vsel %vm653, %v646, %v650
  %v655 = vand.u32 2147483647, %v645
  %vm656 = vcmp.eq.f32.partialorder %v655, 8.507059e+37
  %v657 = vand.u32 %v645, 2147483648
  %v658 = vor.u32 1.1754944e-38, %v657
  %v659 = vsel %vm656, %v658, %v654
  %v660 = vmul.f32 1.0, %v659
  %v661 = vtanh.pop %v621
  %v662 = vxor.u32 %v622, 2147483648
  %v663 = vmul.f32 %v662, 1.442695
  %v664 = vpow.pop %v663
  %v665 = vadd.f32 %v664, 1.0
  %v666 = vrcp.pop %v665
  %v667 = vmul.f32 %v665, %v666
  %v668 = vsub.f32 1.0, %v667
  %v669 = vmul.f32 %v666, %v668
  %v670 = vadd.f32 %v666, %v669
  %vm671 = vweird.f32 %v665
  %vm672 = vweird.f32 %v666
  %vm673 = vmor %vm671, %vm672
  %v674 = vsel %vm673, %v666, %v670
  %v675 = vand.u32 2147483647, %v665
  %vm676 = vcmp.eq.f32.partialorder %v675, 8.507059e+37
  %v677 = vand.u32 %v665, 2147483648
  %v678 = vor.u32 1.1754944e-38, %v677
  %v679 = vsel %vm676, %v678, %v674
  %v680 = vmul.f32 1.0, %v679
  %v681 = vmul.f32 %v660, %v531
  %v682 = vmul.f32 %v641, %v661
  %v683 = vadd.f32 %v681, %v682
  %v684 = vtanh.pop %v683
  %v685 = vmul.f32 %v680, %v684
  %s686 = scalar_lea.vmem %s0, 128
  %v687 = vld [vmem:[%s686] sm:$0xff]
  %v688 = vld [vmem:[%s686 + $0x8] sm:$0xff]
  %v689 = vld [vmem:[%s686 + $0x10] sm:$0xff]
  %v690 = vld [vmem:[%s686 + $0x18] sm:$0xff]
  %691 = vmatpush.msra.mxu0 %v74
  %692 = vmatpush.msra.mxu0 %v70
  %693 = vmatpush.msra.mxu0 %v66
  %694 = vmatpush.msra.mxu0 %v62
  %695 = vmatpush.msra.mxu0 %v58
  %696 = vmatpush.msra.mxu0 %v54
  %697 = vmatpush.msra.mxu0 %v50
  %698 = vmatpush.msra.mxu0 %v46
  %699 = vmatpush.msra.mxu0 %v42
  %700 = vmatpush.msra.mxu0 %v38
  %701 = vmatpush.msra.mxu0 %v34
  %702 = vmatpush.msra.mxu0 %v30
  %703 = vmatpush.msra.mxu0 %v26
  %704 = vmatpush.msra.mxu0 %v22
  %705 = vmatpush.msra.mxu0 %v18
  %706 = vmatpush.msra.mxu0 %v14
  %707 = vmatmul.f32.gmra.mxu0 %v685
  %v708 = vpop.f32.mrf.mxu0
  %v709 = vadd.f32 0.0, %v708
  %710 = vdwg.mxu0
  %711 = vmatpush.msra.mxu0 %v75
  %712 = vmatpush.msra.mxu0 %v71
  %713 = vmatpush.msra.mxu0 %v67
  %714 = vmatpush.msra.mxu0 %v63
  %715 = vmatpush.msra.mxu0 %v59
  %716 = vmatpush.msra.mxu0 %v55
  %717 = vmatpush.msra.mxu0 %v51
  %718 = vmatpush.msra.mxu0 %v47
  %719 = vmatpush.msra.mxu0 %v43
  %720 = vmatpush.msra.mxu0 %v39
  %721 = vmatpush.msra.mxu0 %v35
  %722 = vmatpush.msra.mxu0 %v31
  %723 = vmatpush.msra.mxu0 %v27
  %724 = vmatpush.msra.mxu0 %v23
  %725 = vmatpush.msra.mxu0 %v19
  %726 = vmatpush.msra.mxu0 %v15
  %727 = vmatmul.f32.gmra.mxu0 %v685
  %v728 = vpop.f32.mrf.mxu0
  %v729 = vadd.f32 0.0, %v728
  %730 = vdwg.mxu0
  %731 = vmatpush.msra.mxu0 %v76
  %732 = vmatpush.msra.mxu0 %v72
  %733 = vmatpush.msra.mxu0 %v68
  %734 = vmatpush.msra.mxu0 %v64
  %735 = vmatpush.msra.mxu0 %v60
  %736 = vmatpush.msra.mxu0 %v56
  %737 = vmatpush.msra.mxu0 %v52
  %738 = vmatpush.msra.mxu0 %v48
  %739 = vmatpush.msra.mxu0 %v44
  %740 = vmatpush.msra.mxu0 %v40
  %741 = vmatpush.msra.mxu0 %v36
  %742 = vmatpush.msra.mxu0 %v32
  %743 = vmatpush.msra.mxu0 %v28
  %744 = vmatpush.msra.mxu0 %v24
  %745 = vmatpush.msra.mxu0 %v20
  %746 = vmatpush.msra.mxu0 %v16
  %747 = vmatmul.f32.gmra.mxu0 %v685
  %v748 = vpop.f32.mrf.mxu0
  %v749 = vadd.f32 0.0, %v748
  %750 = vdwg.mxu0
  %751 = vmatpush.msra.mxu0 %v77
  %752 = vmatpush.msra.mxu0 %v73
  %753 = vmatpush.msra.mxu0 %v69
  %754 = vmatpush.msra.mxu0 %v65
  %755 = vmatpush.msra.mxu0 %v61
  %756 = vmatpush.msra.mxu0 %v57
  %757 = vmatpush.msra.mxu0 %v53
  %758 = vmatpush.msra.mxu0 %v49
  %759 = vmatpush.msra.mxu0 %v45
  %760 = vmatpush.msra.mxu0 %v41
  %761 = vmatpush.msra.mxu0 %v37
  %762 = vmatpush.msra.mxu0 %v33
  %763 = vmatpush.msra.mxu0 %v29
  %764 = vmatpush.msra.mxu0 %v25
  %765 = vmatpush.msra.mxu0 %v21
  %766 = vmatpush.msra.mxu0 %v17
  %767 = vmatmul.f32.gmra.mxu0 %v685
  %v768 = vpop.f32.mrf.mxu0
  %v769 = vadd.f32 0.0, %v768
  %770 = vdwg.mxu0
  %v771 = vadd.f32 %v687, %v709
  %v772 = vadd.f32 %v688, %v729
  %v773 = vadd.f32 %v689, %v749
  %v774 = vadd.f32 %v690, %v769
  %v775 = vxor.u32 %v771, 2147483648
  %v776 = vmul.f32 %v775, 1.442695
  %v777 = vpow.pop %v776
  %v778 = vadd.f32 %v777, 1.0
  %v779 = vrcp.pop %v778
  %v780 = vmul.f32 %v778, %v779
  %v781 = vsub.f32 1.0, %v780
  %v782 = vmul.f32 %v779, %v781
  %v783 = vadd.f32 %v779, %v782
  %vm784 = vweird.f32 %v778
  %vm785 = vweird.f32 %v779
  %vm786 = vmor %vm784, %vm785
  %v787 = vsel %vm786, %v779, %v783
  %v788 = vand.u32 2147483647, %v778
  %vm789 = vcmp.eq.f32.partialorder %v788, 8.507059e+37
  %v790 = vand.u32 %v778, 2147483648
  %v791 = vor.u32 1.1754944e-38, %v790
  %v792 = vsel %vm789, %v791, %v787
  %v793 = vmul.f32 1.0, %v792
  %v794 = vxor.u32 %v772, 2147483648
  %v795 = vmul.f32 %v794, 1.442695
  %v796 = vpow.pop %v795
  %v797 = vadd.f32 %v796, 1.0
  %v798 = vrcp.pop %v797
  %v799 = vmul.f32 %v797, %v798
  %v800 = vsub.f32 1.0, %v799
  %v801 = vmul.f32 %v798, %v800
  %v802 = vadd.f32 %v798, %v801
  %vm803 = vweird.f32 %v797
  %vm804 = vweird.f32 %v798
  %vm805 = vmor %vm803, %vm804
  %v806 = vsel %vm805, %v798, %v802
  %v807 = vand.u32 2147483647, %v797
  %vm808 = vcmp.eq.f32.partialorder %v807, 8.507059e+37
  %v809 = vand.u32 %v797, 2147483648
  %v810 = vor.u32 1.1754944e-38, %v809
  %v811 = vsel %vm808, %v810, %v806
  %v812 = vmul.f32 1.0, %v811
  %v813 = vtanh.pop %v773
  %v814 = vxor.u32 %v774, 2147483648
  %v815 = vmul.f32 %v814, 1.442695
  %v816 = vpow.pop %v815
  %v817 = vadd.f32 %v816, 1.0
  %v818 = vrcp.pop %v817
  %v819 = vmul.f32 %v817, %v818
  %v820 = vsub.f32 1.0, %v819
  %v821 = vmul.f32 %v818, %v820
  %v822 = vadd.f32 %v818, %v821
  %vm823 = vweird.f32 %v817
  %vm824 = vweird.f32 %v818
  %vm825 = vmor %vm823, %vm824
  %v826 = vsel %vm825, %v818, %v822
  %v827 = vand.u32 2147483647, %v817
  %vm828 = vcmp.eq.f32.partialorder %v827, 8.507059e+37
  %v829 = vand.u32 %v817, 2147483648
  %v830 = vor.u32 1.1754944e-38, %v829
  %v831 = vsel %vm828, %v830, %v826
  %v832 = vmul.f32 1.0, %v831
  %v833 = vmul.f32 %v812, %v683
  %v834 = vmul.f32 %v793, %v813
  %v835 = vadd.f32 %v833, %v834
  %v836 = vtanh.pop %v835
  %v837 = vmul.f32 %v832, %v836
  %s838 = scalar_lea.vmem %s0, 160
  %v839 = vld [vmem:[%s838] sm:$0xff]
  %v840 = vld [vmem:[%s838 + $0x8] sm:$0xff]
  %v841 = vld [vmem:[%s838 + $0x10] sm:$0xff]
  %v842 = vld [vmem:[%s838 + $0x18] sm:$0xff]
  %843 = vmatpush.msra.mxu0 %v74
  %844 = vmatpush.msra.mxu0 %v70
  %845 = vmatpush.msra.mxu0 %v66
  %846 = vmatpush.msra.mxu0 %v62
  %847 = vmatpush.msra.mxu0 %v58
  %848 = vmatpush.msra.mxu0 %v54
  %849 = vmatpush.msra.mxu0 %v50
  %850 = vmatpush.msra.mxu0 %v46
  %851 = vmatpush.msra.mxu0 %v42
  %852 = vmatpush.msra.mxu0 %v38
  %853 = vmatpush.msra.mxu0 %v34
  %854 = vmatpush.msra.mxu0 %v30
  %855 = vmatpush.msra.mxu0 %v26
  %856 = vmatpush.msra.mxu0 %v22
  %857 = vmatpush.msra.mxu0 %v18
  %858 = vmatpush.msra.mxu0 %v14
  %859 = vmatmul.f32.gmra.mxu0 %v837
  %v860 = vpop.f32.mrf.mxu0
  %v861 = vadd.f32 0.0, %v860
  %862 = vdwg.mxu0
  %863 = vmatpush.msra.mxu0 %v75
  %864 = vmatpush.msra.mxu0 %v71
  %865 = vmatpush.msra.mxu0 %v67
  %866 = vmatpush.msra.mxu0 %v63
  %867 = vmatpush.msra.mxu0 %v59
  %868 = vmatpush.msra.mxu0 %v55
  %869 = vmatpush.msra.mxu0 %v51
  %870 = vmatpush.msra.mxu0 %v47
  %871 = vmatpush.msra.mxu0 %v43
  %872 = vmatpush.msra.mxu0 %v39
  %873 = vmatpush.msra.mxu0 %v35
  %874 = vmatpush.msra.mxu0 %v31
  %875 = vmatpush.msra.mxu0 %v27
  %876 = vmatpush.msra.mxu0 %v23
  %877 = vmatpush.msra.mxu0 %v19
  %878 = vmatpush.msra.mxu0 %v15
  %879 = vmatmul.f32.gmra.mxu0 %v837
  %v880 = vpop.f32.mrf.mxu0
  %v881 = vadd.f32 0.0, %v880
  %882 = vdwg.mxu0
  %883 = vmatpush.msra.mxu0 %v76
  %884 = vmatpush.msra.mxu0 %v72
  %885 = vmatpush.msra.mxu0 %v68
  %886 = vmatpush.msra.mxu0 %v64
  %887 = vmatpush.msra.mxu0 %v60
  %888 = vmatpush.msra.mxu0 %v56
  %889 = vmatpush.msra.mxu0 %v52
  %890 = vmatpush.msra.mxu0 %v48
  %891 = vmatpush.msra.mxu0 %v44
  %892 = vmatpush.msra.mxu0 %v40
  %893 = vmatpush.msra.mxu0 %v36
  %894 = vmatpush.msra.mxu0 %v32
  %895 = vmatpush.msra.mxu0 %v28
  %896 = vmatpush.msra.mxu0 %v24
  %897 = vmatpush.msra.mxu0 %v20
  %898 = vmatpush.msra.mxu0 %v16
  %899 = vmatmul.f32.gmra.mxu0 %v837
  %v900 = vpop.f32.mrf.mxu0
  %v901 = vadd.f32 0.0, %v900
  %902 = vdwg.mxu0
  %903 = vmatpush.msra.mxu0 %v77
  %904 = vmatpush.msra.mxu0 %v73
  %905 = vmatpush.msra.mxu0 %v69
  %906 = vmatpush.msra.mxu0 %v65
  %907 = vmatpush.msra.mxu0 %v61
  %908 = vmatpush.msra.mxu0 %v57
  %909 = vmatpush.msra.mxu0 %v53
  %910 = vmatpush.msra.mxu0 %v49
  %911 = vmatpush.msra.mxu0 %v45
  %912 = vmatpush.msra.mxu0 %v41
  %913 = vmatpush.msra.mxu0 %v37
  %914 = vmatpush.msra.mxu0 %v33
  %915 = vmatpush.msra.mxu0 %v29
  %916 = vmatpush.msra.mxu0 %v25
  %917 = vmatpush.msra.mxu0 %v21
  %918 = vmatpush.msra.mxu0 %v17
  %919 = vmatmul.f32.gmra.mxu0 %v837
  %v920 = vpop.f32.mrf.mxu0
  %v921 = vadd.f32 0.0, %v920
  %922 = vdwg.mxu0
  %v923 = vadd.f32 %v839, %v861
  %v924 = vadd.f32 %v840, %v881
  %v925 = vadd.f32 %v841, %v901
  %v926 = vadd.f32 %v842, %v921
  %v927 = vxor.u32 %v923, 2147483648
  %v928 = vmul.f32 %v927, 1.442695
  %v929 = vpow.pop %v928
  %v930 = vadd.f32 %v929, 1.0
  %v931 = vrcp.pop %v930
  %v932 = vmul.f32 %v930, %v931
  %v933 = vsub.f32 1.0, %v932
  %v934 = vmul.f32 %v931, %v933
  %v935 = vadd.f32 %v931, %v934
  %vm936 = vweird.f32 %v930
  %vm937 = vweird.f32 %v931
  %vm938 = vmor %vm936, %vm937
  %v939 = vsel %vm938, %v931, %v935
  %v940 = vand.u32 2147483647, %v930
  %vm941 = vcmp.eq.f32.partialorder %v940, 8.507059e+37
  %v942 = vand.u32 %v930, 2147483648
  %v943 = vor.u32 1.1754944e-38, %v942
  %v944 = vsel %vm941, %v943, %v939
  %v945 = vmul.f32 1.0, %v944
  %v946 = vxor.u32 %v924, 2147483648
  %v947 = vmul.f32 %v946, 1.442695
  %v948 = vpow.pop %v947
  %v949 = vadd.f32 %v948, 1.0
  %v950 = vrcp.pop %v949
  %v951 = vmul.f32 %v949, %v950
  %v952 = vsub.f32 1.0, %v951
  %v953 = vmul.f32 %v950, %v952
  %v954 = vadd.f32 %v950, %v953
  %vm955 = vweird.f32 %v949
  %vm956 = vweird.f32 %v950
  %vm957 = vmor %vm955, %vm956
  %v958 = vsel %vm957, %v950, %v954
  %v959 = vand.u32 2147483647, %v949
  %vm960 = vcmp.eq.f32.partialorder %v959, 8.507059e+37
  %v961 = vand.u32 %v949, 2147483648
  %v962 = vor.u32 1.1754944e-38, %v961
  %v963 = vsel %vm960, %v962, %v958
  %v964 = vmul.f32 1.0, %v963
  %v965 = vtanh.pop %v925
  %v966 = vxor.u32 %v926, 2147483648
  %v967 = vmul.f32 %v966, 1.442695
  %v968 = vpow.pop %v967
  %v969 = vadd.f32 %v968, 1.0
  %v970 = vrcp.pop %v969
  %v971 = vmul.f32 %v969, %v970
  %v972 = vsub.f32 1.0, %v971
  %v973 = vmul.f32 %v970, %v972
  %v974 = vadd.f32 %v970, %v973
  %vm975 = vweird.f32 %v969
  %vm976 = vweird.f32 %v970
  %vm977 = vmor %vm975, %vm976
  %v978 = vsel %vm977, %v970, %v974
  %v979 = vand.u32 2147483647, %v969
  %vm980 = vcmp.eq.f32.partialorder %v979, 8.507059e+37
  %v981 = vand.u32 %v969, 2147483648
  %v982 = vor.u32 1.1754944e-38, %v981
  %v983 = vsel %vm980, %v982, %v978
  %v984 = vmul.f32 1.0, %v983
  %v985 = vmul.f32 %v964, %v835
  %v986 = vmul.f32 %v945, %v965
  %v987 = vadd.f32 %v985, %v986
  %v988 = vtanh.pop %v987
  %v989 = vmul.f32 %v984, %v988
  %s990 = scalar_lea.vmem %s0, 192
  %v991 = vld [vmem:[%s990] sm:$0xff]
  %v992 = vld [vmem:[%s990 + $0x8] sm:$0xff]
  %v993 = vld [vmem:[%s990 + $0x10] sm:$0xff]
  %v994 = vld [vmem:[%s990 + $0x18] sm:$0xff]
  %995 = vmatpush.msra.mxu0 %v74
  %996 = vmatpush.msra.mxu0 %v70
  %997 = vmatpush.msra.mxu0 %v66
  %998 = vmatpush.msra.mxu0 %v62
  %999 = vmatpush.msra.mxu0 %v58
  %1000 = vmatpush.msra.mxu0 %v54
  %1001 = vmatpush.msra.mxu0 %v50
  %1002 = vmatpush.msra.mxu0 %v46
  %1003 = vmatpush.msra.mxu0 %v42
  %1004 = vmatpush.msra.mxu0 %v38
  %1005 = vmatpush.msra.mxu0 %v34
  %1006 = vmatpush.msra.mxu0 %v30
  %1007 = vmatpush.msra.mxu0 %v26
  %1008 = vmatpush.msra.mxu0 %v22
  %1009 = vmatpush.msra.mxu0 %v18
  %1010 = vmatpush.msra.mxu0 %v14
  %1011 = vmatmul.f32.gmra.mxu0 %v989
  %v1012 = vpop.f32.mrf.mxu0
  %v1013 = vadd.f32 0.0, %v1012
  %1014 = vdwg.mxu0
  %1015 = vmatpush.msra.mxu0 %v75
  %1016 = vmatpush.msra.mxu0 %v71
  %1017 = vmatpush.msra.mxu0 %v67
  %1018 = vmatpush.msra.mxu0 %v63
  %1019 = vmatpush.msra.mxu0 %v59
  %1020 = vmatpush.msra.mxu0 %v55
  %1021 = vmatpush.msra.mxu0 %v51
  %1022 = vmatpush.msra.mxu0 %v47
  %1023 = vmatpush.msra.mxu0 %v43
  %1024 = vmatpush.msra.mxu0 %v39
  %1025 = vmatpush.msra.mxu0 %v35
  %1026 = vmatpush.msra.mxu0 %v31
  %1027 = vmatpush.msra.mxu0 %v27
  %1028 = vmatpush.msra.mxu0 %v23
  %1029 = vmatpush.msra.mxu0 %v19
  %1030 = vmatpush.msra.mxu0 %v15
  %1031 = vmatmul.f32.gmra.mxu0 %v989
  %v1032 = vpop.f32.mrf.mxu0
  %v1033 = vadd.f32 0.0, %v1032
  %1034 = vdwg.mxu0
  %1035 = vmatpush.msra.mxu0 %v76
  %1036 = vmatpush.msra.mxu0 %v72
  %1037 = vmatpush.msra.mxu0 %v68
  %1038 = vmatpush.msra.mxu0 %v64
  %1039 = vmatpush.msra.mxu0 %v60
  %1040 = vmatpush.msra.mxu0 %v56
  %1041 = vmatpush.msra.mxu0 %v52
  %1042 = vmatpush.msra.mxu0 %v48
  %1043 = vmatpush.msra.mxu0 %v44
  %1044 = vmatpush.msra.mxu0 %v40
  %1045 = vmatpush.msra.mxu0 %v36
  %1046 = vmatpush.msra.mxu0 %v32
  %1047 = vmatpush.msra.mxu0 %v28
  %1048 = vmatpush.msra.mxu0 %v24
  %1049 = vmatpush.msra.mxu0 %v20
  %1050 = vmatpush.msra.mxu0 %v16
  %1051 = vmatmul.f32.gmra.mxu0 %v989
  %v1052 = vpop.f32.mrf.mxu0
  %v1053 = vadd.f32 0.0, %v1052
  %1054 = vdwg.mxu0
  %1055 = vmatpush.msra.mxu0 %v77
  %1056 = vmatpush.msra.mxu0 %v73
  %1057 = vmatpush.msra.mxu0 %v69
  %1058 = vmatpush.msra.mxu0 %v65
  %1059 = vmatpush.msra.mxu0 %v61
  %1060 = vmatpush.msra.mxu0 %v57
  %1061 = vmatpush.msra.mxu0 %v53
  %1062 = vmatpush.msra.mxu0 %v49
  %1063 = vmatpush.msra.mxu0 %v45
  %1064 = vmatpush.msra.mxu0 %v41
  %1065 = vmatpush.msra.mxu0 %v37
  %1066 = vmatpush.msra.mxu0 %v33
  %1067 = vmatpush.msra.mxu0 %v29
  %1068 = vmatpush.msra.mxu0 %v25
  %1069 = vmatpush.msra.mxu0 %v21
  %1070 = vmatpush.msra.mxu0 %v17
  %1071 = vmatmul.f32.gmra.mxu0 %v989
  %v1072 = vpop.f32.mrf.mxu0
  %v1073 = vadd.f32 0.0, %v1072
  %1074 = vdwg.mxu0
  %v1075 = vadd.f32 %v991, %v1013
  %v1076 = vadd.f32 %v992, %v1033
  %v1077 = vadd.f32 %v993, %v1053
  %v1078 = vadd.f32 %v994, %v1073
  %v1079 = vxor.u32 %v1075, 2147483648
  %v1080 = vmul.f32 %v1079, 1.442695
  %v1081 = vpow.pop %v1080
  %v1082 = vadd.f32 %v1081, 1.0
  %v1083 = vrcp.pop %v1082
  %v1084 = vmul.f32 %v1082, %v1083
  %v1085 = vsub.f32 1.0, %v1084
  %v1086 = vmul.f32 %v1083, %v1085
  %v1087 = vadd.f32 %v1083, %v1086
  %vm1088 = vweird.f32 %v1082
  %vm1089 = vweird.f32 %v1083
  %vm1090 = vmor %vm1088, %vm1089
  %v1091 = vsel %vm1090, %v1083, %v1087
  %v1092 = vand.u32 2147483647, %v1082
  %vm1093 = vcmp.eq.f32.partialorder %v1092, 8.507059e+37
  %v1094 = vand.u32 %v1082, 2147483648
  %v1095 = vor.u32 1.1754944e-38, %v1094
  %v1096 = vsel %vm1093, %v1095, %v1091
  %v1097 = vmul.f32 1.0, %v1096
  %v1098 = vxor.u32 %v1076, 2147483648
  %v1099 = vmul.f32 %v1098, 1.442695
  %v1100 = vpow.pop %v1099
  %v1101 = vadd.f32 %v1100, 1.0
  %v1102 = vrcp.pop %v1101
  %v1103 = vmul.f32 %v1101, %v1102
  %v1104 = vsub.f32 1.0, %v1103
  %v1105 = vmul.f32 %v1102, %v1104
  %v1106 = vadd.f32 %v1102, %v1105
  %vm1107 = vweird.f32 %v1101
  %vm1108 = vweird.f32 %v1102
  %vm1109 = vmor %vm1107, %vm1108
  %v1110 = vsel %vm1109, %v1102, %v1106
  %v1111 = vand.u32 2147483647, %v1101
  %vm1112 = vcmp.eq.f32.partialorder %v1111, 8.507059e+37
  %v1113 = vand.u32 %v1101, 2147483648
  %v1114 = vor.u32 1.1754944e-38, %v1113
  %v1115 = vsel %vm1112, %v1114, %v1110
  %v1116 = vmul.f32 1.0, %v1115
  %v1117 = vtanh.pop %v1077
  %v1118 = vxor.u32 %v1078, 2147483648
  %v1119 = vmul.f32 %v1118, 1.442695
  %v1120 = vpow.pop %v1119
  %v1121 = vadd.f32 %v1120, 1.0
  %v1122 = vrcp.pop %v1121
  %v1123 = vmul.f32 %v1121, %v1122
  %v1124 = vsub.f32 1.0, %v1123
  %v1125 = vmul.f32 %v1122, %v1124
  %v1126 = vadd.f32 %v1122, %v1125
  %vm1127 = vweird.f32 %v1121
  %vm1128 = vweird.f32 %v1122
  %vm1129 = vmor %vm1127, %vm1128
  %v1130 = vsel %vm1129, %v1122, %v1126
  %v1131 = vand.u32 2147483647, %v1121
  %vm1132 = vcmp.eq.f32.partialorder %v1131, 8.507059e+37
  %v1133 = vand.u32 %v1121, 2147483648
  %v1134 = vor.u32 1.1754944e-38, %v1133
  %v1135 = vsel %vm1132, %v1134, %v1130
  %v1136 = vmul.f32 1.0, %v1135
  %v1137 = vmul.f32 %v1116, %v987
  %v1138 = vmul.f32 %v1097, %v1117
  %v1139 = vadd.f32 %v1137, %v1138
  %v1140 = vtanh.pop %v1139
  %v1141 = vmul.f32 %v1136, %v1140
  %s1142 = scalar_lea.vmem %s0, 224
  %v1143 = vld [vmem:[%s1142] sm:$0xff]
  %v1144 = vld [vmem:[%s1142 + $0x8] sm:$0xff]
  %v1145 = vld [vmem:[%s1142 + $0x10] sm:$0xff]
  %v1146 = vld [vmem:[%s1142 + $0x18] sm:$0xff]
  %1147 = vmatpush.msra.mxu0 %v74
  %1148 = vmatpush.msra.mxu0 %v70
  %1149 = vmatpush.msra.mxu0 %v66
  %1150 = vmatpush.msra.mxu0 %v62
  %1151 = vmatpush.msra.mxu0 %v58
  %1152 = vmatpush.msra.mxu0 %v54
  %1153 = vmatpush.msra.mxu0 %v50
  %1154 = vmatpush.msra.mxu0 %v46
  %1155 = vmatpush.msra.mxu0 %v42
  %1156 = vmatpush.msra.mxu0 %v38
  %1157 = vmatpush.msra.mxu0 %v34
  %1158 = vmatpush.msra.mxu0 %v30
  %1159 = vmatpush.msra.mxu0 %v26
  %1160 = vmatpush.msra.mxu0 %v22
  %1161 = vmatpush.msra.mxu0 %v18
  %1162 = vmatpush.msra.mxu0 %v14
  %1163 = vmatmul.f32.gmra.mxu0 %v1141
  %v1164 = vpop.f32.mrf.mxu0
  %v1165 = vadd.f32 0.0, %v1164
  %1166 = vdwg.mxu0
  %1167 = vmatpush.msra.mxu0 %v75
  %1168 = vmatpush.msra.mxu0 %v71
  %1169 = vmatpush.msra.mxu0 %v67
  %1170 = vmatpush.msra.mxu0 %v63
  %1171 = vmatpush.msra.mxu0 %v59
  %1172 = vmatpush.msra.mxu0 %v55
  %1173 = vmatpush.msra.mxu0 %v51
  %1174 = vmatpush.msra.mxu0 %v47
  %1175 = vmatpush.msra.mxu0 %v43
  %1176 = vmatpush.msra.mxu0 %v39
  %1177 = vmatpush.msra.mxu0 %v35
  %1178 = vmatpush.msra.mxu0 %v31
  %1179 = vmatpush.msra.mxu0 %v27
  %1180 = vmatpush.msra.mxu0 %v23
  %1181 = vmatpush.msra.mxu0 %v19
  %1182 = vmatpush.msra.mxu0 %v15
  %1183 = vmatmul.f32.gmra.mxu0 %v1141
  %v1184 = vpop.f32.mrf.mxu0
  %v1185 = vadd.f32 0.0, %v1184
  %1186 = vdwg.mxu0
  %1187 = vmatpush.msra.mxu0 %v76
  %1188 = vmatpush.msra.mxu0 %v72
  %1189 = vmatpush.msra.mxu0 %v68
  %1190 = vmatpush.msra.mxu0 %v64
  %1191 = vmatpush.msra.mxu0 %v60
  %1192 = vmatpush.msra.mxu0 %v56
  %1193 = vmatpush.msra.mxu0 %v52
  %1194 = vmatpush.msra.mxu0 %v48
  %1195 = vmatpush.msra.mxu0 %v44
  %1196 = vmatpush.msra.mxu0 %v40
  %1197 = vmatpush.msra.mxu0 %v36
  %1198 = vmatpush.msra.mxu0 %v32
  %1199 = vmatpush.msra.mxu0 %v28
  %1200 = vmatpush.msra.mxu0 %v24
  %1201 = vmatpush.msra.mxu0 %v20
  %1202 = vmatpush.msra.mxu0 %v16
  %1203 = vmatmul.f32.gmra.mxu0 %v1141
  %v1204 = vpop.f32.mrf.mxu0
  %v1205 = vadd.f32 0.0, %v1204
  %1206 = vdwg.mxu0
  %1207 = vmatpush.msra.mxu0 %v77
  %1208 = vmatpush.msra.mxu0 %v73
  %1209 = vmatpush.msra.mxu0 %v69
  %1210 = vmatpush.msra.mxu0 %v65
  %1211 = vmatpush.msra.mxu0 %v61
  %1212 = vmatpush.msra.mxu0 %v57
  %1213 = vmatpush.msra.mxu0 %v53
  %1214 = vmatpush.msra.mxu0 %v49
  %1215 = vmatpush.msra.mxu0 %v45
  %1216 = vmatpush.msra.mxu0 %v41
  %1217 = vmatpush.msra.mxu0 %v37
  %1218 = vmatpush.msra.mxu0 %v33
  %1219 = vmatpush.msra.mxu0 %v29
  %1220 = vmatpush.msra.mxu0 %v25
  %1221 = vmatpush.msra.mxu0 %v21
  %1222 = vmatpush.msra.mxu0 %v17
  %1223 = vmatmul.f32.gmra.mxu0 %v1141
  %v1224 = vpop.f32.mrf.mxu0
  %v1225 = vadd.f32 0.0, %v1224
  %1226 = vdwg.mxu0
  %v1227 = vadd.f32 %v1143, %v1165
  %v1228 = vadd.f32 %v1144, %v1185
  %v1229 = vadd.f32 %v1145, %v1205
  %v1230 = vadd.f32 %v1146, %v1225
  %v1231 = vxor.u32 %v1227, 2147483648
  %v1232 = vmul.f32 %v1231, 1.442695
  %v1233 = vpow.pop %v1232
  %v1234 = vadd.f32 %v1233, 1.0
  %v1235 = vrcp.pop %v1234
  %v1236 = vmul.f32 %v1234, %v1235
  %v1237 = vsub.f32 1.0, %v1236
  %v1238 = vmul.f32 %v1235, %v1237
  %v1239 = vadd.f32 %v1235, %v1238
  %vm1240 = vweird.f32 %v1234
  %vm1241 = vweird.f32 %v1235
  %vm1242 = vmor %vm1240, %vm1241
  %v1243 = vsel %vm1242, %v1235, %v1239
  %v1244 = vand.u32 2147483647, %v1234
  %vm1245 = vcmp.eq.f32.partialorder %v1244, 8.507059e+37
  %v1246 = vand.u32 %v1234, 2147483648
  %v1247 = vor.u32 1.1754944e-38, %v1246
  %v1248 = vsel %vm1245, %v1247, %v1243
  %v1249 = vmul.f32 1.0, %v1248
  %v1250 = vxor.u32 %v1228, 2147483648
  %v1251 = vmul.f32 %v1250, 1.442695
  %v1252 = vpow.pop %v1251
  %v1253 = vadd.f32 %v1252, 1.0
  %v1254 = vrcp.pop %v1253
  %v1255 = vmul.f32 %v1253, %v1254
  %v1256 = vsub.f32 1.0, %v1255
  %v1257 = vmul.f32 %v1254, %v1256
  %v1258 = vadd.f32 %v1254, %v1257
  %vm1259 = vweird.f32 %v1253
  %vm1260 = vweird.f32 %v1254
  %vm1261 = vmor %vm1259, %vm1260
  %v1262 = vsel %vm1261, %v1254, %v1258
  %v1263 = vand.u32 2147483647, %v1253
  %vm1264 = vcmp.eq.f32.partialorder %v1263, 8.507059e+37
  %v1265 = vand.u32 %v1253, 2147483648
  %v1266 = vor.u32 1.1754944e-38, %v1265
  %v1267 = vsel %vm1264, %v1266, %v1262
  %v1268 = vmul.f32 1.0, %v1267
  %v1269 = vtanh.pop %v1229
  %v1270 = vxor.u32 %v1230, 2147483648
  %v1271 = vmul.f32 %v1270, 1.442695
  %v1272 = vpow.pop %v1271
  %v1273 = vadd.f32 %v1272, 1.0
  %v1274 = vrcp.pop %v1273
  %v1275 = vmul.f32 %v1273, %v1274
  %v1276 = vsub.f32 1.0, %v1275
  %v1277 = vmul.f32 %v1274, %v1276
  %v1278 = vadd.f32 %v1274, %v1277
  %vm1279 = vweird.f32 %v1273
  %vm1280 = vweird.f32 %v1274
  %vm1281 = vmor %vm1279, %vm1280
  %v1282 = vsel %vm1281, %v1274, %v1278
  %v1283 = vand.u32 2147483647, %v1273
  %vm1284 = vcmp.eq.f32.partialorder %v1283, 8.507059e+37
  %v1285 = vand.u32 %v1273, 2147483648
  %v1286 = vor.u32 1.1754944e-38, %v1285
  %v1287 = vsel %vm1284, %v1286, %v1282
  %v1288 = vmul.f32 1.0, %v1287
  %v1289 = vmul.f32 %v1268, %v1139
  %v1290 = vmul.f32 %v1249, %v1269
  %v1291 = vadd.f32 %v1289, %v1290
  %v1292 = vtanh.pop %v1291
  %v1293 = vmul.f32 %v1288, %v1292
  %1294 = vst [vmem:[%s3] sm:$0xff] %v1293
  // Predicated region
  $region14: #{music_vae_forward.2} parent=0 // pred_check
    _
  $region15: #{music_vae_forward.2} parent=0 // pred_check_branch
    %1296 = sbr.rel (0) target = $region17
  $region16: #{music_vae_forward.2} parent=0 // pred_region
    _
  $region17: #{music_vae_forward.2} parent=0 // pred_fallthru
    _
  // Predicated region
  $region18: #{music_vae_forward.2} parent=0 // pred_check
    _
  $region19: #{music_vae_forward.2} parent=0 // pred_check_branch
    %1298 = sbr.rel (0) target = $region21
  $region20: #{music_vae_forward.2} parent=0 // pred_region
    _
  $region21: #{music_vae_forward.2} parent=0 // pred_fallthru
    _

// kernel: music_vae_forward.3
$region0: #{music_vae_forward.3}
  #allocation0 [shape = 'u32[]', space=smem, size = 0x4, offset = 0x4, fixed_abs, tag = 'smem constant byte address 0x4 - core index']
  #allocation1 [shape = 'u32[72,128]{1,0:T(1,128)}', space=vmem, size = 0x9000, scoped, tag = 'internal scratch']
  %s0 = inlined_call_operand.vmem [shape: f32[8,8,512], index: 0, kind: input, shape index: {}]
  %s1 = inlined_call_operand.vmem [shape: f32[8,128], index: 1, kind: input, shape index: {}]
  %s2 = inlined_call_operand.vmem [shape: f32[128,512], index: 2, kind: input, shape index: {}]
  %s3 = inlined_call_operand.vmem [shape: f32[8,8,128], index: 3, kind: output, shape index: {}]
  %s4 = sld [smem:[#allocation0]]
  $region22: #{music_vae_forward.3} parent=0
    _
  %s6 = ssub.s32 1, %s4
  %s7 = scalar_select 0, %s6, %s4
  // Predicated region
  $region2: #{music_vae_forward.3} parent=0 // pred_check
    _
  $region3: #{music_vae_forward.3} parent=0 // pred_check_branch
    %9 = sbr.rel (0) target = $region5
  $region4: #{music_vae_forward.3} parent=0 // pred_region
    _
  $region5: #{music_vae_forward.3} parent=0 // pred_fallthru
    _
  // Predicated region
  $region6: #{music_vae_forward.3} parent=0 // pred_check
    _
  $region7: #{music_vae_forward.3} parent=0 // pred_check_branch
    %11 = sbr.rel (0) target = $region9
  $region8: #{music_vae_forward.3} parent=0 // pred_region
    _
  $region9: #{music_vae_forward.3} parent=0 // pred_fallthru
    _
  // Predicated region
  $region10: #{music_vae_forward.3} parent=0 // pred_check
    _
  $region11: #{music_vae_forward.3} parent=0 // pred_check_branch
    %13 = sbr.rel (0) target = $region13
  $region12: #{music_vae_forward.3} parent=0 // pred_region
    _
  $region13: #{music_vae_forward.3} parent=0 // pred_fallthru
    _
  %v14 = vld [vmem:[%s2] sm:$0xff]
  %v15 = vld [vmem:[%s2 + $0x8] sm:$0xff]
  %v16 = vld [vmem:[%s2 + $0x10] sm:$0xff]
  %v17 = vld [vmem:[%s2 + $0x18] sm:$0xff]
  %v18 = vld [vmem:[%s2 + $0x20] sm:$0xff]
  %v19 = vld [vmem:[%s2 + $0x28] sm:$0xff]
  %v20 = vld [vmem:[%s2 + $0x30] sm:$0xff]
  %v21 = vld [vmem:[%s2 + $0x38] sm:$0xff]
  %v22 = vld [vmem:[%s2 + $0x40] sm:$0xff]
  %v23 = vld [vmem:[%s2 + $0x48] sm:$0xff]
  %v24 = vld [vmem:[%s2 + $0x50] sm:$0xff]
  %v25 = vld [vmem:[%s2 + $0x58] sm:$0xff]
  %v26 = vld [vmem:[%s2 + $0x60] sm:$0xff]
  %v27 = vld [vmem:[%s2 + $0x68] sm:$0xff]
  %v28 = vld [vmem:[%s2 + $0x70] sm:$0xff]
  %v29 = vld [vmem:[%s2 + $0x78] sm:$0xff]
  %v30 = vld [vmem:[%s2 + $0x80] sm:$0xff]
  %v31 = vld [vmem:[%s2 + $0x88] sm:$0xff]
  %v32 = vld [vmem:[%s2 + $0x90] sm:$0xff]
  %v33 = vld [vmem:[%s2 + $0x98] sm:$0xff]
  %v34 = vld [vmem:[%s2 + $0xa0] sm:$0xff]
  %v35 = vld [vmem:[%s2 + $0xa8] sm:$0xff]
  %v36 = vld [vmem:[%s2 + $0xb0] sm:$0xff]
  %v37 = vld [vmem:[%s2 + $0xb8] sm:$0xff]
  %v38 = vld [vmem:[%s2 + $0xc0] sm:$0xff]
  %v39 = vld [vmem:[%s2 + $0xc8] sm:$0xff]
  %v40 = vld [vmem:[%s2 + $0xd0] sm:$0xff]
  %v41 = vld [vmem:[%s2 + $0xd8] sm:$0xff]
  %v42 = vld [vmem:[%s2 + $0xe0] sm:$0xff]
  %v43 = vld [vmem:[%s2 + $0xe8] sm:$0xff]
  %v44 = vld [vmem:[%s2 + $0xf0] sm:$0xff]
  %v45 = vld [vmem:[%s2 + $0xf8] sm:$0xff]
  %v46 = vld [vmem:[%s2 + $0x100] sm:$0xff]
  %v47 = vld [vmem:[%s2 + $0x108] sm:$0xff]
  %v48 = vld [vmem:[%s2 + $0x110] sm:$0xff]
  %v49 = vld [vmem:[%s2 + $0x118] sm:$0xff]
  %v50 = vld [vmem:[%s2 + $0x120] sm:$0xff]
  %v51 = vld [vmem:[%s2 + $0x128] sm:$0xff]
  %v52 = vld [vmem:[%s2 + $0x130] sm:$0xff]
  %v53 = vld [vmem:[%s2 + $0x138] sm:$0xff]
  %v54 = vld [vmem:[%s2 + $0x140] sm:$0xff]
  %v55 = vld [vmem:[%s2 + $0x148] sm:$0xff]
  %v56 = vld [vmem:[%s2 + $0x150] sm:$0xff]
  %v57 = vld [vmem:[%s2 + $0x158] sm:$0xff]
  %v58 = vld [vmem:[%s2 + $0x160] sm:$0xff]
  %v59 = vld [vmem:[%s2 + $0x168] sm:$0xff]
  %v60 = vld [vmem:[%s2 + $0x170] sm:$0xff]
  %v61 = vld [vmem:[%s2 + $0x178] sm:$0xff]
  %v62 = vld [vmem:[%s2 + $0x180] sm:$0xff]
  %v63 = vld [vmem:[%s2 + $0x188] sm:$0xff]
  %v64 = vld [vmem:[%s2 + $0x190] sm:$0xff]
  %v65 = vld [vmem:[%s2 + $0x198] sm:$0xff]
  %v66 = vld [vmem:[%s2 + $0x1a0] sm:$0xff]
  %v67 = vld [vmem:[%s2 + $0x1a8] sm:$0xff]
  %v68 = vld [vmem:[%s2 + $0x1b0] sm:$0xff]
  %v69 = vld [vmem:[%s2 + $0x1b8] sm:$0xff]
  %v70 = vld [vmem:[%s2 + $0x1c0] sm:$0xff]
  %v71 = vld [vmem:[%s2 + $0x1c8] sm:$0xff]
  %v72 = vld [vmem:[%s2 + $0x1d0] sm:$0xff]
  %v73 = vld [vmem:[%s2 + $0x1d8] sm:$0xff]
  %v74 = vld [vmem:[%s2 + $0x1e0] sm:$0xff]
  %v75 = vld [vmem:[%s2 + $0x1e8] sm:$0xff]
  %v76 = vld [vmem:[%s2 + $0x1f0] sm:$0xff]
  %v77 = vld [vmem:[%s2 + $0x1f8] sm:$0xff]
  %v78 = vld [vmem:[%s1] sm:$0xff]
  %v79 = vld [vmem:[%s0] sm:$0xff]
  %v80 = vld [vmem:[%s0 + $0x8] sm:$0xff]
  %v81 = vld [vmem:[%s0 + $0x10] sm:$0xff]
  %v82 = vld [vmem:[%s0 + $0x18] sm:$0xff]
  %83 = vmatpush.msra.mxu0 %v74
  %84 = vmatpush.msra.mxu0 %v70
  %85 = vmatpush.msra.mxu0 %v66
  %86 = vmatpush.msra.mxu0 %v62
  %87 = vmatpush.msra.mxu0 %v58
  %88 = vmatpush.msra.mxu0 %v54
  %89 = vmatpush.msra.mxu0 %v50
  %90 = vmatpush.msra.mxu0 %v46
  %91 = vmatpush.msra.mxu0 %v42
  %92 = vmatpush.msra.mxu0 %v38
  %93 = vmatpush.msra.mxu0 %v34
  %94 = vmatpush.msra.mxu0 %v30
  %95 = vmatpush.msra.mxu0 %v26
  %96 = vmatpush.msra.mxu0 %v22
  %97 = vmatpush.msra.mxu0 %v18
  %98 = vmatpush.msra.mxu0 %v14
  %99 = vmatmul.f32.gmra.mxu0 %v78
  %v100 = vpop.f32.mrf.mxu0
  %v101 = vadd.f32 0.0, %v100
  %102 = vdwg.mxu0
  %103 = vmatpush.msra.mxu0 %v75
  %104 = vmatpush.msra.mxu0 %v71
  %105 = vmatpush.msra.mxu0 %v67
  %106 = vmatpush.msra.mxu0 %v63
  %107 = vmatpush.msra.mxu0 %v59
  %108 = vmatpush.msra.mxu0 %v55
  %109 = vmatpush.msra.mxu0 %v51
  %110 = vmatpush.msra.mxu0 %v47
  %111 = vmatpush.msra.mxu0 %v43
  %112 = vmatpush.msra.mxu0 %v39
  %113 = vmatpush.msra.mxu0 %v35
  %114 = vmatpush.msra.mxu0 %v31
  %115 = vmatpush.msra.mxu0 %v27
  %116 = vmatpush.msra.mxu0 %v23
  %117 = vmatpush.msra.mxu0 %v19
  %118 = vmatpush.msra.mxu0 %v15
  %119 = vmatmul.f32.gmra.mxu0 %v78
  %v120 = vpop.f32.mrf.mxu0
  %v121 = vadd.f32 0.0, %v120
  %122 = vdwg.mxu0
  %123 = vmatpush.msra.mxu0 %v76
  %124 = vmatpush.msra.mxu0 %v72
  %125 = vmatpush.msra.mxu0 %v68
  %126 = vmatpush.msra.mxu0 %v64
  %127 = vmatpush.msra.mxu0 %v60
  %128 = vmatpush.msra.mxu0 %v56
  %129 = vmatpush.msra.mxu0 %v52
  %130 = vmatpush.msra.mxu0 %v48
  %131 = vmatpush.msra.mxu0 %v44
  %132 = vmatpush.msra.mxu0 %v40
  %133 = vmatpush.msra.mxu0 %v36
  %134 = vmatpush.msra.mxu0 %v32
  %135 = vmatpush.msra.mxu0 %v28
  %136 = vmatpush.msra.mxu0 %v24
  %137 = vmatpush.msra.mxu0 %v20
  %138 = vmatpush.msra.mxu0 %v16
  %139 = vmatmul.f32.gmra.mxu0 %v78
  %v140 = vpop.f32.mrf.mxu0
  %v141 = vadd.f32 0.0, %v140
  %142 = vdwg.mxu0
  %143 = vmatpush.msra.mxu0 %v77
  %144 = vmatpush.msra.mxu0 %v73
  %145 = vmatpush.msra.mxu0 %v69
  %146 = vmatpush.msra.mxu0 %v65
  %147 = vmatpush.msra.mxu0 %v61
  %148 = vmatpush.msra.mxu0 %v57
  %149 = vmatpush.msra.mxu0 %v53
  %150 = vmatpush.msra.mxu0 %v49
  %151 = vmatpush.msra.mxu0 %v45
  %152 = vmatpush.msra.mxu0 %v41
  %153 = vmatpush.msra.mxu0 %v37
  %154 = vmatpush.msra.mxu0 %v33
  %155 = vmatpush.msra.mxu0 %v29
  %156 = vmatpush.msra.mxu0 %v25
  %157 = vmatpush.msra.mxu0 %v21
  %158 = vmatpush.msra.mxu0 %v17
  %159 = vmatmul.f32.gmra.mxu0 %v78
  %v160 = vpop.f32.mrf.mxu0
  %v161 = vadd.f32 0.0, %v160
  %162 = vdwg.mxu0
  %v163 = vadd.f32 %v79, %v101
  %v164 = vadd.f32 %v80, %v121
  %v165 = vadd.f32 %v81, %v141
  %v166 = vadd.f32 %v82, %v161
  %v167 = vxor.u32 %v163, 2147483648
  %v168 = vmul.f32 %v167, 1.442695
  %v169 = vpow.pop %v168
  %v170 = vadd.f32 %v169, 1.0
  %v171 = vrcp.pop %v170
  %v172 = vmul.f32 %v170, %v171
  %v173 = vsub.f32 1.0, %v172
  %v174 = vmul.f32 %v171, %v173
  %v175 = vadd.f32 %v171, %v174
  %vm176 = vweird.f32 %v170
  %vm177 = vweird.f32 %v171
  %vm178 = vmor %vm176, %vm177
  %v179 = vsel %vm178, %v171, %v175
  %v180 = vand.u32 2147483647, %v170
  %vm181 = vcmp.eq.f32.partialorder %v180, 8.507059e+37
  %v182 = vand.u32 %v170, 2147483648
  %v183 = vor.u32 1.1754944e-38, %v182
  %v184 = vsel %vm181, %v183, %v179
  %v185 = vmul.f32 1.0, %v184
  %v186 = vxor.u32 %v164, 2147483648
  %v187 = vmul.f32 %v186, 1.442695
  %v188 = vpow.pop %v187
  %v189 = vadd.f32 %v188, 1.0
  %v190 = vrcp.pop %v189
  %v191 = vmul.f32 %v189, %v190
  %v192 = vsub.f32 1.0, %v191
  %v193 = vmul.f32 %v190, %v192
  %v194 = vadd.f32 %v190, %v193
  %vm195 = vweird.f32 %v189
  %vm196 = vweird.f32 %v190
  %vm197 = vmor %vm195, %vm196
  %v198 = vsel %vm197, %v190, %v194
  %v199 = vand.u32 2147483647, %v189
  %vm200 = vcmp.eq.f32.partialorder %v199, 8.507059e+37
  %v201 = vand.u32 %v189, 2147483648
  %v202 = vor.u32 1.1754944e-38, %v201
  %v203 = vsel %vm200, %v202, %v198
  %v204 = vmul.f32 1.0, %v203
  %v205 = vtanh.pop %v165
  %v206 = vxor.u32 %v166, 2147483648
  %v207 = vmul.f32 %v206, 1.442695
  %v208 = vpow.pop %v207
  %v209 = vadd.f32 %v208, 1.0
  %v210 = vrcp.pop %v209
  %v211 = vmul.f32 %v209, %v210
  %v212 = vsub.f32 1.0, %v211
  %v213 = vmul.f32 %v210, %v212
  %v214 = vadd.f32 %v210, %v213
  %vm215 = vweird.f32 %v209
  %vm216 = vweird.f32 %v210
  %vm217 = vmor %vm215, %vm216
  %v218 = vsel %vm217, %v210, %v214
  %v219 = vand.u32 2147483647, %v209
  %vm220 = vcmp.eq.f32.partialorder %v219, 8.507059e+37
  %v221 = vand.u32 %v209, 2147483648
  %v222 = vor.u32 1.1754944e-38, %v221
  %v223 = vsel %vm220, %v222, %v218
  %v224 = vmul.f32 1.0, %v223
  %v225 = vmul.f32 %v204, 0.0
  %v226 = vmul.f32 %v185, %v205
  %v227 = vadd.f32 %v225, %v226
  %v228 = vtanh.pop %v227
  %v229 = vmul.f32 %v224, %v228
  %230 = vst [vmem:[%s3] sm:$0xff] %v229
  %s231 = scalar_lea.vmem %s0, 32
  %v232 = vld [vmem:[%s231] sm:$0xff]
  %v233 = vld [vmem:[%s231 + $0x8] sm:$0xff]
  %v234 = vld [vmem:[%s231 + $0x10] sm:$0xff]
  %v235 = vld [vmem:[%s231 + $0x18] sm:$0xff]
  %236 = vmatpush.msra.mxu0 %v74
  %237 = vmatpush.msra.mxu0 %v70
  %238 = vmatpush.msra.mxu0 %v66
  %239 = vmatpush.msra.mxu0 %v62
  %240 = vmatpush.msra.mxu0 %v58
  %241 = vmatpush.msra.mxu0 %v54
  %242 = vmatpush.msra.mxu0 %v50
  %243 = vmatpush.msra.mxu0 %v46
  %244 = vmatpush.msra.mxu0 %v42
  %245 = vmatpush.msra.mxu0 %v38
  %246 = vmatpush.msra.mxu0 %v34
  %247 = vmatpush.msra.mxu0 %v30
  %248 = vmatpush.msra.mxu0 %v26
  %249 = vmatpush.msra.mxu0 %v22
  %250 = vmatpush.msra.mxu0 %v18
  %251 = vmatpush.msra.mxu0 %v14
  %252 = vmatmul.f32.gmra.mxu0 %v229
  %v253 = vpop.f32.mrf.mxu0
  %v254 = vadd.f32 0.0, %v253
  %255 = vdwg.mxu0
  %256 = vmatpush.msra.mxu0 %v75
  %257 = vmatpush.msra.mxu0 %v71
  %258 = vmatpush.msra.mxu0 %v67
  %259 = vmatpush.msra.mxu0 %v63
  %260 = vmatpush.msra.mxu0 %v59
  %261 = vmatpush.msra.mxu0 %v55
  %262 = vmatpush.msra.mxu0 %v51
  %263 = vmatpush.msra.mxu0 %v47
  %264 = vmatpush.msra.mxu0 %v43
  %265 = vmatpush.msra.mxu0 %v39
  %266 = vmatpush.msra.mxu0 %v35
  %267 = vmatpush.msra.mxu0 %v31
  %268 = vmatpush.msra.mxu0 %v27
  %269 = vmatpush.msra.mxu0 %v23
  %270 = vmatpush.msra.mxu0 %v19
  %271 = vmatpush.msra.mxu0 %v15
  %272 = vmatmul.f32.gmra.mxu0 %v229
  %v273 = vpop.f32.mrf.mxu0
  %v274 = vadd.f32 0.0, %v273
  %275 = vdwg.mxu0
  %276 = vmatpush.msra.mxu0 %v76
  %277 = vmatpush.msra.mxu0 %v72
  %278 = vmatpush.msra.mxu0 %v68
  %279 = vmatpush.msra.mxu0 %v64
  %280 = vmatpush.msra.mxu0 %v60
  %281 = vmatpush.msra.mxu0 %v56
  %282 = vmatpush.msra.mxu0 %v52
  %283 = vmatpush.msra.mxu0 %v48
  %284 = vmatpush.msra.mxu0 %v44
  %285 = vmatpush.msra.mxu0 %v40
  %286 = vmatpush.msra.mxu0 %v36
  %287 = vmatpush.msra.mxu0 %v32
  %288 = vmatpush.msra.mxu0 %v28
  %289 = vmatpush.msra.mxu0 %v24
  %290 = vmatpush.msra.mxu0 %v20
  %291 = vmatpush.msra.mxu0 %v16
  %292 = vmatmul.f32.gmra.mxu0 %v229
  %v293 = vpop.f32.mrf.mxu0
  %v294 = vadd.f32 0.0, %v293
  %295 = vdwg.mxu0
  %296 = vmatpush.msra.mxu0 %v77
  %297 = vmatpush.msra.mxu0 %v73
  %298 = vmatpush.msra.mxu0 %v69
  %299 = vmatpush.msra.mxu0 %v65
  %300 = vmatpush.msra.mxu0 %v61
  %301 = vmatpush.msra.mxu0 %v57
  %302 = vmatpush.msra.mxu0 %v53
  %303 = vmatpush.msra.mxu0 %v49
  %304 = vmatpush.msra.mxu0 %v45
  %305 = vmatpush.msra.mxu0 %v41
  %306 = vmatpush.msra.mxu0 %v37
  %307 = vmatpush.msra.mxu0 %v33
  %308 = vmatpush.msra.mxu0 %v29
  %309 = vmatpush.msra.mxu0 %v25
  %310 = vmatpush.msra.mxu0 %v21
  %311 = vmatpush.msra.mxu0 %v17
  %312 = vmatmul.f32.gmra.mxu0 %v229
  %v313 = vpop.f32.mrf.mxu0
  %v314 = vadd.f32 0.0, %v313
  %315 = vdwg.mxu0
  %v316 = vadd.f32 %v232, %v254
  %v317 = vadd.f32 %v233, %v274
  %v318 = vadd.f32 %v234, %v294
  %v319 = vadd.f32 %v235, %v314
  %v320 = vxor.u32 %v316, 2147483648
  %v321 = vmul.f32 %v320, 1.442695
  %v322 = vpow.pop %v321
  %v323 = vadd.f32 %v322, 1.0
  %v324 = vrcp.pop %v323
  %v325 = vmul.f32 %v323, %v324
  %v326 = vsub.f32 1.0, %v325
  %v327 = vmul.f32 %v324, %v326
  %v328 = vadd.f32 %v324, %v327
  %vm329 = vweird.f32 %v323
  %vm330 = vweird.f32 %v324
  %vm331 = vmor %vm329, %vm330
  %v332 = vsel %vm331, %v324, %v328
  %v333 = vand.u32 2147483647, %v323
  %vm334 = vcmp.eq.f32.partialorder %v333, 8.507059e+37
  %v335 = vand.u32 %v323, 2147483648
  %v336 = vor.u32 1.1754944e-38, %v335
  %v337 = vsel %vm334, %v336, %v332
  %v338 = vmul.f32 1.0, %v337
  %v339 = vxor.u32 %v317, 2147483648
  %v340 = vmul.f32 %v339, 1.442695
  %v341 = vpow.pop %v340
  %v342 = vadd.f32 %v341, 1.0
  %v343 = vrcp.pop %v342
  %v344 = vmul.f32 %v342, %v343
  %v345 = vsub.f32 1.0, %v344
  %v346 = vmul.f32 %v343, %v345
  %v347 = vadd.f32 %v343, %v346
  %vm348 = vweird.f32 %v342
  %vm349 = vweird.f32 %v343
  %vm350 = vmor %vm348, %vm349
  %v351 = vsel %vm350, %v343, %v347
  %v352 = vand.u32 2147483647, %v342
  %vm353 = vcmp.eq.f32.partialorder %v352, 8.507059e+37
  %v354 = vand.u32 %v342, 2147483648
  %v355 = vor.u32 1.1754944e-38, %v354
  %v356 = vsel %vm353, %v355, %v351
  %v357 = vmul.f32 1.0, %v356
  %v358 = vtanh.pop %v318
  %v359 = vxor.u32 %v319, 2147483648
  %v360 = vmul.f32 %v359, 1.442695
  %v361 = vpow.pop %v360
  %v362 = vadd.f32 %v361, 1.0
  %v363 = vrcp.pop %v362
  %v364 = vmul.f32 %v362, %v363
  %v365 = vsub.f32 1.0, %v364
  %v366 = vmul.f32 %v363, %v365
  %v367 = vadd.f32 %v363, %v366
  %vm368 = vweird.f32 %v362
  %vm369 = vweird.f32 %v363
  %vm370 = vmor %vm368, %vm369
  %v371 = vsel %vm370, %v363, %v367
  %v372 = vand.u32 2147483647, %v362
  %vm373 = vcmp.eq.f32.partialorder %v372, 8.507059e+37
  %v374 = vand.u32 %v362, 2147483648
  %v375 = vor.u32 1.1754944e-38, %v374
  %v376 = vsel %vm373, %v375, %v371
  %v377 = vmul.f32 1.0, %v376
  %v378 = vmul.f32 %v357, %v227
  %v379 = vmul.f32 %v338, %v358
  %v380 = vadd.f32 %v378, %v379
  %v381 = vtanh.pop %v380
  %v382 = vmul.f32 %v377, %v381
  %s383 = scalar_lea.vmem %s3, 8
  %384 = vst [vmem:[%s383] sm:$0xff] %v382
  %s385 = scalar_lea.vmem %s0, 64
  %v386 = vld [vmem:[%s385] sm:$0xff]
  %v387 = vld [vmem:[%s385 + $0x8] sm:$0xff]
  %v388 = vld [vmem:[%s385 + $0x10] sm:$0xff]
  %v389 = vld [vmem:[%s385 + $0x18] sm:$0xff]
  %390 = vmatpush.msra.mxu0 %v74
  %391 = vmatpush.msra.mxu0 %v70
  %392 = vmatpush.msra.mxu0 %v66
  %393 = vmatpush.msra.mxu0 %v62
  %394 = vmatpush.msra.mxu0 %v58
  %395 = vmatpush.msra.mxu0 %v54
  %396 = vmatpush.msra.mxu0 %v50
  %397 = vmatpush.msra.mxu0 %v46
  %398 = vmatpush.msra.mxu0 %v42
  %399 = vmatpush.msra.mxu0 %v38
  %400 = vmatpush.msra.mxu0 %v34
  %401 = vmatpush.msra.mxu0 %v30
  %402 = vmatpush.msra.mxu0 %v26
  %403 = vmatpush.msra.mxu0 %v22
  %404 = vmatpush.msra.mxu0 %v18
  %405 = vmatpush.msra.mxu0 %v14
  %406 = vmatmul.f32.gmra.mxu0 %v382
  %v407 = vpop.f32.mrf.mxu0
  %v408 = vadd.f32 0.0, %v407
  %409 = vdwg.mxu0
  %410 = vmatpush.msra.mxu0 %v75
  %411 = vmatpush.msra.mxu0 %v71
  %412 = vmatpush.msra.mxu0 %v67
  %413 = vmatpush.msra.mxu0 %v63
  %414 = vmatpush.msra.mxu0 %v59
  %415 = vmatpush.msra.mxu0 %v55
  %416 = vmatpush.msra.mxu0 %v51
  %417 = vmatpush.msra.mxu0 %v47
  %418 = vmatpush.msra.mxu0 %v43
  %419 = vmatpush.msra.mxu0 %v39
  %420 = vmatpush.msra.mxu0 %v35
  %421 = vmatpush.msra.mxu0 %v31
  %422 = vmatpush.msra.mxu0 %v27
  %423 = vmatpush.msra.mxu0 %v23
  %424 = vmatpush.msra.mxu0 %v19
  %425 = vmatpush.msra.mxu0 %v15
  %426 = vmatmul.f32.gmra.mxu0 %v382
  %v427 = vpop.f32.mrf.mxu0
  %v428 = vadd.f32 0.0, %v427
  %429 = vdwg.mxu0
  %430 = vmatpush.msra.mxu0 %v76
  %431 = vmatpush.msra.mxu0 %v72
  %432 = vmatpush.msra.mxu0 %v68
  %433 = vmatpush.msra.mxu0 %v64
  %434 = vmatpush.msra.mxu0 %v60
  %435 = vmatpush.msra.mxu0 %v56
  %436 = vmatpush.msra.mxu0 %v52
  %437 = vmatpush.msra.mxu0 %v48
  %438 = vmatpush.msra.mxu0 %v44
  %439 = vmatpush.msra.mxu0 %v40
  %440 = vmatpush.msra.mxu0 %v36
  %441 = vmatpush.msra.mxu0 %v32
  %442 = vmatpush.msra.mxu0 %v28
  %443 = vmatpush.msra.mxu0 %v24
  %444 = vmatpush.msra.mxu0 %v20
  %445 = vmatpush.msra.mxu0 %v16
  %446 = vmatmul.f32.gmra.mxu0 %v382
  %v447 = vpop.f32.mrf.mxu0
  %v448 = vadd.f32 0.0, %v447
  %449 = vdwg.mxu0
  %450 = vmatpush.msra.mxu0 %v77
  %451 = vmatpush.msra.mxu0 %v73
  %452 = vmatpush.msra.mxu0 %v69
  %453 = vmatpush.msra.mxu0 %v65
  %454 = vmatpush.msra.mxu0 %v61
  %455 = vmatpush.msra.mxu0 %v57
  %456 = vmatpush.msra.mxu0 %v53
  %457 = vmatpush.msra.mxu0 %v49
  %458 = vmatpush.msra.mxu0 %v45
  %459 = vmatpush.msra.mxu0 %v41
  %460 = vmatpush.msra.mxu0 %v37
  %461 = vmatpush.msra.mxu0 %v33
  %462 = vmatpush.msra.mxu0 %v29
  %463 = vmatpush.msra.mxu0 %v25
  %464 = vmatpush.msra.mxu0 %v21
  %465 = vmatpush.msra.mxu0 %v17
  %466 = vmatmul.f32.gmra.mxu0 %v382
  %v467 = vpop.f32.mrf.mxu0
  %v468 = vadd.f32 0.0, %v467
  %469 = vdwg.mxu0
  %v470 = vadd.f32 %v386, %v408
  %v471 = vadd.f32 %v387, %v428
  %v472 = vadd.f32 %v388, %v448
  %v473 = vadd.f32 %v389, %v468
  %v474 = vxor.u32 %v470, 2147483648
  %v475 = vmul.f32 %v474, 1.442695
  %v476 = vpow.pop %v475
  %v477 = vadd.f32 %v476, 1.0
  %v478 = vrcp.pop %v477
  %v479 = vmul.f32 %v477, %v478
  %v480 = vsub.f32 1.0, %v479
  %v481 = vmul.f32 %v478, %v480
  %v482 = vadd.f32 %v478, %v481
  %vm483 = vweird.f32 %v477
  %vm484 = vweird.f32 %v478
  %vm485 = vmor %vm483, %vm484
  %v486 = vsel %vm485, %v478, %v482
  %v487 = vand.u32 2147483647, %v477
  %vm488 = vcmp.eq.f32.partialorder %v487, 8.507059e+37
  %v489 = vand.u32 %v477, 2147483648
  %v490 = vor.u32 1.1754944e-38, %v489
  %v491 = vsel %vm488, %v490, %v486
  %v492 = vmul.f32 1.0, %v491
  %v493 = vxor.u32 %v471, 2147483648
  %v494 = vmul.f32 %v493, 1.442695
  %v495 = vpow.pop %v494
  %v496 = vadd.f32 %v495, 1.0
  %v497 = vrcp.pop %v496
  %v498 = vmul.f32 %v496, %v497
  %v499 = vsub.f32 1.0, %v498
  %v500 = vmul.f32 %v497, %v499
  %v501 = vadd.f32 %v497, %v500
  %vm502 = vweird.f32 %v496
  %vm503 = vweird.f32 %v497
  %vm504 = vmor %vm502, %vm503
  %v505 = vsel %vm504, %v497, %v501
  %v506 = vand.u32 2147483647, %v496
  %vm507 = vcmp.eq.f32.partialorder %v506, 8.507059e+37
  %v508 = vand.u32 %v496, 2147483648
  %v509 = vor.u32 1.1754944e-38, %v508
  %v510 = vsel %vm507, %v509, %v505
  %v511 = vmul.f32 1.0, %v510
  %v512 = vtanh.pop %v472
  %v513 = vxor.u32 %v473, 2147483648
  %v514 = vmul.f32 %v513, 1.442695
  %v515 = vpow.pop %v514
  %v516 = vadd.f32 %v515, 1.0
  %v517 = vrcp.pop %v516
  %v518 = vmul.f32 %v516, %v517
  %v519 = vsub.f32 1.0, %v518
  %v520 = vmul.f32 %v517, %v519
  %v521 = vadd.f32 %v517, %v520
  %vm522 = vweird.f32 %v516
  %vm523 = vweird.f32 %v517
  %vm524 = vmor %vm522, %vm523
  %v525 = vsel %vm524, %v517, %v521
  %v526 = vand.u32 2147483647, %v516
  %vm527 = vcmp.eq.f32.partialorder %v526, 8.507059e+37
  %v528 = vand.u32 %v516, 2147483648
  %v529 = vor.u32 1.1754944e-38, %v528
  %v530 = vsel %vm527, %v529, %v525
  %v531 = vmul.f32 1.0, %v530
  %v532 = vmul.f32 %v511, %v380
  %v533 = vmul.f32 %v492, %v512
  %v534 = vadd.f32 %v532, %v533
  %v535 = vtanh.pop %v534
  %v536 = vmul.f32 %v531, %v535
  %s537 = scalar_lea.vmem %s3, 16
  %538 = vst [vmem:[%s537] sm:$0xff] %v536
  %s539 = scalar_lea.vmem %s0, 96
  %v540 = vld [vmem:[%s539] sm:$0xff]
  %v541 = vld [vmem:[%s539 + $0x8] sm:$0xff]
  %v542 = vld [vmem:[%s539 + $0x10] sm:$0xff]
  %v543 = vld [vmem:[%s539 + $0x18] sm:$0xff]
  %544 = vmatpush.msra.mxu0 %v74
  %545 = vmatpush.msra.mxu0 %v70
  %546 = vmatpush.msra.mxu0 %v66
  %547 = vmatpush.msra.mxu0 %v62
  %548 = vmatpush.msra.mxu0 %v58
  %549 = vmatpush.msra.mxu0 %v54
  %550 = vmatpush.msra.mxu0 %v50
  %551 = vmatpush.msra.mxu0 %v46
  %552 = vmatpush.msra.mxu0 %v42
  %553 = vmatpush.msra.mxu0 %v38
  %554 = vmatpush.msra.mxu0 %v34
  %555 = vmatpush.msra.mxu0 %v30
  %556 = vmatpush.msra.mxu0 %v26
  %557 = vmatpush.msra.mxu0 %v22
  %558 = vmatpush.msra.mxu0 %v18
  %559 = vmatpush.msra.mxu0 %v14
  %560 = vmatmul.f32.gmra.mxu0 %v536
  %v561 = vpop.f32.mrf.mxu0
  %v562 = vadd.f32 0.0, %v561
  %563 = vdwg.mxu0
  %564 = vmatpush.msra.mxu0 %v75
  %565 = vmatpush.msra.mxu0 %v71
  %566 = vmatpush.msra.mxu0 %v67
  %567 = vmatpush.msra.mxu0 %v63
  %568 = vmatpush.msra.mxu0 %v59
  %569 = vmatpush.msra.mxu0 %v55
  %570 = vmatpush.msra.mxu0 %v51
  %571 = vmatpush.msra.mxu0 %v47
  %572 = vmatpush.msra.mxu0 %v43
  %573 = vmatpush.msra.mxu0 %v39
  %574 = vmatpush.msra.mxu0 %v35
  %575 = vmatpush.msra.mxu0 %v31
  %576 = vmatpush.msra.mxu0 %v27
  %577 = vmatpush.msra.mxu0 %v23
  %578 = vmatpush.msra.mxu0 %v19
  %579 = vmatpush.msra.mxu0 %v15
  %580 = vmatmul.f32.gmra.mxu0 %v536
  %v581 = vpop.f32.mrf.mxu0
  %v582 = vadd.f32 0.0, %v581
  %583 = vdwg.mxu0
  %584 = vmatpush.msra.mxu0 %v76
  %585 = vmatpush.msra.mxu0 %v72
  %586 = vmatpush.msra.mxu0 %v68
  %587 = vmatpush.msra.mxu0 %v64
  %588 = vmatpush.msra.mxu0 %v60
  %589 = vmatpush.msra.mxu0 %v56
  %590 = vmatpush.msra.mxu0 %v52
  %591 = vmatpush.msra.mxu0 %v48
  %592 = vmatpush.msra.mxu0 %v44
  %593 = vmatpush.msra.mxu0 %v40
  %594 = vmatpush.msra.mxu0 %v36
  %595 = vmatpush.msra.mxu0 %v32
  %596 = vmatpush.msra.mxu0 %v28
  %597 = vmatpush.msra.mxu0 %v24
  %598 = vmatpush.msra.mxu0 %v20
  %599 = vmatpush.msra.mxu0 %v16
  %600 = vmatmul.f32.gmra.mxu0 %v536
  %v601 = vpop.f32.mrf.mxu0
  %v602 = vadd.f32 0.0, %v601
  %603 = vdwg.mxu0
  %604 = vmatpush.msra.mxu0 %v77
  %605 = vmatpush.msra.mxu0 %v73
  %606 = vmatpush.msra.mxu0 %v69
  %607 = vmatpush.msra.mxu0 %v65
  %608 = vmatpush.msra.mxu0 %v61
  %609 = vmatpush.msra.mxu0 %v57
  %610 = vmatpush.msra.mxu0 %v53
  %611 = vmatpush.msra.mxu0 %v49
  %612 = vmatpush.msra.mxu0 %v45
  %613 = vmatpush.msra.mxu0 %v41
  %614 = vmatpush.msra.mxu0 %v37
  %615 = vmatpush.msra.mxu0 %v33
  %616 = vmatpush.msra.mxu0 %v29
  %617 = vmatpush.msra.mxu0 %v25
  %618 = vmatpush.msra.mxu0 %v21
  %619 = vmatpush.msra.mxu0 %v17
  %620 = vmatmul.f32.gmra.mxu0 %v536
  %v621 = vpop.f32.mrf.mxu0
  %v622 = vadd.f32 0.0, %v621
  %623 = vdwg.mxu0
  %v624 = vadd.f32 %v540, %v562
  %v625 = vadd.f32 %v541, %v582
  %v626 = vadd.f32 %v542, %v602
  %v627 = vadd.f32 %v543, %v622
  %v628 = vxor.u32 %v624, 2147483648
  %v629 = vmul.f32 %v628, 1.442695
  %v630 = vpow.pop %v629
  %v631 = vadd.f32 %v630, 1.0
  %v632 = vrcp.pop %v631
  %v633 = vmul.f32 %v631, %v632
  %v634 = vsub.f32 1.0, %v633
  %v635 = vmul.f32 %v632, %v634
  %v636 = vadd.f32 %v632, %v635
  %vm637 = vweird.f32 %v631
  %vm638 = vweird.f32 %v632
  %vm639 = vmor %vm637, %vm638
  %v640 = vsel %vm639, %v632, %v636
  %v641 = vand.u32 2147483647, %v631
  %vm642 = vcmp.eq.f32.partialorder %v641, 8.507059e+37
  %v643 = vand.u32 %v631, 2147483648
  %v644 = vor.u32 1.1754944e-38, %v643
  %v645 = vsel %vm642, %v644, %v640
  %v646 = vmul.f32 1.0, %v645
  %v647 = vxor.u32 %v625, 2147483648
  %v648 = vmul.f32 %v647, 1.442695
  %v649 = vpow.pop %v648
  %v650 = vadd.f32 %v649, 1.0
  %v651 = vrcp.pop %v650
  %v652 = vmul.f32 %v650, %v651
  %v653 = vsub.f32 1.0, %v652
  %v654 = vmul.f32 %v651, %v653
  %v655 = vadd.f32 %v651, %v654
  %vm656 = vweird.f32 %v650
  %vm657 = vweird.f32 %v651
  %vm658 = vmor %vm656, %vm657
  %v659 = vsel %vm658, %v651, %v655
  %v660 = vand.u32 2147483647, %v650
  %vm661 = vcmp.eq.f32.partialorder %v660, 8.507059e+37
  %v662 = vand.u32 %v650, 2147483648
  %v663 = vor.u32 1.1754944e-38, %v662
  %v664 = vsel %vm661, %v663, %v659
  %v665 = vmul.f32 1.0, %v664
  %v666 = vtanh.pop %v626
  %v667 = vxor.u32 %v627, 2147483648
  %v668 = vmul.f32 %v667, 1.442695
  %v669 = vpow.pop %v668
  %v670 = vadd.f32 %v669, 1.0
  %v671 = vrcp.pop %v670
  %v672 = vmul.f32 %v670, %v671
  %v673 = vsub.f32 1.0, %v672
  %v674 = vmul.f32 %v671, %v673
  %v675 = vadd.f32 %v671, %v674
  %vm676 = vweird.f32 %v670
  %vm677 = vweird.f32 %v671
  %vm678 = vmor %vm676, %vm677
  %v679 = vsel %vm678, %v671, %v675
  %v680 = vand.u32 2147483647, %v670
  %vm681 = vcmp.eq.f32.partialorder %v680, 8.507059e+37
  %v682 = vand.u32 %v670, 2147483648
  %v683 = vor.u32 1.1754944e-38, %v682
  %v684 = vsel %vm681, %v683, %v679
  %v685 = vmul.f32 1.0, %v684
  %v686 = vmul.f32 %v665, %v534
  %v687 = vmul.f32 %v646, %v666
  %v688 = vadd.f32 %v686, %v687
  %v689 = vtanh.pop %v688
  %v690 = vmul.f32 %v685, %v689
  %s691 = scalar_lea.vmem %s3, 24
  %692 = vst [vmem:[%s691] sm:$0xff] %v690
  %s693 = scalar_lea.vmem %s0, 128
  %v694 = vld [vmem:[%s693] sm:$0xff]
  %v695 = vld [vmem:[%s693 + $0x8] sm:$0xff]
  %v696 = vld [vmem:[%s693 + $0x10] sm:$0xff]
  %v697 = vld [vmem:[%s693 + $0x18] sm:$0xff]
  %698 = vmatpush.msra.mxu0 %v74
  %699 = vmatpush.msra.mxu0 %v70
  %700 = vmatpush.msra.mxu0 %v66
  %701 = vmatpush.msra.mxu0 %v62
  %702 = vmatpush.msra.mxu0 %v58
  %703 = vmatpush.msra.mxu0 %v54
  %704 = vmatpush.msra.mxu0 %v50
  %705 = vmatpush.msra.mxu0 %v46
  %706 = vmatpush.msra.mxu0 %v42
  %707 = vmatpush.msra.mxu0 %v38
  %708 = vmatpush.msra.mxu0 %v34
  %709 = vmatpush.msra.mxu0 %v30
  %710 = vmatpush.msra.mxu0 %v26
  %711 = vmatpush.msra.mxu0 %v22
  %712 = vmatpush.msra.mxu0 %v18
  %713 = vmatpush.msra.mxu0 %v14
  %714 = vmatmul.f32.gmra.mxu0 %v690
  %v715 = vpop.f32.mrf.mxu0
  %v716 = vadd.f32 0.0, %v715
  %717 = vdwg.mxu0
  %718 = vmatpush.msra.mxu0 %v75
  %719 = vmatpush.msra.mxu0 %v71
  %720 = vmatpush.msra.mxu0 %v67
  %721 = vmatpush.msra.mxu0 %v63
  %722 = vmatpush.msra.mxu0 %v59
  %723 = vmatpush.msra.mxu0 %v55
  %724 = vmatpush.msra.mxu0 %v51
  %725 = vmatpush.msra.mxu0 %v47
  %726 = vmatpush.msra.mxu0 %v43
  %727 = vmatpush.msra.mxu0 %v39
  %728 = vmatpush.msra.mxu0 %v35
  %729 = vmatpush.msra.mxu0 %v31
  %730 = vmatpush.msra.mxu0 %v27
  %731 = vmatpush.msra.mxu0 %v23
  %732 = vmatpush.msra.mxu0 %v19
  %733 = vmatpush.msra.mxu0 %v15
  %734 = vmatmul.f32.gmra.mxu0 %v690
  %v735 = vpop.f32.mrf.mxu0
  %v736 = vadd.f32 0.0, %v735
  %737 = vdwg.mxu0
  %738 = vmatpush.msra.mxu0 %v76
  %739 = vmatpush.msra.mxu0 %v72
  %740 = vmatpush.msra.mxu0 %v68
  %741 = vmatpush.msra.mxu0 %v64
  %742 = vmatpush.msra.mxu0 %v60
  %743 = vmatpush.msra.mxu0 %v56
  %744 = vmatpush.msra.mxu0 %v52
  %745 = vmatpush.msra.mxu0 %v48
  %746 = vmatpush.msra.mxu0 %v44
  %747 = vmatpush.msra.mxu0 %v40
  %748 = vmatpush.msra.mxu0 %v36
  %749 = vmatpush.msra.mxu0 %v32
  %750 = vmatpush.msra.mxu0 %v28
  %751 = vmatpush.msra.mxu0 %v24
  %752 = vmatpush.msra.mxu0 %v20
  %753 = vmatpush.msra.mxu0 %v16
  %754 = vmatmul.f32.gmra.mxu0 %v690
  %v755 = vpop.f32.mrf.mxu0
  %v756 = vadd.f32 0.0, %v755
  %757 = vdwg.mxu0
  %758 = vmatpush.msra.mxu0 %v77
  %759 = vmatpush.msra.mxu0 %v73
  %760 = vmatpush.msra.mxu0 %v69
  %761 = vmatpush.msra.mxu0 %v65
  %762 = vmatpush.msra.mxu0 %v61
  %763 = vmatpush.msra.mxu0 %v57
  %764 = vmatpush.msra.mxu0 %v53
  %765 = vmatpush.msra.mxu0 %v49
  %766 = vmatpush.msra.mxu0 %v45
  %767 = vmatpush.msra.mxu0 %v41
  %768 = vmatpush.msra.mxu0 %v37
  %769 = vmatpush.msra.mxu0 %v33
  %770 = vmatpush.msra.mxu0 %v29
  %771 = vmatpush.msra.mxu0 %v25
  %772 = vmatpush.msra.mxu0 %v21
  %773 = vmatpush.msra.mxu0 %v17
  %774 = vmatmul.f32.gmra.mxu0 %v690
  %v775 = vpop.f32.mrf.mxu0
  %v776 = vadd.f32 0.0, %v775
  %777 = vdwg.mxu0
  %v778 = vadd.f32 %v694, %v716
  %v779 = vadd.f32 %v695, %v736
  %v780 = vadd.f32 %v696, %v756
  %v781 = vadd.f32 %v697, %v776
  %v782 = vxor.u32 %v778, 2147483648
  %v783 = vmul.f32 %v782, 1.442695
  %v784 = vpow.pop %v783
  %v785 = vadd.f32 %v784, 1.0
  %v786 = vrcp.pop %v785
  %v787 = vmul.f32 %v785, %v786
  %v788 = vsub.f32 1.0, %v787
  %v789 = vmul.f32 %v786, %v788
  %v790 = vadd.f32 %v786, %v789
  %vm791 = vweird.f32 %v785
  %vm792 = vweird.f32 %v786
  %vm793 = vmor %vm791, %vm792
  %v794 = vsel %vm793, %v786, %v790
  %v795 = vand.u32 2147483647, %v785
  %vm796 = vcmp.eq.f32.partialorder %v795, 8.507059e+37
  %v797 = vand.u32 %v785, 2147483648
  %v798 = vor.u32 1.1754944e-38, %v797
  %v799 = vsel %vm796, %v798, %v794
  %v800 = vmul.f32 1.0, %v799
  %v801 = vxor.u32 %v779, 2147483648
  %v802 = vmul.f32 %v801, 1.442695
  %v803 = vpow.pop %v802
  %v804 = vadd.f32 %v803, 1.0
  %v805 = vrcp.pop %v804
  %v806 = vmul.f32 %v804, %v805
  %v807 = vsub.f32 1.0, %v806
  %v808 = vmul.f32 %v805, %v807
  %v809 = vadd.f32 %v805, %v808
  %vm810 = vweird.f32 %v804
  %vm811 = vweird.f32 %v805
  %vm812 = vmor %vm810, %vm811
  %v813 = vsel %vm812, %v805, %v809
  %v814 = vand.u32 2147483647, %v804
  %vm815 = vcmp.eq.f32.partialorder %v814, 8.507059e+37
  %v816 = vand.u32 %v804, 2147483648
  %v817 = vor.u32 1.1754944e-38, %v816
  %v818 = vsel %vm815, %v817, %v813
  %v819 = vmul.f32 1.0, %v818
  %v820 = vtanh.pop %v780
  %v821 = vxor.u32 %v781, 2147483648
  %v822 = vmul.f32 %v821, 1.442695
  %v823 = vpow.pop %v822
  %v824 = vadd.f32 %v823, 1.0
  %v825 = vrcp.pop %v824
  %v826 = vmul.f32 %v824, %v825
  %v827 = vsub.f32 1.0, %v826
  %v828 = vmul.f32 %v825, %v827
  %v829 = vadd.f32 %v825, %v828
  %vm830 = vweird.f32 %v824
  %vm831 = vweird.f32 %v825
  %vm832 = vmor %vm830, %vm831
  %v833 = vsel %vm832, %v825, %v829
  %v834 = vand.u32 2147483647, %v824
  %vm835 = vcmp.eq.f32.partialorder %v834, 8.507059e+37
  %v836 = vand.u32 %v824, 2147483648
  %v837 = vor.u32 1.1754944e-38, %v836
  %v838 = vsel %vm835, %v837, %v833
  %v839 = vmul.f32 1.0, %v838
  %v840 = vmul.f32 %v819, %v688
  %v841 = vmul.f32 %v800, %v820
  %v842 = vadd.f32 %v840, %v841
  %v843 = vtanh.pop %v842
  %v844 = vmul.f32 %v839, %v843
  %s845 = scalar_lea.vmem %s3, 32
  %846 = vst [vmem:[%s845] sm:$0xff] %v844
  %s847 = scalar_lea.vmem %s0, 160
  %v848 = vld [vmem:[%s847] sm:$0xff]
  %v849 = vld [vmem:[%s847 + $0x8] sm:$0xff]
  %v850 = vld [vmem:[%s847 + $0x10] sm:$0xff]
  %v851 = vld [vmem:[%s847 + $0x18] sm:$0xff]
  %852 = vmatpush.msra.mxu0 %v74
  %853 = vmatpush.msra.mxu0 %v70
  %854 = vmatpush.msra.mxu0 %v66
  %855 = vmatpush.msra.mxu0 %v62
  %856 = vmatpush.msra.mxu0 %v58
  %857 = vmatpush.msra.mxu0 %v54
  %858 = vmatpush.msra.mxu0 %v50
  %859 = vmatpush.msra.mxu0 %v46
  %860 = vmatpush.msra.mxu0 %v42
  %861 = vmatpush.msra.mxu0 %v38
  %862 = vmatpush.msra.mxu0 %v34
  %863 = vmatpush.msra.mxu0 %v30
  %864 = vmatpush.msra.mxu0 %v26
  %865 = vmatpush.msra.mxu0 %v22
  %866 = vmatpush.msra.mxu0 %v18
  %867 = vmatpush.msra.mxu0 %v14
  %868 = vmatmul.f32.gmra.mxu0 %v844
  %v869 = vpop.f32.mrf.mxu0
  %v870 = vadd.f32 0.0, %v869
  %871 = vdwg.mxu0
  %872 = vmatpush.msra.mxu0 %v75
  %873 = vmatpush.msra.mxu0 %v71
  %874 = vmatpush.msra.mxu0 %v67
  %875 = vmatpush.msra.mxu0 %v63
  %876 = vmatpush.msra.mxu0 %v59
  %877 = vmatpush.msra.mxu0 %v55
  %878 = vmatpush.msra.mxu0 %v51
  %879 = vmatpush.msra.mxu0 %v47
  %880 = vmatpush.msra.mxu0 %v43
  %881 = vmatpush.msra.mxu0 %v39
  %882 = vmatpush.msra.mxu0 %v35
  %883 = vmatpush.msra.mxu0 %v31
  %884 = vmatpush.msra.mxu0 %v27
  %885 = vmatpush.msra.mxu0 %v23
  %886 = vmatpush.msra.mxu0 %v19
  %887 = vmatpush.msra.mxu0 %v15
  %888 = vmatmul.f32.gmra.mxu0 %v844
  %v889 = vpop.f32.mrf.mxu0
  %v890 = vadd.f32 0.0, %v889
  %891 = vdwg.mxu0
  %892 = vmatpush.msra.mxu0 %v76
  %893 = vmatpush.msra.mxu0 %v72
  %894 = vmatpush.msra.mxu0 %v68
  %895 = vmatpush.msra.mxu0 %v64
  %896 = vmatpush.msra.mxu0 %v60
  %897 = vmatpush.msra.mxu0 %v56
  %898 = vmatpush.msra.mxu0 %v52
  %899 = vmatpush.msra.mxu0 %v48
  %900 = vmatpush.msra.mxu0 %v44
  %901 = vmatpush.msra.mxu0 %v40
  %902 = vmatpush.msra.mxu0 %v36
  %903 = vmatpush.msra.mxu0 %v32
  %904 = vmatpush.msra.mxu0 %v28
  %905 = vmatpush.msra.mxu0 %v24
  %906 = vmatpush.msra.mxu0 %v20
  %907 = vmatpush.msra.mxu0 %v16
  %908 = vmatmul.f32.gmra.mxu0 %v844
  %v909 = vpop.f32.mrf.mxu0
  %v910 = vadd.f32 0.0, %v909
  %911 = vdwg.mxu0
  %912 = vmatpush.msra.mxu0 %v77
  %913 = vmatpush.msra.mxu0 %v73
  %914 = vmatpush.msra.mxu0 %v69
  %915 = vmatpush.msra.mxu0 %v65
  %916 = vmatpush.msra.mxu0 %v61
  %917 = vmatpush.msra.mxu0 %v57
  %918 = vmatpush.msra.mxu0 %v53
  %919 = vmatpush.msra.mxu0 %v49
  %920 = vmatpush.msra.mxu0 %v45
  %921 = vmatpush.msra.mxu0 %v41
  %922 = vmatpush.msra.mxu0 %v37
  %923 = vmatpush.msra.mxu0 %v33
  %924 = vmatpush.msra.mxu0 %v29
  %925 = vmatpush.msra.mxu0 %v25
  %926 = vmatpush.msra.mxu0 %v21
  %927 = vmatpush.msra.mxu0 %v17
  %928 = vmatmul.f32.gmra.mxu0 %v844
  %v929 = vpop.f32.mrf.mxu0
  %v930 = vadd.f32 0.0, %v929
  %931 = vdwg.mxu0
  %v932 = vadd.f32 %v848, %v870
  %v933 = vadd.f32 %v849, %v890
  %v934 = vadd.f32 %v850, %v910
  %v935 = vadd.f32 %v851, %v930
  %v936 = vxor.u32 %v932, 2147483648
  %v937 = vmul.f32 %v936, 1.442695
  %v938 = vpow.pop %v937
  %v939 = vadd.f32 %v938, 1.0
  %v940 = vrcp.pop %v939
  %v941 = vmul.f32 %v939, %v940
  %v942 = vsub.f32 1.0, %v941
  %v943 = vmul.f32 %v940, %v942
  %v944 = vadd.f32 %v940, %v943
  %vm945 = vweird.f32 %v939
  %vm946 = vweird.f32 %v940
  %vm947 = vmor %vm945, %vm946
  %v948 = vsel %vm947, %v940, %v944
  %v949 = vand.u32 2147483647, %v939
  %vm950 = vcmp.eq.f32.partialorder %v949, 8.507059e+37
  %v951 = vand.u32 %v939, 2147483648
  %v952 = vor.u32 1.1754944e-38, %v951
  %v953 = vsel %vm950, %v952, %v948
  %v954 = vmul.f32 1.0, %v953
  %v955 = vxor.u32 %v933, 2147483648
  %v956 = vmul.f32 %v955, 1.442695
  %v957 = vpow.pop %v956
  %v958 = vadd.f32 %v957, 1.0
  %v959 = vrcp.pop %v958
  %v960 = vmul.f32 %v958, %v959
  %v961 = vsub.f32 1.0, %v960
  %v962 = vmul.f32 %v959, %v961
  %v963 = vadd.f32 %v959, %v962
  %vm964 = vweird.f32 %v958
  %vm965 = vweird.f32 %v959
  %vm966 = vmor %vm964, %vm965
  %v967 = vsel %vm966, %v959, %v963
  %v968 = vand.u32 2147483647, %v958
  %vm969 = vcmp.eq.f32.partialorder %v968, 8.507059e+37
  %v970 = vand.u32 %v958, 2147483648
  %v971 = vor.u32 1.1754944e-38, %v970
  %v972 = vsel %vm969, %v971, %v967
  %v973 = vmul.f32 1.0, %v972
  %v974 = vtanh.pop %v934
  %v975 = vxor.u32 %v935, 2147483648
  %v976 = vmul.f32 %v975, 1.442695
  %v977 = vpow.pop %v976
  %v978 = vadd.f32 %v977, 1.0
  %v979 = vrcp.pop %v978
  %v980 = vmul.f32 %v978, %v979
  %v981 = vsub.f32 1.0, %v980
  %v982 = vmul.f32 %v979, %v981
  %v983 = vadd.f32 %v979, %v982
  %vm984 = vweird.f32 %v978
  %vm985 = vweird.f32 %v979
  %vm986 = vmor %vm984, %vm985
  %v987 = vsel %vm986, %v979, %v983
  %v988 = vand.u32 2147483647, %v978
  %vm989 = vcmp.eq.f32.partialorder %v988, 8.507059e+37
  %v990 = vand.u32 %v978, 2147483648
  %v991 = vor.u32 1.1754944e-38, %v990
  %v992 = vsel %vm989, %v991, %v987
  %v993 = vmul.f32 1.0, %v992
  %v994 = vmul.f32 %v973, %v842
  %v995 = vmul.f32 %v954, %v974
  %v996 = vadd.f32 %v994, %v995
  %v997 = vtanh.pop %v996
  %v998 = vmul.f32 %v993, %v997
  %s999 = scalar_lea.vmem %s3, 40
  %1000 = vst [vmem:[%s999] sm:$0xff] %v998
  %s1001 = scalar_lea.vmem %s0, 192
  %v1002 = vld [vmem:[%s1001] sm:$0xff]
  %v1003 = vld [vmem:[%s1001 + $0x8] sm:$0xff]
  %v1004 = vld [vmem:[%s1001 + $0x10] sm:$0xff]
  %v1005 = vld [vmem:[%s1001 + $0x18] sm:$0xff]
  %1006 = vmatpush.msra.mxu0 %v74
  %1007 = vmatpush.msra.mxu0 %v70
  %1008 = vmatpush.msra.mxu0 %v66
  %1009 = vmatpush.msra.mxu0 %v62
  %1010 = vmatpush.msra.mxu0 %v58
  %1011 = vmatpush.msra.mxu0 %v54
  %1012 = vmatpush.msra.mxu0 %v50
  %1013 = vmatpush.msra.mxu0 %v46
  %1014 = vmatpush.msra.mxu0 %v42
  %1015 = vmatpush.msra.mxu0 %v38
  %1016 = vmatpush.msra.mxu0 %v34
  %1017 = vmatpush.msra.mxu0 %v30
  %1018 = vmatpush.msra.mxu0 %v26
  %1019 = vmatpush.msra.mxu0 %v22
  %1020 = vmatpush.msra.mxu0 %v18
  %1021 = vmatpush.msra.mxu0 %v14
  %1022 = vmatmul.f32.gmra.mxu0 %v998
  %v1023 = vpop.f32.mrf.mxu0
  %v1024 = vadd.f32 0.0, %v1023
  %1025 = vdwg.mxu0
  %1026 = vmatpush.msra.mxu0 %v75
  %1027 = vmatpush.msra.mxu0 %v71
  %1028 = vmatpush.msra.mxu0 %v67
  %1029 = vmatpush.msra.mxu0 %v63
  %1030 = vmatpush.msra.mxu0 %v59
  %1031 = vmatpush.msra.mxu0 %v55
  %1032 = vmatpush.msra.mxu0 %v51
  %1033 = vmatpush.msra.mxu0 %v47
  %1034 = vmatpush.msra.mxu0 %v43
  %1035 = vmatpush.msra.mxu0 %v39
  %1036 = vmatpush.msra.mxu0 %v35
  %1037 = vmatpush.msra.mxu0 %v31
  %1038 = vmatpush.msra.mxu0 %v27
  %1039 = vmatpush.msra.mxu0 %v23
  %1040 = vmatpush.msra.mxu0 %v19
  %1041 = vmatpush.msra.mxu0 %v15
  %1042 = vmatmul.f32.gmra.mxu0 %v998
  %v1043 = vpop.f32.mrf.mxu0
  %v1044 = vadd.f32 0.0, %v1043
  %1045 = vdwg.mxu0
  %1046 = vmatpush.msra.mxu0 %v76
  %1047 = vmatpush.msra.mxu0 %v72
  %1048 = vmatpush.msra.mxu0 %v68
  %1049 = vmatpush.msra.mxu0 %v64
  %1050 = vmatpush.msra.mxu0 %v60
  %1051 = vmatpush.msra.mxu0 %v56
  %1052 = vmatpush.msra.mxu0 %v52
  %1053 = vmatpush.msra.mxu0 %v48
  %1054 = vmatpush.msra.mxu0 %v44
  %1055 = vmatpush.msra.mxu0 %v40
  %1056 = vmatpush.msra.mxu0 %v36
  %1057 = vmatpush.msra.mxu0 %v32
  %1058 = vmatpush.msra.mxu0 %v28
  %1059 = vmatpush.msra.mxu0 %v24
  %1060 = vmatpush.msra.mxu0 %v20
  %1061 = vmatpush.msra.mxu0 %v16
  %1062 = vmatmul.f32.gmra.mxu0 %v998
  %v1063 = vpop.f32.mrf.mxu0
  %v1064 = vadd.f32 0.0, %v1063
  %1065 = vdwg.mxu0
  %1066 = vmatpush.msra.mxu0 %v77
  %1067 = vmatpush.msra.mxu0 %v73
  %1068 = vmatpush.msra.mxu0 %v69
  %1069 = vmatpush.msra.mxu0 %v65
  %1070 = vmatpush.msra.mxu0 %v61
  %1071 = vmatpush.msra.mxu0 %v57
  %1072 = vmatpush.msra.mxu0 %v53
  %1073 = vmatpush.msra.mxu0 %v49
  %1074 = vmatpush.msra.mxu0 %v45
  %1075 = vmatpush.msra.mxu0 %v41
  %1076 = vmatpush.msra.mxu0 %v37
  %1077 = vmatpush.msra.mxu0 %v33
  %1078 = vmatpush.msra.mxu0 %v29
  %1079 = vmatpush.msra.mxu0 %v25
  %1080 = vmatpush.msra.mxu0 %v21
  %1081 = vmatpush.msra.mxu0 %v17
  %1082 = vmatmul.f32.gmra.mxu0 %v998
  %v1083 = vpop.f32.mrf.mxu0
  %v1084 = vadd.f32 0.0, %v1083
  %1085 = vdwg.mxu0
  %v1086 = vadd.f32 %v1002, %v1024
  %v1087 = vadd.f32 %v1003, %v1044
  %v1088 = vadd.f32 %v1004, %v1064
  %v1089 = vadd.f32 %v1005, %v1084
  %v1090 = vxor.u32 %v1086, 2147483648
  %v1091 = vmul.f32 %v1090, 1.442695
  %v1092 = vpow.pop %v1091
  %v1093 = vadd.f32 %v1092, 1.0
  %v1094 = vrcp.pop %v1093
  %v1095 = vmul.f32 %v1093, %v1094
  %v1096 = vsub.f32 1.0, %v1095
  %v1097 = vmul.f32 %v1094, %v1096
  %v1098 = vadd.f32 %v1094, %v1097
  %vm1099 = vweird.f32 %v1093
  %vm1100 = vweird.f32 %v1094
  %vm1101 = vmor %vm1099, %vm1100
  %v1102 = vsel %vm1101, %v1094, %v1098
  %v1103 = vand.u32 2147483647, %v1093
  %vm1104 = vcmp.eq.f32.partialorder %v1103, 8.507059e+37
  %v1105 = vand.u32 %v1093, 2147483648
  %v1106 = vor.u32 1.1754944e-38, %v1105
  %v1107 = vsel %vm1104, %v1106, %v1102
  %v1108 = vmul.f32 1.0, %v1107
  %v1109 = vxor.u32 %v1087, 2147483648
  %v1110 = vmul.f32 %v1109, 1.442695
  %v1111 = vpow.pop %v1110
  %v1112 = vadd.f32 %v1111, 1.0
  %v1113 = vrcp.pop %v1112
  %v1114 = vmul.f32 %v1112, %v1113
  %v1115 = vsub.f32 1.0, %v1114
  %v1116 = vmul.f32 %v1113, %v1115
  %v1117 = vadd.f32 %v1113, %v1116
  %vm1118 = vweird.f32 %v1112
  %vm1119 = vweird.f32 %v1113
  %vm1120 = vmor %vm1118, %vm1119
  %v1121 = vsel %vm1120, %v1113, %v1117
  %v1122 = vand.u32 2147483647, %v1112
  %vm1123 = vcmp.eq.f32.partialorder %v1122, 8.507059e+37
  %v1124 = vand.u32 %v1112, 2147483648
  %v1125 = vor.u32 1.1754944e-38, %v1124
  %v1126 = vsel %vm1123, %v1125, %v1121
  %v1127 = vmul.f32 1.0, %v1126
  %v1128 = vtanh.pop %v1088
  %v1129 = vxor.u32 %v1089, 2147483648
  %v1130 = vmul.f32 %v1129, 1.442695
  %v1131 = vpow.pop %v1130
  %v1132 = vadd.f32 %v1131, 1.0
  %v1133 = vrcp.pop %v1132
  %v1134 = vmul.f32 %v1132, %v1133
  %v1135 = vsub.f32 1.0, %v1134
  %v1136 = vmul.f32 %v1133, %v1135
  %v1137 = vadd.f32 %v1133, %v1136
  %vm1138 = vweird.f32 %v1132
  %vm1139 = vweird.f32 %v1133
  %vm1140 = vmor %vm1138, %vm1139
  %v1141 = vsel %vm1140, %v1133, %v1137
  %v1142 = vand.u32 2147483647, %v1132
  %vm1143 = vcmp.eq.f32.partialorder %v1142, 8.507059e+37
  %v1144 = vand.u32 %v1132, 2147483648
  %v1145 = vor.u32 1.1754944e-38, %v1144
  %v1146 = vsel %vm1143, %v1145, %v1141
  %v1147 = vmul.f32 1.0, %v1146
  %v1148 = vmul.f32 %v1127, %v996
  %v1149 = vmul.f32 %v1108, %v1128
  %v1150 = vadd.f32 %v1148, %v1149
  %v1151 = vtanh.pop %v1150
  %v1152 = vmul.f32 %v1147, %v1151
  %s1153 = scalar_lea.vmem %s3, 48
  %1154 = vst [vmem:[%s1153] sm:$0xff] %v1152
  %s1155 = scalar_lea.vmem %s0, 224
  %v1156 = vld [vmem:[%s1155] sm:$0xff]
  %v1157 = vld [vmem:[%s1155 + $0x8] sm:$0xff]
  %v1158 = vld [vmem:[%s1155 + $0x10] sm:$0xff]
  %v1159 = vld [vmem:[%s1155 + $0x18] sm:$0xff]
  %1160 = vmatpush.msra.mxu0 %v74
  %1161 = vmatpush.msra.mxu0 %v70
  %1162 = vmatpush.msra.mxu0 %v66
  %1163 = vmatpush.msra.mxu0 %v62
  %1164 = vmatpush.msra.mxu0 %v58
  %1165 = vmatpush.msra.mxu0 %v54
  %1166 = vmatpush.msra.mxu0 %v50
  %1167 = vmatpush.msra.mxu0 %v46
  %1168 = vmatpush.msra.mxu0 %v42
  %1169 = vmatpush.msra.mxu0 %v38
  %1170 = vmatpush.msra.mxu0 %v34
  %1171 = vmatpush.msra.mxu0 %v30
  %1172 = vmatpush.msra.mxu0 %v26
  %1173 = vmatpush.msra.mxu0 %v22
  %1174 = vmatpush.msra.mxu0 %v18
  %1175 = vmatpush.msra.mxu0 %v14
  %1176 = vmatmul.f32.gmra.mxu0 %v1152
  %v1177 = vpop.f32.mrf.mxu0
  %v1178 = vadd.f32 0.0, %v1177
  %1179 = vdwg.mxu0
  %1180 = vmatpush.msra.mxu0 %v75
  %1181 = vmatpush.msra.mxu0 %v71
  %1182 = vmatpush.msra.mxu0 %v67
  %1183 = vmatpush.msra.mxu0 %v63
  %1184 = vmatpush.msra.mxu0 %v59
  %1185 = vmatpush.msra.mxu0 %v55
  %1186 = vmatpush.msra.mxu0 %v51
  %1187 = vmatpush.msra.mxu0 %v47
  %1188 = vmatpush.msra.mxu0 %v43
  %1189 = vmatpush.msra.mxu0 %v39
  %1190 = vmatpush.msra.mxu0 %v35
  %1191 = vmatpush.msra.mxu0 %v31
  %1192 = vmatpush.msra.mxu0 %v27
  %1193 = vmatpush.msra.mxu0 %v23
  %1194 = vmatpush.msra.mxu0 %v19
  %1195 = vmatpush.msra.mxu0 %v15
  %1196 = vmatmul.f32.gmra.mxu0 %v1152
  %v1197 = vpop.f32.mrf.mxu0
  %v1198 = vadd.f32 0.0, %v1197
  %1199 = vdwg.mxu0
  %1200 = vmatpush.msra.mxu0 %v76
  %1201 = vmatpush.msra.mxu0 %v72
  %1202 = vmatpush.msra.mxu0 %v68
  %1203 = vmatpush.msra.mxu0 %v64
  %1204 = vmatpush.msra.mxu0 %v60
  %1205 = vmatpush.msra.mxu0 %v56
  %1206 = vmatpush.msra.mxu0 %v52
  %1207 = vmatpush.msra.mxu0 %v48
  %1208 = vmatpush.msra.mxu0 %v44
  %1209 = vmatpush.msra.mxu0 %v40
  %1210 = vmatpush.msra.mxu0 %v36
  %1211 = vmatpush.msra.mxu0 %v32
  %1212 = vmatpush.msra.mxu0 %v28
  %1213 = vmatpush.msra.mxu0 %v24
  %1214 = vmatpush.msra.mxu0 %v20
  %1215 = vmatpush.msra.mxu0 %v16
  %1216 = vmatmul.f32.gmra.mxu0 %v1152
  %v1217 = vpop.f32.mrf.mxu0
  %v1218 = vadd.f32 0.0, %v1217
  %1219 = vdwg.mxu0
  %1220 = vmatpush.msra.mxu0 %v77
  %1221 = vmatpush.msra.mxu0 %v73
  %1222 = vmatpush.msra.mxu0 %v69
  %1223 = vmatpush.msra.mxu0 %v65
  %1224 = vmatpush.msra.mxu0 %v61
  %1225 = vmatpush.msra.mxu0 %v57
  %1226 = vmatpush.msra.mxu0 %v53
  %1227 = vmatpush.msra.mxu0 %v49
  %1228 = vmatpush.msra.mxu0 %v45
  %1229 = vmatpush.msra.mxu0 %v41
  %1230 = vmatpush.msra.mxu0 %v37
  %1231 = vmatpush.msra.mxu0 %v33
  %1232 = vmatpush.msra.mxu0 %v29
  %1233 = vmatpush.msra.mxu0 %v25
  %1234 = vmatpush.msra.mxu0 %v21
  %1235 = vmatpush.msra.mxu0 %v17
  %1236 = vmatmul.f32.gmra.mxu0 %v1152
  %v1237 = vpop.f32.mrf.mxu0
  %v1238 = vadd.f32 0.0, %v1237
  %1239 = vdwg.mxu0
  %v1240 = vadd.f32 %v1156, %v1178
  %v1241 = vadd.f32 %v1157, %v1198
  %v1242 = vadd.f32 %v1158, %v1218
  %v1243 = vadd.f32 %v1159, %v1238
  %v1244 = vxor.u32 %v1240, 2147483648
  %v1245 = vmul.f32 %v1244, 1.442695
  %v1246 = vpow.pop %v1245
  %v1247 = vadd.f32 %v1246, 1.0
  %v1248 = vrcp.pop %v1247
  %v1249 = vmul.f32 %v1247, %v1248
  %v1250 = vsub.f32 1.0, %v1249
  %v1251 = vmul.f32 %v1248, %v1250
  %v1252 = vadd.f32 %v1248, %v1251
  %vm1253 = vweird.f32 %v1247
  %vm1254 = vweird.f32 %v1248
  %vm1255 = vmor %vm1253, %vm1254
  %v1256 = vsel %vm1255, %v1248, %v1252
  %v1257 = vand.u32 2147483647, %v1247
  %vm1258 = vcmp.eq.f32.partialorder %v1257, 8.507059e+37
  %v1259 = vand.u32 %v1247, 2147483648
  %v1260 = vor.u32 1.1754944e-38, %v1259
  %v1261 = vsel %vm1258, %v1260, %v1256
  %v1262 = vmul.f32 1.0, %v1261
  %v1263 = vxor.u32 %v1241, 2147483648
  %v1264 = vmul.f32 %v1263, 1.442695
  %v1265 = vpow.pop %v1264
  %v1266 = vadd.f32 %v1265, 1.0
  %v1267 = vrcp.pop %v1266
  %v1268 = vmul.f32 %v1266, %v1267
  %v1269 = vsub.f32 1.0, %v1268
  %v1270 = vmul.f32 %v1267, %v1269
  %v1271 = vadd.f32 %v1267, %v1270
  %vm1272 = vweird.f32 %v1266
  %vm1273 = vweird.f32 %v1267
  %vm1274 = vmor %vm1272, %vm1273
  %v1275 = vsel %vm1274, %v1267, %v1271
  %v1276 = vand.u32 2147483647, %v1266
  %vm1277 = vcmp.eq.f32.partialorder %v1276, 8.507059e+37
  %v1278 = vand.u32 %v1266, 2147483648
  %v1279 = vor.u32 1.1754944e-38, %v1278
  %v1280 = vsel %vm1277, %v1279, %v1275
  %v1281 = vmul.f32 1.0, %v1280
  %v1282 = vtanh.pop %v1242
  %v1283 = vxor.u32 %v1243, 2147483648
  %v1284 = vmul.f32 %v1283, 1.442695
  %v1285 = vpow.pop %v1284
  %v1286 = vadd.f32 %v1285, 1.0
  %v1287 = vrcp.pop %v1286
  %v1288 = vmul.f32 %v1286, %v1287
  %v1289 = vsub.f32 1.0, %v1288
  %v1290 = vmul.f32 %v1287, %v1289
  %v1291 = vadd.f32 %v1287, %v1290
  %vm1292 = vweird.f32 %v1286
  %vm1293 = vweird.f32 %v1287
  %vm1294 = vmor %vm1292, %vm1293
  %v1295 = vsel %vm1294, %v1287, %v1291
  %v1296 = vand.u32 2147483647, %v1286
  %vm1297 = vcmp.eq.f32.partialorder %v1296, 8.507059e+37
  %v1298 = vand.u32 %v1286, 2147483648
  %v1299 = vor.u32 1.1754944e-38, %v1298
  %v1300 = vsel %vm1297, %v1299, %v1295
  %v1301 = vmul.f32 1.0, %v1300
  %v1302 = vmul.f32 %v1281, %v1150
  %v1303 = vmul.f32 %v1262, %v1282
  %v1304 = vadd.f32 %v1302, %v1303
  %v1305 = vtanh.pop %v1304
  %v1306 = vmul.f32 %v1301, %v1305
  %s1307 = scalar_lea.vmem %s3, 56
  %1308 = vst [vmem:[%s1307] sm:$0xff] %v1306
  // Predicated region
  $region14: #{music_vae_forward.3} parent=0 // pred_check
    _
  $region15: #{music_vae_forward.3} parent=0 // pred_check_branch
    %1310 = sbr.rel (0) target = $region17
  $region16: #{music_vae_forward.3} parent=0 // pred_region
    _
  $region17: #{music_vae_forward.3} parent=0 // pred_fallthru
    _
  // Predicated region
  $region18: #{music_vae_forward.3} parent=0 // pred_check
    _
  $region19: #{music_vae_forward.3} parent=0 // pred_check_branch
    %1312 = sbr.rel (0) target = $region21
  $region20: #{music_vae_forward.3} parent=0 // pred_region
    _
  $region21: #{music_vae_forward.3} parent=0 // pred_fallthru
    _

</llo_original>
